<compile_context>
chip_gen: v7x
topology: tpu7x:2x2x1
jax: 0.10.0
libtpu: 0.0.40
codegen_flags: <defaults>
</compile_context>

<pallas_src>
import functools
import math

import jax
import jax.numpy as jnp
from jax.experimental import pallas as pl
from jax.experimental.pallas import tpu as pltpu


# ------------------------------ helpers ------------------------------------ #

def _tile(dim, target, align):
    """Largest multiple of `align` dividing `dim` and <= target, else full dim."""
    if dim <= target:
        return dim
    t = (target // align) * align
    while t >= align:
        if dim % t == 0:
            return t
        t -= align
    return dim   # TODO(synk): pad non-divisible row counts instead of full-dim fallback.


def _vmem_limit_bytes():
    try:
        cap = pltpu.get_tpu_info().vmem_capacity_bytes
        return int(cap * 0.8)
    except Exception:
        return 48 * 1024 * 1024   # safe on every generation


_VMEM_LIMIT = _vmem_limit_bytes()
_LN_EPS = 1e-5


# ------------------------------ Pallas kernels ------------------------------ #

def _matmul_kernel(x_ref, w_ref, b_ref, o_ref, acc_ref, *, activation):
    # (M, N, K)-tiled matmul, f32 VMEM accumulator, bias (+activation) fused
    # into the last K step; output stored in o_ref.dtype (bf16 by default).
    @pl.when(pl.program_id(2) == 0)
    def _():
        acc_ref[...] = jnp.zeros_like(acc_ref)

    acc_ref[...] += jnp.dot(x_ref[...], w_ref[...],
                            preferred_element_type=jnp.float32)

    @pl.when(pl.program_id(2) == pl.num_programs(2) - 1)
    def _():
        out = acc_ref[...] + b_ref[...]
        if activation == "relu":
            out = jnp.maximum(out, 0.0)
        o_ref[...] = out.astype(o_ref.dtype)


def _matmul_res_ln_kernel(x_ref, w_ref, b_ref, r_ref, g_ref, be_ref,
                          o_ref, acc_ref, *, eps):
    # y = LayerNorm(x @ w + b + residual) * g + be, with LN fused in the last
    # K step (requires full N in one block).
    @pl.when(pl.program_id(1) == 0)
    def _():
        acc_ref[...] = jnp.zeros_like(acc_ref)

    acc_ref[...] += jnp.dot(x_ref[...], w_ref[...],
                            preferred_element_type=jnp.float32)

    @pl.when(pl.program_id(1) == pl.num_programs(1) - 1)
    def _():
        y = acc_ref[...] + b_ref[...] + r_ref[...].astype(jnp.float32)
        mu = jnp.mean(y, axis=-1, keepdims=True)
        var = jnp.mean((y - mu) ** 2, axis=-1, keepdims=True)
        o_ref[...] = ((y - mu) * jax.lax.rsqrt(var + eps) * g_ref[...]
                      + be_ref[...]).astype(o_ref.dtype)


def _ffn_res_ln_kernel(x_ref, w1_ref, b1_ref, w2_ref, b2_ref, g_ref, be_ref,
                       o_ref, *, eps):
    # LayerNorm(x + relu(x @ w1 + b1) @ w2 + b2) * g + be; the (tm, F)
    # intermediate never leaves VMEM.
    x = x_ref[...]
    h = jnp.dot(x, w1_ref[...], preferred_element_type=jnp.float32)
    h = jnp.maximum(h + b1_ref[...], 0.0)
    y = jnp.dot(h.astype(w2_ref.dtype), w2_ref[...],
                preferred_element_type=jnp.float32)
    y = y + b2_ref[...] + x.astype(jnp.float32)
    mu = jnp.mean(y, axis=-1, keepdims=True)
    var = jnp.mean((y - mu) ** 2, axis=-1, keepdims=True)
    o_ref[...] = ((y - mu) * jax.lax.rsqrt(var + eps) * g_ref[...]
                  + be_ref[...]).astype(o_ref.dtype)


def _mha_kernel(*refs, scale, causal, with_details, num_heads, head_dim,
                fused_qkv):
    # One batch per grid step; all heads packed in the lane axis.
    # q/k/v come in as lane-dense (S, 3D) or (Sq, D)/(Sk, 2D) slabs; per-head
    # slices are static lane slices. Mask bias + causal bias generated in-kernel
    # from the small (1, Sk) key mask; per-row attention entropy fused into the
    # epilogue (no probs round trip for the entropy).
    if fused_qkv:
        qkv_ref, km_ref = refs[0], refs[1]
        out_refs = refs[2:]
    else:
        q_ref, kv_ref, km_ref = refs[0], refs[1], refs[2]
        out_refs = refs[3:]
    if with_details:
        ctx_ref, probs_ref, ent_ref = out_refs
    else:
        ctx_ref = out_refs[0]

    D = num_heads * head_dim
    if fused_qkv:
        qkv = qkv_ref[0]                                   # (S, 3D) bf16
        qmat, kmat, vmat = qkv[:, :D], qkv[:, D:2 * D], qkv[:, 2 * D:]
        sq = sk = qkv.shape[0]
    else:
        qmat = q_ref[0]                                    # (Sq, D) bf16
        kv = kv_ref[0]                                     # (Sk, 2D) bf16
        kmat, vmat = kv[:, :D], kv[:, D:]
        sq, sk = qmat.shape[0], kv.shape[0]

    km = km_ref[0]                                         # (1, Sk) f32
    bias = jnp.where(km > 0.0, 0.0, -1e9)                  # broadcasts over Sq
    if causal:
        ri = jax.lax.broadcasted_iota(jnp.int32, (sq, sk), 0)
        ci = jax.lax.broadcasted_iota(jnp.int32, (sq, sk), 1)
        bias = bias + jnp.where(ci <= ri, 0.0, -1e9)

    ctx_parts, probs_parts, ent_parts = [], [], []
    for h in range(num_heads):
        sl = slice(h * head_dim, (h + 1) * head_dim)
        qh, kh, vh = qmat[:, sl], kmat[:, sl], vmat[:, sl]
        s = jnp.dot(qh, kh.T, preferred_element_type=jnp.float32) * scale + bias
        m = jnp.max(s, axis=-1, keepdims=True)
        e = jnp.exp(s - m)
        denom = jnp.sum(e, axis=-1, keepdims=True)
        p = e * pl.reciprocal(denom, approx=True)          # EUP reciprocal
        ctx_parts.append(jnp.dot(p.astype(vh.dtype), vh,
                                 preferred_element_type=jnp.float32))
        if with_details:
            probs_parts.append(p)
            # -p*log(p) with 0*log(0) -> 0 (matches prenorm_entropies[isnan]=0)
            ent_parts.append(jnp.sum(jnp.where(p > 0.0, -p * jnp.log(p), 0.0),
                                     axis=-1, keepdims=True))

    ctx_ref[0] = jnp.concatenate(ctx_parts, axis=-1).astype(ctx_ref.dtype)
    if with_details:
        probs_ref[0] = jnp.stack(probs_parts, axis=0).astype(probs_ref.dtype)
        ent_ref[0] = jnp.stack(ent_parts, axis=0)


def _xent_kernel(logits_ref, labels_ref, mask_ref, loss_ref,
                 m_ref, s_ref, p_ref, *, tv):
    # masked token cross entropy with online logsumexp over vocab tiles and an
    # iota==label select (no materialized one-hot).
    j = pl.program_id(1)

    @pl.when(j == 0)
    def _():
        m_ref[...] = jnp.full_like(m_ref, -jnp.inf)
        s_ref[...] = jnp.zeros_like(s_ref)
        p_ref[...] = jnp.zeros_like(p_ref)

    lg = logits_ref[...].astype(jnp.float32)               # (tm, tv)
    tile_max = jnp.max(lg, axis=-1, keepdims=True)
    m_new = jnp.maximum(m_ref[...], tile_max)
    s_ref[...] = (s_ref[...] * jnp.exp(m_ref[...] - m_new)
                  + jnp.sum(jnp.exp(lg - m_new), axis=-1, keepdims=True))
    m_ref[...] = m_new

    lbl = labels_ref[...]                                  # (tm, 1) int32
    col = jax.lax.broadcasted_iota(jnp.int32, lg.shape, 1) + j * tv
    p_ref[...] += jnp.sum(jnp.where(col == lbl, lg, 0.0), axis=-1, keepdims=True)

    @pl.when(j == pl.num_programs(1) - 1)
    def _():
        lse = jnp.log(s_ref[...]) + m_ref[...]
        loss_ref[...] = (lse - p_ref[...]) * mask_ref[...]


# ------------------------------ Pallas wrappers ----------------------------- #

def pallas_linear(x, w, b, activation=None, out_dtype=jnp.bfloat16,
                  *, tm=512, tn=512, tk=512):
    """y = act(x @ w + b); bf16 MXU inputs, f32 accumulation, (M,N,K) tiling."""
    M, K = x.shape
    N = w.shape[1]
    tm = _tile(M, tm, 8)
    tn = _tile(N, tn, 128)
    tk = _tile(K, tk, 128)
    return pl.pallas_call(
        functools.partial(_matmul_kernel, activation=activation),
        out_shape=jax.ShapeDtypeStruct((M, N), out_dtype),
        grid=(M // tm, N // tn, K // tk),
        in_specs=[pl.BlockSpec((tm, tk), lambda i, j, k: (i, k)),
                  pl.BlockSpec((tk, tn), lambda i, j, k: (k, j)),
                  pl.BlockSpec((1, tn), lambda i, j, k: (0, j))],
        out_specs=pl.BlockSpec((tm, tn), lambda i, j, k: (i, j)),
        scratch_shapes=[pltpu.VMEM((tm, tn), jnp.float32)],
        compiler_params=pltpu.CompilerParams(
            dimension_semantics=("parallel", "parallel", "arbitrary"),
            vmem_limit_bytes=_VMEM_LIMIT),
    )(x.astype(jnp.bfloat16), w.astype(jnp.bfloat16), b.astype(jnp.float32))


def pallas_linear_res_ln(x, w, b, residual, gamma, beta,
                         out_dtype=jnp.bfloat16, *, tm=256, tk=512,
                         eps=_LN_EPS):
    """LayerNorm(x @ w + b + residual) * gamma + beta; full N in one block."""
    M, K = x.shape
    N = w.shape[1]
    tm = _tile(M, tm, 8)
    tk = _tile(K, tk, 128)
    return pl.pallas_call(
        functools.partial(_matmul_res_ln_kernel, eps=eps),
        out_shape=jax.ShapeDtypeStruct((M, N), out_dtype),
        grid=(M // tm, K // tk),
        in_specs=[pl.BlockSpec((tm, tk), lambda i, k: (i, k)),
                  pl.BlockSpec((tk, N), lambda i, k: (k, 0)),
                  pl.BlockSpec((1, N), lambda i, k: (0, 0)),
                  pl.BlockSpec((tm, N), lambda i, k: (i, 0)),
                  pl.BlockSpec((1, N), lambda i, k: (0, 0)),
                  pl.BlockSpec((1, N), lambda i, k: (0, 0))],
        out_specs=pl.BlockSpec((tm, N), lambda i, k: (i, 0)),
        scratch_shapes=[pltpu.VMEM((tm, N), jnp.float32)],
        compiler_params=pltpu.CompilerParams(
            dimension_semantics=("parallel", "arbitrary"),
            vmem_limit_bytes=_VMEM_LIMIT),
    )(x.astype(jnp.bfloat16), w.astype(jnp.bfloat16), b.astype(jnp.float32),
      residual.astype(jnp.bfloat16), gamma.astype(jnp.float32),
      beta.astype(jnp.float32))


def pallas_ffn_res_ln(x, w1, b1, w2, b2, gamma, beta,
                      out_dtype=jnp.bfloat16, *, tm=256, eps=_LN_EPS):
    """LayerNorm(x + relu(x @ w1 + b1) @ w2 + b2) * gamma + beta."""
    M, D = x.shape
    F = w1.shape[1]
    tm = _tile(M, tm, 8)
    return pl.pallas_call(
        functools.partial(_ffn_res_ln_kernel, eps=eps),
        out_shape=jax.ShapeDtypeStruct((M, D), out_dtype),
        grid=(M // tm,),
        in_specs=[pl.BlockSpec((tm, D), lambda i: (i, 0)),
                  pl.BlockSpec((D, F), lambda i: (0, 0)),
                  pl.BlockSpec((1, F), lambda i: (0, 0)),
                  pl.BlockSpec((F, D), lambda i: (0, 0)),
                  pl.BlockSpec((1, D), lambda i: (0, 0)),
                  pl.BlockSpec((1, D), lambda i: (0, 0)),
                  pl.BlockSpec((1, D), lambda i: (0, 0))],
        out_specs=pl.BlockSpec((tm, D), lambda i: (i, 0)),
        compiler_params=pltpu.CompilerParams(
            dimension_semantics=("parallel",),
            vmem_limit_bytes=_VMEM_LIMIT),
    )(x.astype(jnp.bfloat16), w1.astype(jnp.bfloat16), b1.astype(jnp.float32),
      w2.astype(jnp.bfloat16), b2.astype(jnp.float32),
      gamma.astype(jnp.float32), beta.astype(jnp.float32))


def pallas_mha(q_src, kv_src, kmask3, scale, num_heads, head_dim, *,
               causal, with_details):
    """Multi-head attention on packed projection slabs.

    q_src: (B, S, 3D) fused QKV (kv_src=None, self-attention) or (B, Sq, D)
    query projection; kv_src: (B, Sk, 2D) fused KV projection or None.
    kmask3: (B, 1, Sk) f32 key mask. Returns (ctx (B,Sq,D) bf16, probs, ent).
    """
    fused_qkv = kv_src is None
    B, Sq = q_src.shape[0], q_src.shape[1]
    D = num_heads * head_dim
    Sk = Sq if fused_qkv else kv_src.shape[1]

    out_shapes = [jax.ShapeDtypeStruct((B, Sq, D), jnp.bfloat16)]
    out_specs = [pl.BlockSpec((1, Sq, D), lambda b: (b, 0, 0))]
    if with_details:
        out_shapes += [jax.ShapeDtypeStruct((B, num_heads, Sq, Sk), jnp.bfloat16),
                       jax.ShapeDtypeStruct((B, num_heads, Sq, 1), jnp.float32)]
        out_specs += [pl.BlockSpec((1, num_heads, Sq, Sk), lambda b: (b, 0, 0, 0)),
                      pl.BlockSpec((1, num_heads, Sq, 1), lambda b: (b, 0, 0, 0))]

    in_arrays = [q_src.astype(jnp.bfloat16)]
    in_specs = [pl.BlockSpec((1, Sq, q_src.shape[2]), lambda b: (b, 0, 0))]
    if not fused_qkv:
        in_arrays.append(kv_src.astype(jnp.bfloat16))
        in_specs.append(pl.BlockSpec((1, Sk, kv_src.shape[2]), lambda b: (b, 0, 0)))
    in_arrays.append(kmask3.astype(jnp.float32))
    in_specs.append(pl.BlockSpec((1, 1, Sk), lambda b: (b, 0, 0)))

    outs = pl.pallas_call(
        functools.partial(_mha_kernel, scale=scale, causal=causal,
                          with_details=with_details, num_heads=num_heads,
                          head_dim=head_dim, fused_qkv=fused_qkv),
        out_shape=tuple(out_shapes),
        grid=(B,),
        in_specs=in_specs,
        out_specs=tuple(out_specs),
        compiler_params=pltpu.CompilerParams(
            dimension_semantics=("parallel",),
            vmem_limit_bytes=_VMEM_LIMIT),
    )(*in_arrays)

    if with_details:
        ctx, probs, ent = outs
        return ctx, probs, ent
    ctx = outs[0] if isinstance(outs, (tuple, list)) else outs
    return ctx, None, None


def pallas_xent(logits, labels, mask, *, tm=256, tv=2048):
    M, V = logits.shape
    tm = _tile(M, tm, 8)
    tv = _tile(V, tv, 128)
    return pl.pallas_call(
        functools.partial(_xent_kernel, tv=tv),
        out_shape=jax.ShapeDtypeStruct((M, 1), jnp.float32),
        grid=(M // tm, V // tv),
        in_specs=[pl.BlockSpec((tm, tv), lambda i, j: (i, j)),
                  pl.BlockSpec((tm, 1), lambda i, j: (i, 0)),
                  pl.BlockSpec((tm, 1), lambda i, j: (i, 0))],
        out_specs=pl.BlockSpec((tm, 1), lambda i, j: (i, 0)),
        scratch_shapes=[pltpu.VMEM((tm, 1), jnp.float32),
                        pltpu.VMEM((tm, 1), jnp.float32),
                        pltpu.VMEM((tm, 1), jnp.float32)],
        compiler_params=pltpu.CompilerParams(
            dimension_semantics=("parallel", "arbitrary"),
            vmem_limit_bytes=_VMEM_LIMIT),
    )(logits.astype(jnp.float32),
      labels.reshape(M, 1).astype(jnp.int32),
      mask.reshape(M, 1).astype(jnp.float32))


# ------------------------------- model pieces ------------------------------- #

def compute_attention_entropy(ent_rows, query_mask):
    """Same reduction as the PyTorch compute_attention_entropy; the per-row
    entropies (sum over key axis of -p*log p, NaN->0) come fused out of the
    attention kernel as ent_rows: (B, H, Sq, 1)."""
    distr = ent_rows[..., 0]                                   # (B, H, Sq)
    batch_head = (distr * query_mask[:, None, :]).sum(2) / query_mask.sum()
    return batch_head.mean(0).mean(0)


def positional_encoding(seq_len, dim):
    pos = jnp.arange(seq_len, dtype=jnp.float32)[:, None]
    div = jnp.exp(jnp.arange(0, dim, 2, dtype=jnp.float32)
                  * (-math.log(10000.0) / dim))
    pe = jnp.zeros((seq_len, dim), jnp.float32)
    pe = pe.at[:, 0::2].set(jnp.sin(pos * div))
    pe = pe.at[:, 1::2].set(jnp.cos(pos * div))
    return pe


def self_attention_sublayer(x2, lp, kmask3, B, S, H, causal, with_details):
    D = lp["wo"].shape[0]
    dh = D // H
    # fused QKV projection, consumed directly in (B, S, 3D) layout (no transposes)
    qkv = pallas_linear(x2, lp["wqkv"], lp["bqkv"])            # (B*S, 3D) bf16
    ctx, probs, ent = pallas_mha(qkv.reshape(B, S, 3 * D), None, kmask3,
                                 1.0 / math.sqrt(dh), H, dh,
                                 causal=causal, with_details=with_details)
    # output projection fused with residual-add + LayerNorm
    out = pallas_linear_res_ln(ctx.reshape(B * S, D), lp["wo"], lp["bo"],
                               x2, lp["ln1_g"], lp["ln1_b"])
    return out, probs, ent


def cross_attention_sublayer(xq2, enc2, lp, kmask3, B, Sq, Sk, H, with_details):
    D = lp["cwo"].shape[0]
    dh = D // H
    q2 = pallas_linear(xq2, lp["cwq"], lp["cbq"])              # (B*Sq, D) bf16
    kv = pallas_linear(enc2, lp["cwkv"], lp["cbkv"])           # (B*Sk, 2D) bf16
    ctx, probs, ent = pallas_mha(q2.reshape(B, Sq, D), kv.reshape(B, Sk, 2 * D),
                                 kmask3, 1.0 / math.sqrt(dh), H, dh,
                                 causal=False, with_details=with_details)
    out = pallas_linear_res_ln(ctx.reshape(B * Sq, D), lp["cwo"], lp["cbo"],
                               xq2, lp["lnc_g"], lp["lnc_b"])
    return out, probs, ent


def encoder_forward(p, src_tokens, src_mask, H, log_details):
    B, S = src_tokens.shape
    D = p["src_emb"].shape[1]
    # embedding gather + positional encoding left to XLA (tiny, memory bound)
    x = jnp.take(p["src_emb"], src_tokens, axis=0) * math.sqrt(D)
    x = x + positional_encoding(S, D)[None]
    x2 = x.reshape(B * S, D).astype(jnp.bfloat16)
    kmask3 = src_mask.astype(jnp.float32).reshape(B, 1, S)

    attns, ents = [], []
    for lp in p["enc_layers"]:
        x2, probs, ent = self_attention_sublayer(
            x2, lp, kmask3, B, S, H, causal=False, with_details=log_details)
        if log_details:
            attns.append(probs)
            ents.append(ent)
        x2 = pallas_ffn_res_ln(x2, lp["w1"], lp["b1"], lp["w2"], lp["b2"],
                               lp["ln2_g"], lp["ln2_b"])
    return x2.reshape(B, S, D), src_mask, attns, ents


def decoder_forward(p, encoded, enc_mask, tgt_batch, tgt_mask, loss_function,
                    H, log_details=False):
    B, S_src, D = encoded.shape
    dec_in, dec_mask = tgt_batch[:, :-1], tgt_mask[:, :-1]
    labels, label_mask = tgt_batch[:, 1:], tgt_mask[:, 1:]
    T = dec_in.shape[1]

    x = jnp.take(p["tgt_emb"], dec_in, axis=0) * math.sqrt(D)
    x = x + positional_encoding(T, D)[None]
    x2 = x.reshape(B * T, D).astype(jnp.bfloat16)
    enc2 = encoded.reshape(B * S_src, D).astype(jnp.bfloat16)

    self_kmask3 = dec_mask.astype(jnp.float32).reshape(B, 1, T)
    cross_kmask3 = enc_mask.astype(jnp.float32).reshape(B, 1, S_src)

    self_atts, self_ents, cross_atts = [], [], []
    for lp in p["dec_layers"]:
        x2, sp, se = self_attention_sublayer(
            x2, lp, self_kmask3, B, T, H, causal=True, with_details=log_details)
        if log_details:
            self_atts.append(sp)
            self_ents.append(se)

        x2, cp, _ = cross_attention_sublayer(
            x2, enc2, lp, cross_kmask3, B, T, S_src, H, with_details=log_details)
        if log_details:
            cross_atts.append(cp)

        x2 = pallas_ffn_res_ln(x2, lp["w1"], lp["b1"], lp["w2"], lp["b2"],
                               lp["ln2_g"], lp["ln2_b"])

    logits = pallas_linear(x2, p["out_w"], p["out_b"],
                           out_dtype=jnp.float32)                # (B*T, V)
    loss = loss_function(logits, labels.reshape(-1), label_mask.reshape(-1))

    details = {}
    if log_details:
        details["decoder_self_attention"] = self_atts
        details["decoder_cross_attention"] = cross_atts
        details["_decoder_self_entropy_rows"] = self_ents
        details["decoder_mask"] = dec_mask.astype(jnp.float32)
        details["logits"] = logits.reshape(B, T, -1)
    return loss, details


def seq2seq_forward(p, src_batch, src_mask, tgt_batch, tgt_mask, loss_function,
                    H, log_details=False):
    encoded, enc_mask, enc_atts, enc_ents = encoder_forward(
        p, src_batch, src_mask, H, log_details)
    loss, details = decoder_forward(p, encoded, enc_mask, tgt_batch, tgt_mask,
                                    loss_function, H, log_details=log_details)
    if log_details:
        details["enc_attentions"] = enc_atts
        enc_qmask = enc_mask.astype(jnp.float32)
        details["enc_attention_entropies"] = [
            compute_attention_entropy(e, enc_qmask) for e in enc_ents]
        shrinked_mask = details["decoder_mask"]
        self_ents = details.pop("_decoder_self_entropy_rows")
        # NOTE: reference code uses decoder_self_attention for BOTH entries.
        details["dec_attention_entropies"] = [
            compute_attention_entropy(e, shrinked_mask) for e in self_ents]
        details["encdec_attention_entropies"] = [
            compute_attention_entropy(e, shrinked_mask) for e in self_ents]
    return loss, details


def cross_entropy_loss(logits, labels, mask):
    row_loss = pallas_xent(logits, labels, mask)
    return jnp.sum(row_loss) / jnp.maximum(jnp.sum(mask.astype(jnp.float32)), 1.0)


# ----------------------------- parameter creation --------------------------- #

def init_params(key, vocab, dim, ff, layers):
    keys = iter(jax.random.split(key, 1024))

    def w(shape):   # matmul weights: bf16 once at init (no per-call casts)
        return (jax.random.normal(next(keys), shape, jnp.float32) * 0.02
                ).astype(jnp.bfloat16)

    def wf(shape):  # embeddings stay f32 (gather only)
        return jax.random.normal(next(keys), shape, jnp.float32) * 0.02

    def z(shape):
        return jnp.zeros(shape, jnp.float32)

    def o(shape):
        return jnp.ones(shape, jnp.float32)

    def enc_layer():
        return {"wqkv": w((dim, 3 * dim)), "bqkv": z((1, 3 * dim)),
                "wo": w((dim, dim)), "bo": z((1, dim)),
                "ln1_g": o((1, dim)), "ln1_b": z((1, dim)),
                "w1": w((dim, ff)), "b1": z((1, ff)),
                "w2": w((ff, dim)), "b2": z((1, dim)),
                "ln2_g": o((1, dim)), "ln2_b": z((1, dim))}

    def dec_layer():
        lp = enc_layer()
        lp.update({"cwq": w((dim, dim)), "cbq": z((1, dim)),
                   "cwkv": w((dim, 2 * dim)), "cbkv": z((1, 2 * dim)),
                   "cwo": w((dim, dim)), "cbo": z((1, dim)),
                   "lnc_g": o((1, dim)), "lnc_b": z((1, dim))})
        return lp

    p = {"src_emb": wf((vocab, dim)), "tgt_emb": wf((vocab, dim)),
         "out_w": w((dim, vocab)), "out_b": z((1, vocab))}
    p["enc_layers"] = [enc_layer() for _ in range(layers)]
    p["dec_layers"] = [dec_layer() for _ in range(layers)]
    return p


# ----------------------------------- main ----------------------------------- #

if __name__ == "__main__":
    VOCAB = 32
    DIM = 32
    HEADS = 4
    FF = 64
    LAYERS = 2
    B = 2
    S_SRC = 8
    S_TGT = 8  # decoder input length (tgt_batch has S_TGT + 1 tokens)

    root = jax.random.PRNGKey(0)
    k_params, k_src, k_tgt = jax.random.split(root, 3)

    params = init_params(k_params, VOCAB, DIM, FF, LAYERS)

    src_batch = jax.random.randint(k_src, (B, S_SRC), 0, VOCAB, dtype=jnp.int32)
    src_mask = jnp.ones((B, S_SRC), jnp.float32).at[1, -2:].set(0.0)
    tgt_batch = jax.random.randint(k_tgt, (B, S_TGT + 1), 0, VOCAB, dtype=jnp.int32)
    tgt_mask = jnp.ones((B, S_TGT + 1), jnp.float32).at[1, -2:].set(0.0)

    @jax.jit
    def run(src_b, src_m, tgt_b, tgt_m):
        return seq2seq_forward(params, src_b, src_m, tgt_b, tgt_m,
                               cross_entropy_loss, HEADS, log_details=True)

    loss, details = run(src_batch, src_mask, tgt_batch, tgt_mask)
    jax.block_until_ready(loss)
    jax.block_until_ready(details["enc_attention_entropies"][0])
    jax.block_until_ready(details["dec_attention_entropies"][0])
    jax.block_until_ready(details["decoder_cross_attention"][0])
    print("KERNEL_OK")
</pallas_src>

<mosaic_0001>
module attributes {stable_mosaic.version = 11 : i64} {
  func.func @_matmul_kernel(%arg0: i32, %arg1: i32, %arg2: i32, %arg3: memref<16x32xbf16, #tpu.memory_space<vmem>>, %arg4: memref<32x96xbf16, #tpu.memory_space<vmem>>, %arg5: memref<1x96xf32, #tpu.memory_space<vmem>>, %arg6: memref<16x96xbf16, #tpu.memory_space<vmem>>, %arg7: memref<16x96xf32, #tpu.memory_space<vmem>>) attributes {dimension_semantics = [#tpu.dimension_semantics<parallel>, #tpu.dimension_semantics<parallel>, #tpu.dimension_semantics<arbitrary>], iteration_bounds = array<i64: 1, 1, 1>, scalar_prefetch = 0 : i64, scratch_operands = 1 : i64, tpu.core_type = #tpu.core_type<tc>, window_params = [{transform_indices = @transform_0, window_bounds = array<i64: 16, 32>}, {transform_indices = @transform_1, window_bounds = array<i64: 32, 96>}, {transform_indices = @transform_2, window_bounds = array<i64: 1, 96>}, {transform_indices = @transform_3, window_bounds = array<i64: 16, 96>}]} {
    %c0_i32 = arith.constant 0 : i32
    %0 = arith.cmpi eq, %arg2, %c0_i32 : i32
    %1 = arith.extui %0 : i1 to i32
    %c0_i32_0 = arith.constant 0 : i32
    %2 = arith.cmpi ne, %1, %c0_i32_0 : i32
    scf.if %2 {
      %cst_10 = arith.constant 0.000000e+00 : f32
      %12 = vector.broadcast %cst_10 : f32 to vector<16x96xf32>
      %c0_11 = arith.constant 0 : index
      %c0_12 = arith.constant 0 : index
      %13 = vector.load %arg7[%c0_11, %c0_12] : memref<16x96xf32, #tpu.memory_space<vmem>>, vector<16x96xf32>
      tpu.vector_store %arg7[%c0_11, %c0_12], %12 {strides = array<i32>} : memref<16x96xf32, #tpu.memory_space<vmem>>, vector<16x96xf32>,
    } else {
    }
    %c0 = arith.constant 0 : index
    %c0_1 = arith.constant 0 : index
    %3 = vector.load %arg7[%c0, %c0_1] : memref<16x96xf32, #tpu.memory_space<vmem>>, vector<16x96xf32>
    %c0_2 = arith.constant 0 : index
    %c0_3 = arith.constant 0 : index
    %4 = vector.load %arg3[%c0_2, %c0_3] : memref<16x32xbf16, #tpu.memory_space<vmem>>, vector<16x32xbf16>
    %c0_4 = arith.constant 0 : index
    %c0_5 = arith.constant 0 : index
    %5 = vector.load %arg4[%c0_4, %c0_5] : memref<32x96xbf16, #tpu.memory_space<vmem>>, vector<32x96xbf16>
    %cst = arith.constant dense<0.000000e+00> : vector<16x96xf32>
    %6 = tpu.matmul %4, %5, %cst {dimension_numbers = #tpu.dot_dimension_numbers<[1], [0], [0], [1], [0, 0, 1, 1], [], []>} : vector<16x32xbf16>, vector<32x96xbf16>, vector<16x96xf32> -> vector<16x96xf32>
    %7 = arith.addf %3, %6 : vector<16x96xf32>
    %c0_6 = arith.constant 0 : index
    %c0_7 = arith.constant 0 : index
    %8 = vector.load %arg7[%c0_6, %c0_7] : memref<16x96xf32, #tpu.memory_space<vmem>>, vector<16x96xf32>
    tpu.vector_store %arg7[%c0_6, %c0_7], %7 {strides = array<i32>} : memref<16x96xf32, #tpu.memory_space<vmem>>, vector<16x96xf32>,
    %c0_i32_8 = arith.constant 0 : i32
    %9 = arith.cmpi eq, %arg2, %c0_i32_8 : i32
    %10 = arith.extui %9 : i1 to i32
    %c0_i32_9 = arith.constant 0 : i32
    %11 = arith.cmpi ne, %10, %c0_i32_9 : i32
    scf.if %11 {
      %c0_10 = arith.constant 0 : index
      %c0_11 = arith.constant 0 : index
      %12 = vector.load %arg7[%c0_10, %c0_11] : memref<16x96xf32, #tpu.memory_space<vmem>>, vector<16x96xf32>
      %c0_12 = arith.constant 0 : index
      %c0_13 = arith.constant 0 : index
      %13 = vector.load %arg5[%c0_12, %c0_13] : memref<1x96xf32, #tpu.memory_space<vmem>>, vector<1x96xf32>
      %14 = vector.broadcast %13 : vector<1x96xf32> to vector<16x96xf32>
      %15 = arith.addf %12, %14 : vector<16x96xf32>
      %16 = arith.truncf %15 : vector<16x96xf32> to vector<16x96xbf16>
      %c0_14 = arith.constant 0 : index
      %c0_15 = arith.constant 0 : index
      %17 = vector.load %arg6[%c0_14, %c0_15] : memref<16x96xbf16, #tpu.memory_space<vmem>>, vector<16x96xbf16>
      tpu.vector_store %arg6[%c0_14, %c0_15], %16 {strides = array<i32>} : memref<16x96xbf16, #tpu.memory_space<vmem>>, vector<16x96xbf16>,
    } else {
    }
    return
  }
  func.func @transform_0(%arg0: i32, %arg1: i32, %arg2: i32) -> (i32, i32) {
    %c0_i32 = arith.constant 0 : i32
    return %arg0, %arg2 : i32, i32
  }
  func.func @transform_1(%arg0: i32, %arg1: i32, %arg2: i32) -> (i32, i32) {
    %c0_i32 = arith.constant 0 : i32
    return %arg2, %arg1 : i32, i32
  }
  func.func @transform_2(%arg0: i32, %arg1: i32, %arg2: i32) -> (i32, i32) {
    %c0_i32 = arith.constant 0 : i32
    %c0_i32_0 = arith.constant 0 : i32
    return %c0_i32, %arg1 : i32, i32
  }
  func.func @transform_3(%arg0: i32, %arg1: i32, %arg2: i32) -> (i32, i32) {
    %c0_i32 = arith.constant 0 : i32
    return %arg0, %arg1 : i32, i32
  }
}

module attributes {stable_mosaic.version = 11 : i64} {
  func.func @_mha_kernel(%arg0: i32, %arg1: memref<1x8x96xbf16, #tpu.memory_space<vmem>>, %arg2: memref<1x1x8xf32, #tpu.memory_space<vmem>>, %arg3: memref<1x8x32xbf16, #tpu.memory_space<vmem>>, %arg4: memref<1x4x8x8xbf16, #tpu.memory_space<vmem>>, %arg5: memref<1x4x8x1xf32, #tpu.memory_space<vmem>>) attributes {dimension_semantics = [#tpu.dimension_semantics<parallel>], iteration_bounds = array<i64: 2>, scalar_prefetch = 0 : i64, scratch_operands = 0 : i64, tpu.core_type = #tpu.core_type<tc>, window_params = [{transform_indices = @transform_0, window_bounds = array<i64: 1, 8, 96>}, {transform_indices = @transform_1, window_bounds = array<i64: 1, 1, 8>}, {transform_indices = @transform_2, window_bounds = array<i64: 1, 8, 32>}, {transform_indices = @transform_3, window_bounds = array<i64: 1, 4, 8, 8>}, {transform_indices = @transform_4, window_bounds = array<i64: 1, 4, 8, 1>}]} {
    %c0 = arith.constant 0 : index
    %c0_0 = arith.constant 0 : index
    %c0_1 = arith.constant 0 : index
    %0 = vector.load %arg1[%c0, %c0_0, %c0_1] : memref<1x8x96xbf16, #tpu.memory_space<vmem>>, vector<1x8x96xbf16>
    %1 = vector.shape_cast %0 : vector<1x8x96xbf16> to vector<8x96xbf16>
    %2 = vector.extract_strided_slice %1 {offsets = [0, 0], sizes = [8, 32], strides = [1, 1]} : vector<8x96xbf16> to vector<8x32xbf16>
    %3 = vector.extract_strided_slice %1 {offsets = [0, 32], sizes = [8, 32], strides = [1, 1]} : vector<8x96xbf16> to vector<8x32xbf16>
    %4 = vector.extract_strided_slice %1 {offsets = [0, 64], sizes = [8, 32], strides = [1, 1]} : vector<8x96xbf16> to vector<8x32xbf16>
    %c0_2 = arith.constant 0 : index
    %c0_3 = arith.constant 0 : index
    %c0_4 = arith.constant 0 : index
    %5 = vector.load %arg2[%c0_2, %c0_3, %c0_4] : memref<1x1x8xf32, #tpu.memory_space<vmem>>, vector<1x1x8xf32>
    %6 = vector.shape_cast %5 : vector<1x1x8xf32> to vector<1x8xf32>
    %cst = arith.constant 0.000000e+00 : f32
    %7 = vector.broadcast %cst : f32 to vector<1x8xf32>
    %8 = arith.cmpf ogt, %6, %7 : vector<1x8xf32>
    %cst_5 = arith.constant 0.000000e+00 : f32
    %cst_6 = arith.constant -1.000000e+09 : f32
    %9 = vector.broadcast %cst_5 : f32 to vector<1x8xf32>
    %10 = vector.broadcast %cst_6 : f32 to vector<1x8xf32>
    %11 = arith.select %8, %9, %10 : vector<1x8xi1>, vector<1x8xf32>
    %12 = tpu.iota {dimensions = array<i32: 0>} : vector<8x8xi32>
    %13 = tpu.iota {dimensions = array<i32: 1>} : vector<8x8xi32>
    %14 = arith.cmpi sle, %13, %12 : vector<8x8xi32>
    %cst_7 = arith.constant 0.000000e+00 : f32
    %cst_8 = arith.constant -1.000000e+09 : f32
    %15 = vector.broadcast %cst_7 : f32 to vector<8x8xf32>
    %16 = vector.broadcast %cst_8 : f32 to vector<8x8xf32>
    %17 = arith.select %14, %15, %16 : vector<8x8xi1>, vector<8x8xf32>
    %18 = vector.broadcast %11 : vector<1x8xf32> to vector<8x8xf32>
    %19 = arith.addf %18, %17 : vector<8x8xf32>
    %20 = vector.extract_strided_slice %2 {offsets = [0, 0], sizes = [8, 8], strides = [1, 1]} : vector<8x32xbf16> to vector<8x8xbf16>
    %21 = vector.extract_strided_slice %3 {offsets = [0, 0], sizes = [8, 8], strides = [1, 1]} : vector<8x32xbf16> to vector<8x8xbf16>
    %22 = vector.extract_strided_slice %4 {offsets = [0, 0], sizes = [8, 8], strides = [1, 1]} : vector<8x32xbf16> to vector<8x8xbf16>
    %23 = tpu.transpose %21, [1, 0] : vector<8x8xbf16> -> vector<8x8xbf16>
    %cst_9 = arith.constant dense<0.000000e+00> : vector<8x8xf32>
    %24 = tpu.matmul %20, %23, %cst_9 {dimension_numbers = #tpu.dot_dimension_numbers<[1], [0], [0], [1], [0, 0, 1, 1], [], []>} : vector<8x8xbf16>, vector<8x8xbf16>, vector<8x8xf32> -> vector<8x8xf32>
    %cst_10 = arith.constant 0.353553385 : f32
    %25 = vector.broadcast %cst_10 : f32 to vector<8x8xf32>
    %26 = arith.mulf %24, %25 : vector<8x8xf32>
    %27 = arith.addf %26, %19 : vector<8x8xf32>
    %cst_11 = arith.constant dense<0xFF800000> : vector<8xf32>
    %28 = vector.multi_reduction <maximumf>, %27, %cst_11 [1] : vector<8x8xf32> to vector<8xf32>
    %29 = vector.shape_cast %28 : vector<8xf32> to vector<8x1xf32>
    %30 = vector.broadcast %29 : vector<8x1xf32> to vector<8x8xf32>
    %31 = arith.subf %27, %30 : vector<8x8xf32>
    %32 = math.exp %31 : vector<8x8xf32>
    %cst_12 = arith.constant dense<0.000000e+00> : vector<8xf32>
    %33 = vector.multi_reduction <add>, %32, %cst_12 [1] : vector<8x8xf32> to vector<8xf32>
    %34 = vector.shape_cast %33 : vector<8xf32> to vector<8x1xf32>
    %35 = tpu.reciprocal %34 {approx = true} : vector<8x1xf32> -> vector<8x1xf32>
    %36 = vector.broadcast %35 : vector<8x1xf32> to vector<8x8xf32>
    %37 = arith.mulf %32, %36 : vector<8x8xf32>
    %38 = arith.truncf %37 : vector<8x8xf32> to vector<8x8xbf16>
    %cst_13 = arith.constant dense<0.000000e+00> : vector<8x8xf32>
    %39 = tpu.matmul %38, %22, %cst_13 {dimension_numbers = #tpu.dot_dimension_numbers<[1], [0], [0], [1], [0, 0, 1, 1], [], []>} : vector<8x8xbf16>, vector<8x8xbf16>, vector<8x8xf32> -> vector<8x8xf32>
    %cst_14 = arith.constant 0.000000e+00 : f32
    %40 = vector.broadcast %cst_14 : f32 to vector<8x8xf32>
    %41 = arith.cmpf ogt, %37, %40 : vector<8x8xf32>
    %cst_15 = arith.constant 0.000000e+00 : f32
    %42 = vector.broadcast %cst_15 : f32 to vector<8x8xf32>
    %43 = arith.subf %42, %37 : vector<8x8xf32>
    %44 = math.log %37 : vector<8x8xf32>
    %45 = arith.mulf %43, %44 : vector<8x8xf32>
    %cst_16 = arith.constant 0.000000e+00 : f32
    %46 = vector.broadcast %cst_16 : f32 to vector<8x8xf32>
    %47 = arith.select %41, %45, %46 : vector<8x8xi1>, vector<8x8xf32>
    %cst_17 = arith.constant dense<0.000000e+00> : vector<8xf32>
    %48 = vector.multi_reduction <add>, %47, %cst_17 [1] : vector<8x8xf32> to vector<8xf32>
    %49 = vector.shape_cast %48 : vector<8xf32> to vector<8x1xf32>
    %50 = vector.extract_strided_slice %2 {offsets = [0, 8], sizes = [8, 8], strides = [1, 1]} : vector<8x32xbf16> to vector<8x8xbf16>
    %51 = vector.extract_strided_slice %3 {offsets = [0, 8], sizes = [8, 8], strides = [1, 1]} : vector<8x32xbf16> to vector<8x8xbf16>
    %52 = vector.extract_strided_slice %4 {offsets = [0, 8], sizes = [8, 8], strides = [1, 1]} : vector<8x32xbf16> to vector<8x8xbf16>
    %53 = tpu.transpose %51, [1, 0] : vector<8x8xbf16> -> vector<8x8xbf16>
    %cst_18 = arith.constant dense<0.000000e+00> : vector<8x8xf32>
    %54 = tpu.matmul %50, %53, %cst_18 {dimension_numbers = #tpu.dot_dimension_numbers<[1], [0], [0], [1], [0, 0, 1, 1], [], []>} : vector<8x8xbf16>, vector<8x8xbf16>, vector<8x8xf32> -> vector<8x8xf32>
    %cst_19 = arith.constant 0.353553385 : f32
    %55 = vector.broadcast %cst_19 : f32 to vector<8x8xf32>
    %56 = arith.mulf %54, %55 : vector<8x8xf32>
    %57 = arith.addf %56, %19 : vector<8x8xf32>
    %cst_20 = arith.constant dense<0xFF800000> : vector<8xf32>
    %58 = vector.multi_reduction <maximumf>, %57, %cst_20 [1] : vector<8x8xf32> to vector<8xf32>
    %59 = vector.shape_cast %58 : vector<8xf32> to vector<8x1xf32>
    %60 = vector.broadcast %59 : vector<8x1xf32> to vector<8x8xf32>
    %61 = arith.subf %57, %60 : vector<8x8xf32>
    %62 = math.exp %61 : vector<8x8xf32>
    %cst_21 = arith.constant dense<0.000000e+00> : vector<8xf32>
    %63 = vector.multi_reduction <add>, %62, %cst_21 [1] : vector<8x8xf32> to vector<8xf32>
    %64 = vector.shape_cast %63 : vector<8xf32> to vector<8x1xf32>
    %65 = tpu.reciprocal %64 {approx = true} : vector<8x1xf32> -> vector<8x1xf32>
    %66 = vector.broadcast %65 : vector<8x1xf32> to vector<8x8xf32>
    %67 = arith.mulf %62, %66 : vector<8x8xf32>
    %68 = arith.truncf %67 : vector<8x8xf32> to vector<8x8xbf16>
    %cst_22 = arith.constant dense<0.000000e+00> : vector<8x8xf32>
    %69 = tpu.matmul %68, %52, %cst_22 {dimension_numbers = #tpu.dot_dimension_numbers<[1], [0], [0], [1], [0, 0, 1, 1], [], []>} : vector<8x8xbf16>, vector<8x8xbf16>, vector<8x8xf32> -> vector<8x8xf32>
    %cst_23 = arith.constant 0.000000e+00 : f32
    %70 = vector.broadcast %cst_23 : f32 to vector<8x8xf32>
    %71 = arith.cmpf ogt, %67, %70 : vector<8x8xf32>
    %cst_24 = arith.constant 0.000000e+00 : f32
    %72 = vector.broadcast %cst_24 : f32 to vector<8x8xf32>
    %73 = arith.subf %72, %67 : vector<8x8xf32>
    %74 = math.log %67 : vector<8x8xf32>
    %75 = arith.mulf %73, %74 : vector<8x8xf32>
    %cst_25 = arith.constant 0.000000e+00 : f32
    %76 = vector.broadcast %cst_25 : f32 to vector<8x8xf32>
    %77 = arith.select %71, %75, %76 : vector<8x8xi1>, vector<8x8xf32>
    %cst_26 = arith.constant dense<0.000000e+00> : vector<8xf32>
    %78 = vector.multi_reduction <add>, %77, %cst_26 [1] : vector<8x8xf32> to vector<8xf32>
    %79 = vector.shape_cast %78 : vector<8xf32> to vector<8x1xf32>
    %80 = vector.extract_strided_slice %2 {offsets = [0, 16], sizes = [8, 8], strides = [1, 1]} : vector<8x32xbf16> to vector<8x8xbf16>
    %81 = vector.extract_strided_slice %3 {offsets = [0, 16], sizes = [8, 8], strides = [1, 1]} : vector<8x32xbf16> to vector<8x8xbf16>
    %82 = vector.extract_strided_slice %4 {offsets = [0, 16], sizes = [8, 8], strides = [1, 1]} : vector<8x32xbf16> to vector<8x8xbf16>
    %83 = tpu.transpose %81, [1, 0] : vector<8x8xbf16> -> vector<8x8xbf16>
    %cst_27 = arith.constant dense<0.000000e+00> : vector<8x8xf32>
    %84 = tpu.matmul %80, %83, %cst_27 {dimension_numbers = #tpu.dot_dimension_numbers<[1], [0], [0], [1], [0, 0, 1, 1], [], []>} : vector<8x8xbf16>, vector<8x8xbf16>, vector<8x8xf32> -> vector<8x8xf32>
    %cst_28 = arith.constant 0.353553385 : f32
    %85 = vector.broadcast %cst_28 : f32 to vector<8x8xf32>
    %86 = arith.mulf %84, %85 : vector<8x8xf32>
    %87 = arith.addf %86, %19 : vector<8x8xf32>
    %cst_29 = arith.constant dense<0xFF800000> : vector<8xf32>
    %88 = vector.multi_reduction <maximumf>, %87, %cst_29 [1] : vector<8x8xf32> to vector<8xf32>
    %89 = vector.shape_cast %88 : vector<8xf32> to vector<8x1xf32>
    %90 = vector.broadcast %89 : vector<8x1xf32> to vector<8x8xf32>
    %91 = arith.subf %87, %90 : vector<8x8xf32>
    %92 = math.exp %91 : vector<8x8xf32>
    %cst_30 = arith.constant dense<0.000000e+00> : vector<8xf32>
    %93 = vector.multi_reduction <add>, %92, %cst_30 [1] : vector<8x8xf32> to vector<8xf32>
    %94 = vector.shape_cast %93 : vector<8xf32> to vector<8x1xf32>
    %95 = tpu.reciprocal %94 {approx = true} : vector<8x1xf32> -> vector<8x1xf32>
    %96 = vector.broadcast %95 : vector<8x1xf32> to vector<8x8xf32>
    %97 = arith.mulf %92, %96 : vector<8x8xf32>
    %98 = arith.truncf %97 : vector<8x8xf32> to vector<8x8xbf16>
    %cst_31 = arith.constant dense<0.000000e+00> : vector<8x8xf32>
    %99 = tpu.matmul %98, %82, %cst_31 {dimension_numbers = #tpu.dot_dimension_numbers<[1], [0], [0], [1], [0, 0, 1, 1], [], []>} : vector<8x8xbf16>, vector<8x8xbf16>, vector<8x8xf32> -> vector<8x8xf32>
    %cst_32 = arith.constant 0.000000e+00 : f32
    %100 = vector.broadcast %cst_32 : f32 to vector<8x8xf32>
    %101 = arith.cmpf ogt, %97, %100 : vector<8x8xf32>
    %cst_33 = arith.constant 0.000000e+00 : f32
    %102 = vector.broadcast %cst_33 : f32 to vector<8x8xf32>
    %103 = arith.subf %102, %97 : vector<8x8xf32>
    %104 = math.log %97 : vector<8x8xf32>
    %105 = arith.mulf %103, %104 : vector<8x8xf32>
    %cst_34 = arith.constant 0.000000e+00 : f32
    %106 = vector.broadcast %cst_34 : f32 to vector<8x8xf32>
    %107 = arith.select %101, %105, %106 : vector<8x8xi1>, vector<8x8xf32>
    %cst_35 = arith.constant dense<0.000000e+00> : vector<8xf32>
    %108 = vector.multi_reduction <add>, %107, %cst_35 [1] : vector<8x8xf32> to vector<8xf32>
    %109 = vector.shape_cast %108 : vector<8xf32> to vector<8x1xf32>
    %110 = vector.extract_strided_slice %2 {offsets = [0, 24], sizes = [8, 8], strides = [1, 1]} : vector<8x32xbf16> to vector<8x8xbf16>
    %111 = vector.extract_strided_slice %3 {offsets = [0, 24], sizes = [8, 8], strides = [1, 1]} : vector<8x32xbf16> to vector<8x8xbf16>
    %112 = vector.extract_strided_slice %4 {offsets = [0, 24], sizes = [8, 8], strides = [1, 1]} : vector<8x32xbf16> to vector<8x8xbf16>
    %113 = tpu.transpose %111, [1, 0] : vector<8x8xbf16> -> vector<8x8xbf16>
    %cst_36 = arith.constant dense<0.000000e+00> : vector<8x8xf32>
    %114 = tpu.matmul %110, %113, %cst_36 {dimension_numbers = #tpu.dot_dimension_numbers<[1], [0], [0], [1], [0, 0, 1, 1], [], []>} : vector<8x8xbf16>, vector<8x8xbf16>, vector<8x8xf32> -> vector<8x8xf32>
    %cst_37 = arith.constant 0.353553385 : f32
    %115 = vector.broadcast %cst_37 : f32 to vector<8x8xf32>
    %116 = arith.mulf %114, %115 : vector<8x8xf32>
    %117 = arith.addf %116, %19 : vector<8x8xf32>
    %cst_38 = arith.constant dense<0xFF800000> : vector<8xf32>
    %118 = vector.multi_reduction <maximumf>, %117, %cst_38 [1] : vector<8x8xf32> to vector<8xf32>
    %119 = vector.shape_cast %118 : vector<8xf32> to vector<8x1xf32>
    %120 = vector.broadcast %119 : vector<8x1xf32> to vector<8x8xf32>
    %121 = arith.subf %117, %120 : vector<8x8xf32>
    %122 = math.exp %121 : vector<8x8xf32>
    %cst_39 = arith.constant dense<0.000000e+00> : vector<8xf32>
    %123 = vector.multi_reduction <add>, %122, %cst_39 [1] : vector<8x8xf32> to vector<8xf32>
    %124 = vector.shape_cast %123 : vector<8xf32> to vector<8x1xf32>
    %125 = tpu.reciprocal %124 {approx = true} : vector<8x1xf32> -> vector<8x1xf32>
    %126 = vector.broadcast %125 : vector<8x1xf32> to vector<8x8xf32>
    %127 = arith.mulf %122, %126 : vector<8x8xf32>
    %128 = arith.truncf %127 : vector<8x8xf32> to vector<8x8xbf16>
    %cst_40 = arith.constant dense<0.000000e+00> : vector<8x8xf32>
    %129 = tpu.matmul %128, %112, %cst_40 {dimension_numbers = #tpu.dot_dimension_numbers<[1], [0], [0], [1], [0, 0, 1, 1], [], []>} : vector<8x8xbf16>, vector<8x8xbf16>, vector<8x8xf32> -> vector<8x8xf32>
    %cst_41 = arith.constant 0.000000e+00 : f32
    %130 = vector.broadcast %cst_41 : f32 to vector<8x8xf32>
    %131 = arith.cmpf ogt, %127, %130 : vector<8x8xf32>
    %cst_42 = arith.constant 0.000000e+00 : f32
    %132 = vector.broadcast %cst_42 : f32 to vector<8x8xf32>
    %133 = arith.subf %132, %127 : vector<8x8xf32>
    %134 = math.log %127 : vector<8x8xf32>
    %135 = arith.mulf %133, %134 : vector<8x8xf32>
    %cst_43 = arith.constant 0.000000e+00 : f32
    %136 = vector.broadcast %cst_43 : f32 to vector<8x8xf32>
    %137 = arith.select %131, %135, %136 : vector<8x8xi1>, vector<8x8xf32>
    %cst_44 = arith.constant dense<0.000000e+00> : vector<8xf32>
    %138 = vector.multi_reduction <add>, %137, %cst_44 [1] : vector<8x8xf32> to vector<8xf32>
    %139 = vector.shape_cast %138 : vector<8xf32> to vector<8x1xf32>
    %140 = tpu.concatenate %39, %69, %99, %129 in 1 : vector<8x8xf32>, vector<8x8xf32>, vector<8x8xf32>, vector<8x8xf32> -> vector<8x32xf32>
    %141 = arith.truncf %140 : vector<8x32xf32> to vector<8x32xbf16>
    %c0_45 = arith.constant 0 : index
    %c0_46 = arith.constant 0 : index
    %c0_47 = arith.constant 0 : index
    %142 = vector.load %arg3[%c0_45, %c0_46, %c0_47] : memref<1x8x32xbf16, #tpu.memory_space<vmem>>, vector<1x8x32xbf16>
    %143 = vector.shape_cast %142 : vector<1x8x32xbf16> to vector<8x32xbf16>
    %144 = vector.shape_cast %141 : vector<8x32xbf16> to vector<1x8x32xbf16>
    tpu.vector_store %arg3[%c0_45, %c0_46, %c0_47], %144 {strides = array<i32>} : memref<1x8x32xbf16, #tpu.memory_space<vmem>>, vector<1x8x32xbf16>,
    %145 = vector.shape_cast %37 : vector<8x8xf32> to vector<1x8x8xf32>
    %146 = vector.shape_cast %67 : vector<8x8xf32> to vector<1x8x8xf32>
    %147 = vector.shape_cast %97 : vector<8x8xf32> to vector<1x8x8xf32>
    %148 = vector.shape_cast %127 : vector<8x8xf32> to vector<1x8x8xf32>
    %149 = tpu.concatenate %145, %146, %147, %148 in 0 : vector<1x8x8xf32>, vector<1x8x8xf32>, vector<1x8x8xf32>, vector<1x8x8xf32> -> vector<4x8x8xf32>
    %150 = arith.truncf %149 : vector<4x8x8xf32> to vector<4x8x8xbf16>
    %c0_48 = arith.constant 0 : index
    %c0_49 = arith.constant 0 : index
    %c0_50 = arith.constant 0 : index
    %c0_51 = arith.constant 0 : index
    %151 = vector.load %arg4[%c0_48, %c0_49, %c0_50, %c0_51] : memref<1x4x8x8xbf16, #tpu.memory_space<vmem>>, vector<1x4x8x8xbf16>
    %152 = vector.shape_cast %151 : vector<1x4x8x8xbf16> to vector<4x8x8xbf16>
    %153 = vector.shape_cast %150 : vector<4x8x8xbf16> to vector<1x4x8x8xbf16>
    tpu.vector_store %arg4[%c0_48, %c0_49, %c0_50, %c0_51], %153 {strides = array<i32>} : memref<1x4x8x8xbf16, #tpu.memory_space<vmem>>, vector<1x4x8x8xbf16>,
    %154 = vector.shape_cast %49 : vector<8x1xf32> to vector<1x8x1xf32>
    %155 = vector.shape_cast %79 : vector<8x1xf32> to vector<1x8x1xf32>
    %156 = vector.shape_cast %109 : vector<8x1xf32> to vector<1x8x1xf32>
    %157 = vector.shape_cast %139 : vector<8x1xf32> to vector<1x8x1xf32>
    %158 = tpu.concatenate %154, %155, %156, %157 in 0 : vector<1x8x1xf32>, vector<1x8x1xf32>, vector<1x8x1xf32>, vector<1x8x1xf32> -> vector<4x8x1xf32>
    %c0_52 = arith.constant 0 : index
    %c0_53 = arith.constant 0 : index
    %c0_54 = arith.constant 0 : index
    %c0_55 = arith.constant 0 : index
    %159 = vector.load %arg5[%c0_52, %c0_53, %c0_54, %c0_55] : memref<1x4x8x1xf32, #tpu.memory_space<vmem>>, vector<1x4x8x1xf32>
    %160 = vector.shape_cast %159 : vector<1x4x8x1xf32> to vector<4x8x1xf32>
    %161 = vector.shape_cast %158 : vector<4x8x1xf32> to vector<1x4x8x1xf32>
    tpu.vector_store %arg5[%c0_52, %c0_53, %c0_54, %c0_55], %161 {strides = array<i32>} : memref<1x4x8x1xf32, #tpu.memory_space<vmem>>, vector<1x4x8x1xf32>,
    return
  }
  func.func @transform_0(%arg0: i32) -> (i32, i32, i32) {
    %c0_i32 = arith.constant 0 : i32
    %c0_i32_0 = arith.constant 0 : i32
    %c0_i32_1 = arith.constant 0 : i32
    return %arg0, %c0_i32, %c0_i32_0 : i32, i32, i32
  }
  func.func @transform_1(%arg0: i32) -> (i32, i32, i32) {
    %c0_i32 = arith.constant 0 : i32
    %c0_i32_0 = arith.constant 0 : i32
    %c0_i32_1 = arith.constant 0 : i32
    return %arg0, %c0_i32, %c0_i32_0 : i32, i32, i32
  }
  func.func @transform_2(%arg0: i32) -> (i32, i32, i32) {
    %c0_i32 = arith.constant 0 : i32
    %c0_i32_0 = arith.constant 0 : i32
    %c0_i32_1 = arith.constant 0 : i32
    return %arg0, %c0_i32, %c0_i32_0 : i32, i32, i32
  }
  func.func @transform_3(%arg0: i32) -> (i32, i32, i32, i32) {
    %c0_i32 = arith.constant 0 : i32
    %c0_i32_0 = arith.constant 0 : i32
    %c0_i32_1 = arith.constant 0 : i32
    %c0_i32_2 = arith.constant 0 : i32
    return %arg0, %c0_i32, %c0_i32_0, %c0_i32_1 : i32, i32, i32, i32
  }
  func.func @transform_4(%arg0: i32) -> (i32, i32, i32, i32) {
    %c0_i32 = arith.constant 0 : i32
    %c0_i32_0 = arith.constant 0 : i32
    %c0_i32_1 = arith.constant 0 : i32
    %c0_i32_2 = arith.constant 0 : i32
    return %arg0, %c0_i32, %c0_i32_0, %c0_i32_1 : i32, i32, i32, i32
  }
}

module attributes {stable_mosaic.version = 11 : i64} {
  func.func @_matmul_kernel(%arg0: i32, %arg1: i32, %arg2: i32, %arg3: memref<16x32xbf16, #tpu.memory_space<vmem>>, %arg4: memref<32x32xbf16, #tpu.memory_space<vmem>>, %arg5: memref<1x32xf32, #tpu.memory_space<vmem>>, %arg6: memref<16x32xbf16, #tpu.memory_space<vmem>>, %arg7: memref<16x32xf32, #tpu.memory_space<vmem>>) attributes {dimension_semantics = [#tpu.dimension_semantics<parallel>, #tpu.dimension_semantics<parallel>, #tpu.dimension_semantics<arbitrary>], iteration_bounds = array<i64: 1, 1, 1>, scalar_prefetch = 0 : i64, scratch_operands = 1 : i64, tpu.core_type = #tpu.core_type<tc>, window_params = [{transform_indices = @transform_0, window_bounds = array<i64: 16, 32>}, {transform_indices = @transform_1, window_bounds = array<i64: 32, 32>}, {transform_indices = @transform_2, window_bounds = array<i64: 1, 32>}, {transform_indices = @transform_3, window_bounds = array<i64: 16, 32>}]} {
    %c0_i32 = arith.constant 0 : i32
    %0 = arith.cmpi eq, %arg2, %c0_i32 : i32
    %1 = arith.extui %0 : i1 to i32
    %c0_i32_0 = arith.constant 0 : i32
    %2 = arith.cmpi ne, %1, %c0_i32_0 : i32
    scf.if %2 {
      %cst_10 = arith.constant 0.000000e+00 : f32
      %12 = vector.broadcast %cst_10 : f32 to vector<16x32xf32>
      %c0_11 = arith.constant 0 : index
      %c0_12 = arith.constant 0 : index
      %13 = vector.load %arg7[%c0_11, %c0_12] : memref<16x32xf32, #tpu.memory_space<vmem>>, vector<16x32xf32>
      tpu.vector_store %arg7[%c0_11, %c0_12], %12 {strides = array<i32>} : memref<16x32xf32, #tpu.memory_space<vmem>>, vector<16x32xf32>,
    } else {
    }
    %c0 = arith.constant 0 : index
    %c0_1 = arith.constant 0 : index
    %3 = vector.load %arg7[%c0, %c0_1] : memref<16x32xf32, #tpu.memory_space<vmem>>, vector<16x32xf32>
    %c0_2 = arith.constant 0 : index
    %c0_3 = arith.constant 0 : index
    %4 = vector.load %arg3[%c0_2, %c0_3] : memref<16x32xbf16, #tpu.memory_space<vmem>>, vector<16x32xbf16>
    %c0_4 = arith.constant 0 : index
    %c0_5 = arith.constant 0 : index
    %5 = vector.load %arg4[%c0_4, %c0_5] : memref<32x32xbf16, #tpu.memory_space<vmem>>, vector<32x32xbf16>
    %cst = arith.constant dense<0.000000e+00> : vector<16x32xf32>
    %6 = tpu.matmul %4, %5, %cst {dimension_numbers = #tpu.dot_dimension_numbers<[1], [0], [0], [1], [0, 0, 1, 1], [], []>} : vector<16x32xbf16>, vector<32x32xbf16>, vector<16x32xf32> -> vector<16x32xf32>
    %7 = arith.addf %3, %6 : vector<16x32xf32>
    %c0_6 = arith.constant 0 : index
    %c0_7 = arith.constant 0 : index
    %8 = vector.load %arg7[%c0_6, %c0_7] : memref<16x32xf32, #tpu.memory_space<vmem>>, vector<16x32xf32>
    tpu.vector_store %arg7[%c0_6, %c0_7], %7 {strides = array<i32>} : memref<16x32xf32, #tpu.memory_space<vmem>>, vector<16x32xf32>,
    %c0_i32_8 = arith.constant 0 : i32
    %9 = arith.cmpi eq, %arg2, %c0_i32_8 : i32
    %10 = arith.extui %9 : i1 to i32
    %c0_i32_9 = arith.constant 0 : i32
    %11 = arith.cmpi ne, %10, %c0_i32_9 : i32
    scf.if %11 {
      %c0_10 = arith.constant 0 : index
      %c0_11 = arith.constant 0 : index
      %12 = vector.load %arg7[%c0_10, %c0_11] : memref<16x32xf32, #tpu.memory_space<vmem>>, vector<16x32xf32>
      %c0_12 = arith.constant 0 : index
      %c0_13 = arith.constant 0 : index
      %13 = vector.load %arg5[%c0_12, %c0_13] : memref<1x32xf32, #tpu.memory_space<vmem>>, vector<1x32xf32>
      %14 = vector.broadcast %13 : vector<1x32xf32> to vector<16x32xf32>
      %15 = arith.addf %12, %14 : vector<16x32xf32>
      %16 = arith.truncf %15 : vector<16x32xf32> to vector<16x32xbf16>
      %c0_14 = arith.constant 0 : index
      %c0_15 = arith.constant 0 : index
      %17 = vector.load %arg6[%c0_14, %c0_15] : memref<16x32xbf16, #tpu.memory_space<vmem>>, vector<16x32xbf16>
      tpu.vector_store %arg6[%c0_14, %c0_15], %16 {strides = array<i32>} : memref<16x32xbf16, #tpu.memory_space<vmem>>, vector<16x32xbf16>,
    } else {
    }
    return
  }
  func.func @transform_0(%arg0: i32, %arg1: i32, %arg2: i32) -> (i32, i32) {
    %c0_i32 = arith.constant 0 : i32
    return %arg0, %arg2 : i32, i32
  }
  func.func @transform_1(%arg0: i32, %arg1: i32, %arg2: i32) -> (i32, i32) {
    %c0_i32 = arith.constant 0 : i32
    return %arg2, %arg1 : i32, i32
  }
  func.func @transform_2(%arg0: i32, %arg1: i32, %arg2: i32) -> (i32, i32) {
    %c0_i32 = arith.constant 0 : i32
    %c0_i32_0 = arith.constant 0 : i32
    return %c0_i32, %arg1 : i32, i32
  }
  func.func @transform_3(%arg0: i32, %arg1: i32, %arg2: i32) -> (i32, i32) {
    %c0_i32 = arith.constant 0 : i32
    return %arg0, %arg1 : i32, i32
  }
}

module attributes {stable_mosaic.version = 11 : i64} {
  func.func @_matmul_res_ln_kernel(%arg0: i32, %arg1: i32, %arg2: memref<16x32xbf16, #tpu.memory_space<vmem>>, %arg3: memref<32x32xbf16, #tpu.memory_space<vmem>>, %arg4: memref<1x32xf32, #tpu.memory_space<vmem>>, %arg5: memref<16x32xbf16, #tpu.memory_space<vmem>>, %arg6: memref<1x32xf32, #tpu.memory_space<vmem>>, %arg7: memref<1x32xf32, #tpu.memory_space<vmem>>, %arg8: memref<16x32xbf16, #tpu.memory_space<vmem>>, %arg9: memref<16x32xf32, #tpu.memory_space<vmem>>) attributes {dimension_semantics = [#tpu.dimension_semantics<parallel>, #tpu.dimension_semantics<arbitrary>], iteration_bounds = array<i64: 1, 1>, scalar_prefetch = 0 : i64, scratch_operands = 1 : i64, tpu.core_type = #tpu.core_type<tc>, window_params = [{transform_indices = @transform_0, window_bounds = array<i64: 16, 32>}, {transform_indices = @transform_1, window_bounds = array<i64: 32, 32>}, {pipeline_mode = #tpu.pipeline_mode<synchronous>, transform_indices = @transform_2, window_bounds = array<i64: 1, 32>}, {transform_indices = @transform_3, window_bounds = array<i64: 16, 32>}, {pipeline_mode = #tpu.pipeline_mode<synchronous>, transform_indices = @transform_4, window_bounds = array<i64: 1, 32>}, {pipeline_mode = #tpu.pipeline_mode<synchronous>, transform_indices = @transform_5, window_bounds = array<i64: 1, 32>}, {transform_indices = @transform_6, window_bounds = array<i64: 16, 32>}]} {
    %c0_i32 = arith.constant 0 : i32
    %0 = arith.cmpi eq, %arg1, %c0_i32 : i32
    %1 = arith.extui %0 : i1 to i32
    %c0_i32_0 = arith.constant 0 : i32
    %2 = arith.cmpi ne, %1, %c0_i32_0 : i32
    scf.if %2 {
      %cst_10 = arith.constant 0.000000e+00 : f32
      %12 = vector.broadcast %cst_10 : f32 to vector<16x32xf32>
      %c0_11 = arith.constant 0 : index
      %c0_12 = arith.constant 0 : index
      %13 = vector.load %arg9[%c0_11, %c0_12] : memref<16x32xf32, #tpu.memory_space<vmem>>, vector<16x32xf32>
      tpu.vector_store %arg9[%c0_11, %c0_12], %12 {strides = array<i32>} : memref<16x32xf32, #tpu.memory_space<vmem>>, vector<16x32xf32>,
    } else {
    }
    %c0 = arith.constant 0 : index
    %c0_1 = arith.constant 0 : index
    %3 = vector.load %arg9[%c0, %c0_1] : memref<16x32xf32, #tpu.memory_space<vmem>>, vector<16x32xf32>
    %c0_2 = arith.constant 0 : index
    %c0_3 = arith.constant 0 : index
    %4 = vector.load %arg2[%c0_2, %c0_3] : memref<16x32xbf16, #tpu.memory_space<vmem>>, vector<16x32xbf16>
    %c0_4 = arith.constant 0 : index
    %c0_5 = arith.constant 0 : index
    %5 = vector.load %arg3[%c0_4, %c0_5] : memref<32x32xbf16, #tpu.memory_space<vmem>>, vector<32x32xbf16>
    %cst = arith.constant dense<0.000000e+00> : vector<16x32xf32>
    %6 = tpu.matmul %4, %5, %cst {dimension_numbers = #tpu.dot_dimension_numbers<[1], [0], [0], [1], [0, 0, 1, 1], [], []>} : vector<16x32xbf16>, vector<32x32xbf16>, vector<16x32xf32> -> vector<16x32xf32>
    %7 = arith.addf %3, %6 : vector<16x32xf32>
    %c0_6 = arith.constant 0 : index
    %c0_7 = arith.constant 0 : index
    %8 = vector.load %arg9[%c0_6, %c0_7] : memref<16x32xf32, #tpu.memory_space<vmem>>, vector<16x32xf32>
    tpu.vector_store %arg9[%c0_6, %c0_7], %7 {strides = array<i32>} : memref<16x32xf32, #tpu.memory_space<vmem>>, vector<16x32xf32>,
    %c0_i32_8 = arith.constant 0 : i32
    %9 = arith.cmpi eq, %arg1, %c0_i32_8 : i32
    %10 = arith.extui %9 : i1 to i32
    %c0_i32_9 = arith.constant 0 : i32
    %11 = arith.cmpi ne, %10, %c0_i32_9 : i32
    scf.if %11 {
      %c0_10 = arith.constant 0 : index
      %c0_11 = arith.constant 0 : index
      %12 = vector.load %arg9[%c0_10, %c0_11] : memref<16x32xf32, #tpu.memory_space<vmem>>, vector<16x32xf32>
      %c0_12 = arith.constant 0 : index
      %c0_13 = arith.constant 0 : index
      %13 = vector.load %arg4[%c0_12, %c0_13] : memref<1x32xf32, #tpu.memory_space<vmem>>, vector<1x32xf32>
      %14 = vector.broadcast %13 : vector<1x32xf32> to vector<16x32xf32>
      %15 = arith.addf %12, %14 : vector<16x32xf32>
      %c0_14 = arith.constant 0 : index
      %c0_15 = arith.constant 0 : index
      %16 = vector.load %arg5[%c0_14, %c0_15] : memref<16x32xbf16, #tpu.memory_space<vmem>>, vector<16x32xbf16>
      %17 = arith.extf %16 : vector<16x32xbf16> to vector<16x32xf32>
      %18 = arith.addf %15, %17 : vector<16x32xf32>
      %cst_16 = arith.constant dense<0.000000e+00> : vector<16xf32>
      %19 = vector.multi_reduction <add>, %18, %cst_16 [1] : vector<16x32xf32> to vector<16xf32>
      %20 = vector.shape_cast %19 : vector<16xf32> to vector<16x1xf32>
      %cst_17 = arith.constant 3.200000e+01 : f32
      %21 = vector.broadcast %cst_17 : f32 to vector<16x1xf32>
      %22 = arith.divf %20, %21 : vector<16x1xf32>
      %23 = vector.broadcast %22 : vector<16x1xf32> to vector<16x32xf32>
      %24 = arith.subf %18, %23 : vector<16x32xf32>
      %25 = arith.mulf %24, %24 : vector<16x32xf32>
      %cst_18 = arith.constant dense<0.000000e+00> : vector<16xf32>
      %26 = vector.multi_reduction <add>, %25, %cst_18 [1] : vector<16x32xf32> to vector<16xf32>
      %27 = vector.shape_cast %26 : vector<16xf32> to vector<16x1xf32>
      %cst_19 = arith.constant 3.200000e+01 : f32
      %28 = vector.broadcast %cst_19 : f32 to vector<16x1xf32>
      %29 = arith.divf %27, %28 : vector<16x1xf32>
      %30 = vector.broadcast %22 : vector<16x1xf32> to vector<16x32xf32>
      %31 = arith.subf %18, %30 : vector<16x32xf32>
      %cst_20 = arith.constant 9.99999974E-6 : f32
      %32 = vector.broadcast %cst_20 : f32 to vector<16x1xf32>
      %33 = arith.addf %29, %32 : vector<16x1xf32>
      %34 = math.rsqrt %33 : vector<16x1xf32>
      %35 = vector.broadcast %34 : vector<16x1xf32> to vector<16x32xf32>
      %36 = arith.mulf %31, %35 : vector<16x32xf32>
      %c0_21 = arith.constant 0 : index
      %c0_22 = arith.constant 0 : index
      %37 = vector.load %arg6[%c0_21, %c0_22] : memref<1x32xf32, #tpu.memory_space<vmem>>, vector<1x32xf32>
      %38 = vector.broadcast %37 : vector<1x32xf32> to vector<16x32xf32>
      %39 = arith.mulf %36, %38 : vector<16x32xf32>
      %c0_23 = arith.constant 0 : index
      %c0_24 = arith.constant 0 : index
      %40 = vector.load %arg7[%c0_23, %c0_24] : memref<1x32xf32, #tpu.memory_space<vmem>>, vector<1x32xf32>
      %41 = vector.broadcast %40 : vector<1x32xf32> to vector<16x32xf32>
      %42 = arith.addf %39, %41 : vector<16x32xf32>
      %43 = arith.truncf %42 : vector<16x32xf32> to vector<16x32xbf16>
      %c0_25 = arith.constant 0 : index
      %c0_26 = arith.constant 0 : index
      %44 = vector.load %arg8[%c0_25, %c0_26] : memref<16x32xbf16, #tpu.memory_space<vmem>>, vector<16x32xbf16>
      tpu.vector_store %arg8[%c0_25, %c0_26], %43 {strides = array<i32>} : memref<16x32xbf16, #tpu.memory_space<vmem>>, vector<16x32xbf16>,
    } else {
    }
    return
  }
  func.func @transform_0(%arg0: i32, %arg1: i32) -> (i32, i32) {
    %c0_i32 = arith.constant 0 : i32
    return %arg0, %arg1 : i32, i32
  }
  func.func @transform_1(%arg0: i32, %arg1: i32) -> (i32, i32) {
    %c0_i32 = arith.constant 0 : i32
    %c0_i32_0 = arith.constant 0 : i32
    return %arg1, %c0_i32 : i32, i32
  }
  func.func @transform_2(%arg0: i32, %arg1: i32) -> (i32, i32) {
    %c0_i32 = arith.constant 0 : i32
    %c0_i32_0 = arith.constant 0 : i32
    %c0_i32_1 = arith.constant 0 : i32
    return %c0_i32, %c0_i32_0 : i32, i32
  }
  func.func @transform_3(%arg0: i32, %arg1: i32) -> (i32, i32) {
    %c0_i32 = arith.constant 0 : i32
    %c0_i32_0 = arith.constant 0 : i32
    return %arg0, %c0_i32 : i32, i32
  }
  func.func @transform_4(%arg0: i32, %arg1: i32) -> (i32, i32) {
    %c0_i32 = arith.constant 0 : i32
    %c0_i32_0 = arith.constant 0 : i32
    %c0_i32_1 = arith.constant 0 : i32
    return %c0_i32, %c0_i32_0 : i32, i32
  }
  func.func @transform_5(%arg0: i32, %arg1: i32) -> (i32, i32) {
    %c0_i32 = arith.constant 0 : i32
    %c0_i32_0 = arith.constant 0 : i32
    %c0_i32_1 = arith.constant 0 : i32
    return %c0_i32, %c0_i32_0 : i32, i32
  }
  func.func @transform_6(%arg0: i32, %arg1: i32) -> (i32, i32) {
    %c0_i32 = arith.constant 0 : i32
    %c0_i32_0 = arith.constant 0 : i32
    return %arg0, %c0_i32 : i32, i32
  }
}

module attributes {stable_mosaic.version = 11 : i64} {
  func.func @_ffn_res_ln_kernel(%arg0: i32, %arg1: memref<16x32xbf16, #tpu.memory_space<vmem>>, %arg2: memref<32x64xbf16, #tpu.memory_space<vmem>>, %arg3: memref<1x64xf32, #tpu.memory_space<vmem>>, %arg4: memref<64x32xbf16, #tpu.memory_space<vmem>>, %arg5: memref<1x32xf32, #tpu.memory_space<vmem>>, %arg6: memref<1x32xf32, #tpu.memory_space<vmem>>, %arg7: memref<1x32xf32, #tpu.memory_space<vmem>>, %arg8: memref<16x32xbf16, #tpu.memory_space<vmem>>) attributes {dimension_semantics = [#tpu.dimension_semantics<parallel>], iteration_bounds = array<i64: 1>, scalar_prefetch = 0 : i64, scratch_operands = 0 : i64, tpu.core_type = #tpu.core_type<tc>, window_params = [{transform_indices = @transform_0, window_bounds = array<i64: 16, 32>}, {pipeline_mode = #tpu.pipeline_mode<synchronous>, transform_indices = @transform_1, window_bounds = array<i64: 32, 64>}, {pipeline_mode = #tpu.pipeline_mode<synchronous>, transform_indices = @transform_2, window_bounds = array<i64: 1, 64>}, {pipeline_mode = #tpu.pipeline_mode<synchronous>, transform_indices = @transform_3, window_bounds = array<i64: 64, 32>}, {pipeline_mode = #tpu.pipeline_mode<synchronous>, transform_indices = @transform_4, window_bounds = array<i64: 1, 32>}, {pipeline_mode = #tpu.pipeline_mode<synchronous>, transform_indices = @transform_5, window_bounds = array<i64: 1, 32>}, {pipeline_mode = #tpu.pipeline_mode<synchronous>, transform_indices = @transform_6, window_bounds = array<i64: 1, 32>}, {transform_indices = @transform_7, window_bounds = array<i64: 16, 32>}]} {
    %c0 = arith.constant 0 : index
    %c0_0 = arith.constant 0 : index
    %0 = vector.load %arg1[%c0, %c0_0] : memref<16x32xbf16, #tpu.memory_space<vmem>>, vector<16x32xbf16>
    %c0_1 = arith.constant 0 : index
    %c0_2 = arith.constant 0 : index
    %1 = vector.load %arg2[%c0_1, %c0_2] : memref<32x64xbf16, #tpu.memory_space<vmem>>, vector<32x64xbf16>
    %cst = arith.constant dense<0.000000e+00> : vector<16x64xf32>
    %2 = tpu.matmul %0, %1, %cst {dimension_numbers = #tpu.dot_dimension_numbers<[1], [0], [0], [1], [0, 0, 1, 1], [], []>} : vector<16x32xbf16>, vector<32x64xbf16>, vector<16x64xf32> -> vector<16x64xf32>
    %c0_3 = arith.constant 0 : index
    %c0_4 = arith.constant 0 : index
    %3 = vector.load %arg3[%c0_3, %c0_4] : memref<1x64xf32, #tpu.memory_space<vmem>>, vector<1x64xf32>
    %4 = vector.broadcast %3 : vector<1x64xf32> to vector<16x64xf32>
    %5 = arith.addf %2, %4 : vector<16x64xf32>
    %cst_5 = arith.constant 0.000000e+00 : f32
    %6 = vector.broadcast %cst_5 : f32 to vector<16x64xf32>
    %7 = arith.maximumf %5, %6 : vector<16x64xf32>
    %8 = arith.truncf %7 : vector<16x64xf32> to vector<16x64xbf16>
    %c0_6 = arith.constant 0 : index
    %c0_7 = arith.constant 0 : index
    %9 = vector.load %arg4[%c0_6, %c0_7] : memref<64x32xbf16, #tpu.memory_space<vmem>>, vector<64x32xbf16>
    %cst_8 = arith.constant dense<0.000000e+00> : vector<16x32xf32>
    %10 = tpu.matmul %8, %9, %cst_8 {dimension_numbers = #tpu.dot_dimension_numbers<[1], [0], [0], [1], [0, 0, 1, 1], [], []>} : vector<16x64xbf16>, vector<64x32xbf16>, vector<16x32xf32> -> vector<16x32xf32>
    %c0_9 = arith.constant 0 : index
    %c0_10 = arith.constant 0 : index
    %11 = vector.load %arg5[%c0_9, %c0_10] : memref<1x32xf32, #tpu.memory_space<vmem>>, vector<1x32xf32>
    %12 = vector.broadcast %11 : vector<1x32xf32> to vector<16x32xf32>
    %13 = arith.addf %10, %12 : vector<16x32xf32>
    %14 = arith.extf %0 : vector<16x32xbf16> to vector<16x32xf32>
    %15 = arith.addf %13, %14 : vector<16x32xf32>
    %cst_11 = arith.constant dense<0.000000e+00> : vector<16xf32>
    %16 = vector.multi_reduction <add>, %15, %cst_11 [1] : vector<16x32xf32> to vector<16xf32>
    %17 = vector.shape_cast %16 : vector<16xf32> to vector<16x1xf32>
    %cst_12 = arith.constant 3.200000e+01 : f32
    %18 = vector.broadcast %cst_12 : f32 to vector<16x1xf32>
    %19 = arith.divf %17, %18 : vector<16x1xf32>
    %20 = vector.broadcast %19 : vector<16x1xf32> to vector<16x32xf32>
    %21 = arith.subf %15, %20 : vector<16x32xf32>
    %22 = arith.mulf %21, %21 : vector<16x32xf32>
    %cst_13 = arith.constant dense<0.000000e+00> : vector<16xf32>
    %23 = vector.multi_reduction <add>, %22, %cst_13 [1] : vector<16x32xf32> to vector<16xf32>
    %24 = vector.shape_cast %23 : vector<16xf32> to vector<16x1xf32>
    %cst_14 = arith.constant 3.200000e+01 : f32
    %25 = vector.broadcast %cst_14 : f32 to vector<16x1xf32>
    %26 = arith.divf %24, %25 : vector<16x1xf32>
    %27 = vector.broadcast %19 : vector<16x1xf32> to vector<16x32xf32>
    %28 = arith.subf %15, %27 : vector<16x32xf32>
    %cst_15 = arith.constant 9.99999974E-6 : f32
    %29 = vector.broadcast %cst_15 : f32 to vector<16x1xf32>
    %30 = arith.addf %26, %29 : vector<16x1xf32>
    %31 = math.rsqrt %30 : vector<16x1xf32>
    %32 = vector.broadcast %31 : vector<16x1xf32> to vector<16x32xf32>
    %33 = arith.mulf %28, %32 : vector<16x32xf32>
    %c0_16 = arith.constant 0 : index
    %c0_17 = arith.constant 0 : index
    %34 = vector.load %arg6[%c0_16, %c0_17] : memref<1x32xf32, #tpu.memory_space<vmem>>, vector<1x32xf32>
    %35 = vector.broadcast %34 : vector<1x32xf32> to vector<16x32xf32>
    %36 = arith.mulf %33, %35 : vector<16x32xf32>
    %c0_18 = arith.constant 0 : index
    %c0_19 = arith.constant 0 : index
    %37 = vector.load %arg7[%c0_18, %c0_19] : memref<1x32xf32, #tpu.memory_space<vmem>>, vector<1x32xf32>
    %38 = vector.broadcast %37 : vector<1x32xf32> to vector<16x32xf32>
    %39 = arith.addf %36, %38 : vector<16x32xf32>
    %40 = arith.truncf %39 : vector<16x32xf32> to vector<16x32xbf16>
    %c0_20 = arith.constant 0 : index
    %c0_21 = arith.constant 0 : index
    %41 = vector.load %arg8[%c0_20, %c0_21] : memref<16x32xbf16, #tpu.memory_space<vmem>>, vector<16x32xbf16>
    tpu.vector_store %arg8[%c0_20, %c0_21], %40 {strides = array<i32>} : memref<16x32xbf16, #tpu.memory_space<vmem>>, vector<16x32xbf16>,
    return
  }
  func.func @transform_0(%arg0: i32) -> (i32, i32) {
    %c0_i32 = arith.constant 0 : i32
    %c0_i32_0 = arith.constant 0 : i32
    return %arg0, %c0_i32 : i32, i32
  }
  func.func @transform_1(%arg0: i32) -> (i32, i32) {
    %c0_i32 = arith.constant 0 : i32
    %c0_i32_0 = arith.constant 0 : i32
    %c0_i32_1 = arith.constant 0 : i32
    return %c0_i32, %c0_i32_0 : i32, i32
  }
  func.func @transform_2(%arg0: i32) -> (i32, i32) {
    %c0_i32 = arith.constant 0 : i32
    %c0_i32_0 = arith.constant 0 : i32
    %c0_i32_1 = arith.constant 0 : i32
    return %c0_i32, %c0_i32_0 : i32, i32
  }
  func.func @transform_3(%arg0: i32) -> (i32, i32) {
    %c0_i32 = arith.constant 0 : i32
    %c0_i32_0 = arith.constant 0 : i32
    %c0_i32_1 = arith.constant 0 : i32
    return %c0_i32, %c0_i32_0 : i32, i32
  }
  func.func @transform_4(%arg0: i32) -> (i32, i32) {
    %c0_i32 = arith.constant 0 : i32
    %c0_i32_0 = arith.constant 0 : i32
    %c0_i32_1 = arith.constant 0 : i32
    return %c0_i32, %c0_i32_0 : i32, i32
  }
  func.func @transform_5(%arg0: i32) -> (i32, i32) {
    %c0_i32 = arith.constant 0 : i32
    %c0_i32_0 = arith.constant 0 : i32
    %c0_i32_1 = arith.constant 0 : i32
    return %c0_i32, %c0_i32_0 : i32, i32
  }
  func.func @transform_6(%arg0: i32) -> (i32, i32) {
    %c0_i32 = arith.constant 0 : i32
    %c0_i32_0 = arith.constant 0 : i32
    %c0_i32_1 = arith.constant 0 : i32
    return %c0_i32, %c0_i32_0 : i32, i32
  }
  func.func @transform_7(%arg0: i32) -> (i32, i32) {
    %c0_i32 = arith.constant 0 : i32
    %c0_i32_0 = arith.constant 0 : i32
    return %arg0, %c0_i32 : i32, i32
  }
}

module attributes {stable_mosaic.version = 11 : i64} {
  func.func @_matmul_kernel(%arg0: i32, %arg1: i32, %arg2: i32, %arg3: memref<16x32xbf16, #tpu.memory_space<vmem>>, %arg4: memref<32x64xbf16, #tpu.memory_space<vmem>>, %arg5: memref<1x64xf32, #tpu.memory_space<vmem>>, %arg6: memref<16x64xbf16, #tpu.memory_space<vmem>>, %arg7: memref<16x64xf32, #tpu.memory_space<vmem>>) attributes {dimension_semantics = [#tpu.dimension_semantics<parallel>, #tpu.dimension_semantics<parallel>, #tpu.dimension_semantics<arbitrary>], iteration_bounds = array<i64: 1, 1, 1>, scalar_prefetch = 0 : i64, scratch_operands = 1 : i64, tpu.core_type = #tpu.core_type<tc>, window_params = [{transform_indices = @transform_0, window_bounds = array<i64: 16, 32>}, {transform_indices = @transform_1, window_bounds = array<i64: 32, 64>}, {transform_indices = @transform_2, window_bounds = array<i64: 1, 64>}, {transform_indices = @transform_3, window_bounds = array<i64: 16, 64>}]} {
    %c0_i32 = arith.constant 0 : i32
    %0 = arith.cmpi eq, %arg2, %c0_i32 : i32
    %1 = arith.extui %0 : i1 to i32
    %c0_i32_0 = arith.constant 0 : i32
    %2 = arith.cmpi ne, %1, %c0_i32_0 : i32
    scf.if %2 {
      %cst_10 = arith.constant 0.000000e+00 : f32
      %12 = vector.broadcast %cst_10 : f32 to vector<16x64xf32>
      %c0_11 = arith.constant 0 : index
      %c0_12 = arith.constant 0 : index
      %13 = vector.load %arg7[%c0_11, %c0_12] : memref<16x64xf32, #tpu.memory_space<vmem>>, vector<16x64xf32>
      tpu.vector_store %arg7[%c0_11, %c0_12], %12 {strides = array<i32>} : memref<16x64xf32, #tpu.memory_space<vmem>>, vector<16x64xf32>,
    } else {
    }
    %c0 = arith.constant 0 : index
    %c0_1 = arith.constant 0 : index
    %3 = vector.load %arg7[%c0, %c0_1] : memref<16x64xf32, #tpu.memory_space<vmem>>, vector<16x64xf32>
    %c0_2 = arith.constant 0 : index
    %c0_3 = arith.constant 0 : index
    %4 = vector.load %arg3[%c0_2, %c0_3] : memref<16x32xbf16, #tpu.memory_space<vmem>>, vector<16x32xbf16>
    %c0_4 = arith.constant 0 : index
    %c0_5 = arith.constant 0 : index
    %5 = vector.load %arg4[%c0_4, %c0_5] : memref<32x64xbf16, #tpu.memory_space<vmem>>, vector<32x64xbf16>
    %cst = arith.constant dense<0.000000e+00> : vector<16x64xf32>
    %6 = tpu.matmul %4, %5, %cst {dimension_numbers = #tpu.dot_dimension_numbers<[1], [0], [0], [1], [0, 0, 1, 1], [], []>} : vector<16x32xbf16>, vector<32x64xbf16>, vector<16x64xf32> -> vector<16x64xf32>
    %7 = arith.addf %3, %6 : vector<16x64xf32>
    %c0_6 = arith.constant 0 : index
    %c0_7 = arith.constant 0 : index
    %8 = vector.load %arg7[%c0_6, %c0_7] : memref<16x64xf32, #tpu.memory_space<vmem>>, vector<16x64xf32>
    tpu.vector_store %arg7[%c0_6, %c0_7], %7 {strides = array<i32>} : memref<16x64xf32, #tpu.memory_space<vmem>>, vector<16x64xf32>,
    %c0_i32_8 = arith.constant 0 : i32
    %9 = arith.cmpi eq, %arg2, %c0_i32_8 : i32
    %10 = arith.extui %9 : i1 to i32
    %c0_i32_9 = arith.constant 0 : i32
    %11 = arith.cmpi ne, %10, %c0_i32_9 : i32
    scf.if %11 {
      %c0_10 = arith.constant 0 : index
      %c0_11 = arith.constant 0 : index
      %12 = vector.load %arg7[%c0_10, %c0_11] : memref<16x64xf32, #tpu.memory_space<vmem>>, vector<16x64xf32>
      %c0_12 = arith.constant 0 : index
      %c0_13 = arith.constant 0 : index
      %13 = vector.load %arg5[%c0_12, %c0_13] : memref<1x64xf32, #tpu.memory_space<vmem>>, vector<1x64xf32>
      %14 = vector.broadcast %13 : vector<1x64xf32> to vector<16x64xf32>
      %15 = arith.addf %12, %14 : vector<16x64xf32>
      %16 = arith.truncf %15 : vector<16x64xf32> to vector<16x64xbf16>
      %c0_14 = arith.constant 0 : index
      %c0_15 = arith.constant 0 : index
      %17 = vector.load %arg6[%c0_14, %c0_15] : memref<16x64xbf16, #tpu.memory_space<vmem>>, vector<16x64xbf16>
      tpu.vector_store %arg6[%c0_14, %c0_15], %16 {strides = array<i32>} : memref<16x64xbf16, #tpu.memory_space<vmem>>, vector<16x64xbf16>,
    } else {
    }
    return
  }
  func.func @transform_0(%arg0: i32, %arg1: i32, %arg2: i32) -> (i32, i32) {
    %c0_i32 = arith.constant 0 : i32
    return %arg0, %arg2 : i32, i32
  }
  func.func @transform_1(%arg0: i32, %arg1: i32, %arg2: i32) -> (i32, i32) {
    %c0_i32 = arith.constant 0 : i32
    return %arg2, %arg1 : i32, i32
  }
  func.func @transform_2(%arg0: i32, %arg1: i32, %arg2: i32) -> (i32, i32) {
    %c0_i32 = arith.constant 0 : i32
    %c0_i32_0 = arith.constant 0 : i32
    return %c0_i32, %arg1 : i32, i32
  }
  func.func @transform_3(%arg0: i32, %arg1: i32, %arg2: i32) -> (i32, i32) {
    %c0_i32 = arith.constant 0 : i32
    return %arg0, %arg1 : i32, i32
  }
}

module attributes {stable_mosaic.version = 11 : i64} {
  func.func @_mha_kernel(%arg0: i32, %arg1: memref<1x8x96xbf16, #tpu.memory_space<vmem>>, %arg2: memref<1x1x8xf32, #tpu.memory_space<vmem>>, %arg3: memref<1x8x32xbf16, #tpu.memory_space<vmem>>, %arg4: memref<1x4x8x8xbf16, #tpu.memory_space<vmem>>, %arg5: memref<1x4x8x1xf32, #tpu.memory_space<vmem>>) attributes {dimension_semantics = [#tpu.dimension_semantics<parallel>], iteration_bounds = array<i64: 2>, scalar_prefetch = 0 : i64, scratch_operands = 0 : i64, tpu.core_type = #tpu.core_type<tc>, window_params = [{transform_indices = @transform_0, window_bounds = array<i64: 1, 8, 96>}, {transform_indices = @transform_1, window_bounds = array<i64: 1, 1, 8>}, {transform_indices = @transform_2, window_bounds = array<i64: 1, 8, 32>}, {transform_indices = @transform_3, window_bounds = array<i64: 1, 4, 8, 8>}, {transform_indices = @transform_4, window_bounds = array<i64: 1, 4, 8, 1>}]} {
    %c0 = arith.constant 0 : index
    %c0_0 = arith.constant 0 : index
    %c0_1 = arith.constant 0 : index
    %0 = vector.load %arg1[%c0, %c0_0, %c0_1] : memref<1x8x96xbf16, #tpu.memory_space<vmem>>, vector<1x8x96xbf16>
    %1 = vector.shape_cast %0 : vector<1x8x96xbf16> to vector<8x96xbf16>
    %2 = vector.extract_strided_slice %1 {offsets = [0, 0], sizes = [8, 32], strides = [1, 1]} : vector<8x96xbf16> to vector<8x32xbf16>
    %3 = vector.extract_strided_slice %1 {offsets = [0, 32], sizes = [8, 32], strides = [1, 1]} : vector<8x96xbf16> to vector<8x32xbf16>
    %4 = vector.extract_strided_slice %1 {offsets = [0, 64], sizes = [8, 32], strides = [1, 1]} : vector<8x96xbf16> to vector<8x32xbf16>
    %c0_2 = arith.constant 0 : index
    %c0_3 = arith.constant 0 : index
    %c0_4 = arith.constant 0 : index
    %5 = vector.load %arg2[%c0_2, %c0_3, %c0_4] : memref<1x1x8xf32, #tpu.memory_space<vmem>>, vector<1x1x8xf32>
    %6 = vector.shape_cast %5 : vector<1x1x8xf32> to vector<1x8xf32>
    %cst = arith.constant 0.000000e+00 : f32
    %7 = vector.broadcast %cst : f32 to vector<1x8xf32>
    %8 = arith.cmpf ogt, %6, %7 : vector<1x8xf32>
    %cst_5 = arith.constant 0.000000e+00 : f32
    %cst_6 = arith.constant -1.000000e+09 : f32
    %9 = vector.broadcast %cst_5 : f32 to vector<1x8xf32>
    %10 = vector.broadcast %cst_6 : f32 to vector<1x8xf32>
    %11 = arith.select %8, %9, %10 : vector<1x8xi1>, vector<1x8xf32>
    %12 = vector.extract_strided_slice %2 {offsets = [0, 0], sizes = [8, 8], strides = [1, 1]} : vector<8x32xbf16> to vector<8x8xbf16>
    %13 = vector.extract_strided_slice %3 {offsets = [0, 0], sizes = [8, 8], strides = [1, 1]} : vector<8x32xbf16> to vector<8x8xbf16>
    %14 = vector.extract_strided_slice %4 {offsets = [0, 0], sizes = [8, 8], strides = [1, 1]} : vector<8x32xbf16> to vector<8x8xbf16>
    %15 = tpu.transpose %13, [1, 0] : vector<8x8xbf16> -> vector<8x8xbf16>
    %cst_7 = arith.constant dense<0.000000e+00> : vector<8x8xf32>
    %16 = tpu.matmul %12, %15, %cst_7 {dimension_numbers = #tpu.dot_dimension_numbers<[1], [0], [0], [1], [0, 0, 1, 1], [], []>} : vector<8x8xbf16>, vector<8x8xbf16>, vector<8x8xf32> -> vector<8x8xf32>
    %cst_8 = arith.constant 0.353553385 : f32
    %17 = vector.broadcast %cst_8 : f32 to vector<8x8xf32>
    %18 = arith.mulf %16, %17 : vector<8x8xf32>
    %19 = vector.broadcast %11 : vector<1x8xf32> to vector<8x8xf32>
    %20 = arith.addf %18, %19 : vector<8x8xf32>
    %cst_9 = arith.constant dense<0xFF800000> : vector<8xf32>
    %21 = vector.multi_reduction <maximumf>, %20, %cst_9 [1] : vector<8x8xf32> to vector<8xf32>
    %22 = vector.shape_cast %21 : vector<8xf32> to vector<8x1xf32>
    %23 = vector.broadcast %22 : vector<8x1xf32> to vector<8x8xf32>
    %24 = arith.subf %20, %23 : vector<8x8xf32>
    %25 = math.exp %24 : vector<8x8xf32>
    %cst_10 = arith.constant dense<0.000000e+00> : vector<8xf32>
    %26 = vector.multi_reduction <add>, %25, %cst_10 [1] : vector<8x8xf32> to vector<8xf32>
    %27 = vector.shape_cast %26 : vector<8xf32> to vector<8x1xf32>
    %28 = tpu.reciprocal %27 {approx = true} : vector<8x1xf32> -> vector<8x1xf32>
    %29 = vector.broadcast %28 : vector<8x1xf32> to vector<8x8xf32>
    %30 = arith.mulf %25, %29 : vector<8x8xf32>
    %31 = arith.truncf %30 : vector<8x8xf32> to vector<8x8xbf16>
    %cst_11 = arith.constant dense<0.000000e+00> : vector<8x8xf32>
    %32 = tpu.matmul %31, %14, %cst_11 {dimension_numbers = #tpu.dot_dimension_numbers<[1], [0], [0], [1], [0, 0, 1, 1], [], []>} : vector<8x8xbf16>, vector<8x8xbf16>, vector<8x8xf32> -> vector<8x8xf32>
    %cst_12 = arith.constant 0.000000e+00 : f32
    %33 = vector.broadcast %cst_12 : f32 to vector<8x8xf32>
    %34 = arith.cmpf ogt, %30, %33 : vector<8x8xf32>
    %cst_13 = arith.constant 0.000000e+00 : f32
    %35 = vector.broadcast %cst_13 : f32 to vector<8x8xf32>
    %36 = arith.subf %35, %30 : vector<8x8xf32>
    %37 = math.log %30 : vector<8x8xf32>
    %38 = arith.mulf %36, %37 : vector<8x8xf32>
    %cst_14 = arith.constant 0.000000e+00 : f32
    %39 = vector.broadcast %cst_14 : f32 to vector<8x8xf32>
    %40 = arith.select %34, %38, %39 : vector<8x8xi1>, vector<8x8xf32>
    %cst_15 = arith.constant dense<0.000000e+00> : vector<8xf32>
    %41 = vector.multi_reduction <add>, %40, %cst_15 [1] : vector<8x8xf32> to vector<8xf32>
    %42 = vector.shape_cast %41 : vector<8xf32> to vector<8x1xf32>
    %43 = vector.extract_strided_slice %2 {offsets = [0, 8], sizes = [8, 8], strides = [1, 1]} : vector<8x32xbf16> to vector<8x8xbf16>
    %44 = vector.extract_strided_slice %3 {offsets = [0, 8], sizes = [8, 8], strides = [1, 1]} : vector<8x32xbf16> to vector<8x8xbf16>
    %45 = vector.extract_strided_slice %4 {offsets = [0, 8], sizes = [8, 8], strides = [1, 1]} : vector<8x32xbf16> to vector<8x8xbf16>
    %46 = tpu.transpose %44, [1, 0] : vector<8x8xbf16> -> vector<8x8xbf16>
    %cst_16 = arith.constant dense<0.000000e+00> : vector<8x8xf32>
    %47 = tpu.matmul %43, %46, %cst_16 {dimension_numbers = #tpu.dot_dimension_numbers<[1], [0], [0], [1], [0, 0, 1, 1], [], []>} : vector<8x8xbf16>, vector<8x8xbf16>, vector<8x8xf32> -> vector<8x8xf32>
    %cst_17 = arith.constant 0.353553385 : f32
    %48 = vector.broadcast %cst_17 : f32 to vector<8x8xf32>
    %49 = arith.mulf %47, %48 : vector<8x8xf32>
    %50 = vector.broadcast %11 : vector<1x8xf32> to vector<8x8xf32>
    %51 = arith.addf %49, %50 : vector<8x8xf32>
    %cst_18 = arith.constant dense<0xFF800000> : vector<8xf32>
    %52 = vector.multi_reduction <maximumf>, %51, %cst_18 [1] : vector<8x8xf32> to vector<8xf32>
    %53 = vector.shape_cast %52 : vector<8xf32> to vector<8x1xf32>
    %54 = vector.broadcast %53 : vector<8x1xf32> to vector<8x8xf32>
    %55 = arith.subf %51, %54 : vector<8x8xf32>
    %56 = math.exp %55 : vector<8x8xf32>
    %cst_19 = arith.constant dense<0.000000e+00> : vector<8xf32>
    %57 = vector.multi_reduction <add>, %56, %cst_19 [1] : vector<8x8xf32> to vector<8xf32>
    %58 = vector.shape_cast %57 : vector<8xf32> to vector<8x1xf32>
    %59 = tpu.reciprocal %58 {approx = true} : vector<8x1xf32> -> vector<8x1xf32>
    %60 = vector.broadcast %59 : vector<8x1xf32> to vector<8x8xf32>
    %61 = arith.mulf %56, %60 : vector<8x8xf32>
    %62 = arith.truncf %61 : vector<8x8xf32> to vector<8x8xbf16>
    %cst_20 = arith.constant dense<0.000000e+00> : vector<8x8xf32>
    %63 = tpu.matmul %62, %45, %cst_20 {dimension_numbers = #tpu.dot_dimension_numbers<[1], [0], [0], [1], [0, 0, 1, 1], [], []>} : vector<8x8xbf16>, vector<8x8xbf16>, vector<8x8xf32> -> vector<8x8xf32>
    %cst_21 = arith.constant 0.000000e+00 : f32
    %64 = vector.broadcast %cst_21 : f32 to vector<8x8xf32>
    %65 = arith.cmpf ogt, %61, %64 : vector<8x8xf32>
    %cst_22 = arith.constant 0.000000e+00 : f32
    %66 = vector.broadcast %cst_22 : f32 to vector<8x8xf32>
    %67 = arith.subf %66, %61 : vector<8x8xf32>
    %68 = math.log %61 : vector<8x8xf32>
    %69 = arith.mulf %67, %68 : vector<8x8xf32>
    %cst_23 = arith.constant 0.000000e+00 : f32
    %70 = vector.broadcast %cst_23 : f32 to vector<8x8xf32>
    %71 = arith.select %65, %69, %70 : vector<8x8xi1>, vector<8x8xf32>
    %cst_24 = arith.constant dense<0.000000e+00> : vector<8xf32>
    %72 = vector.multi_reduction <add>, %71, %cst_24 [1] : vector<8x8xf32> to vector<8xf32>
    %73 = vector.shape_cast %72 : vector<8xf32> to vector<8x1xf32>
    %74 = vector.extract_strided_slice %2 {offsets = [0, 16], sizes = [8, 8], strides = [1, 1]} : vector<8x32xbf16> to vector<8x8xbf16>
    %75 = vector.extract_strided_slice %3 {offsets = [0, 16], sizes = [8, 8], strides = [1, 1]} : vector<8x32xbf16> to vector<8x8xbf16>
    %76 = vector.extract_strided_slice %4 {offsets = [0, 16], sizes = [8, 8], strides = [1, 1]} : vector<8x32xbf16> to vector<8x8xbf16>
    %77 = tpu.transpose %75, [1, 0] : vector<8x8xbf16> -> vector<8x8xbf16>
    %cst_25 = arith.constant dense<0.000000e+00> : vector<8x8xf32>
    %78 = tpu.matmul %74, %77, %cst_25 {dimension_numbers = #tpu.dot_dimension_numbers<[1], [0], [0], [1], [0, 0, 1, 1], [], []>} : vector<8x8xbf16>, vector<8x8xbf16>, vector<8x8xf32> -> vector<8x8xf32>
    %cst_26 = arith.constant 0.353553385 : f32
    %79 = vector.broadcast %cst_26 : f32 to vector<8x8xf32>
    %80 = arith.mulf %78, %79 : vector<8x8xf32>
    %81 = vector.broadcast %11 : vector<1x8xf32> to vector<8x8xf32>
    %82 = arith.addf %80, %81 : vector<8x8xf32>
    %cst_27 = arith.constant dense<0xFF800000> : vector<8xf32>
    %83 = vector.multi_reduction <maximumf>, %82, %cst_27 [1] : vector<8x8xf32> to vector<8xf32>
    %84 = vector.shape_cast %83 : vector<8xf32> to vector<8x1xf32>
    %85 = vector.broadcast %84 : vector<8x1xf32> to vector<8x8xf32>
    %86 = arith.subf %82, %85 : vector<8x8xf32>
    %87 = math.exp %86 : vector<8x8xf32>
    %cst_28 = arith.constant dense<0.000000e+00> : vector<8xf32>
    %88 = vector.multi_reduction <add>, %87, %cst_28 [1] : vector<8x8xf32> to vector<8xf32>
    %89 = vector.shape_cast %88 : vector<8xf32> to vector<8x1xf32>
    %90 = tpu.reciprocal %89 {approx = true} : vector<8x1xf32> -> vector<8x1xf32>
    %91 = vector.broadcast %90 : vector<8x1xf32> to vector<8x8xf32>
    %92 = arith.mulf %87, %91 : vector<8x8xf32>
    %93 = arith.truncf %92 : vector<8x8xf32> to vector<8x8xbf16>
    %cst_29 = arith.constant dense<0.000000e+00> : vector<8x8xf32>
    %94 = tpu.matmul %93, %76, %cst_29 {dimension_numbers = #tpu.dot_dimension_numbers<[1], [0], [0], [1], [0, 0, 1, 1], [], []>} : vector<8x8xbf16>, vector<8x8xbf16>, vector<8x8xf32> -> vector<8x8xf32>
    %cst_30 = arith.constant 0.000000e+00 : f32
    %95 = vector.broadcast %cst_30 : f32 to vector<8x8xf32>
    %96 = arith.cmpf ogt, %92, %95 : vector<8x8xf32>
    %cst_31 = arith.constant 0.000000e+00 : f32
    %97 = vector.broadcast %cst_31 : f32 to vector<8x8xf32>
    %98 = arith.subf %97, %92 : vector<8x8xf32>
    %99 = math.log %92 : vector<8x8xf32>
    %100 = arith.mulf %98, %99 : vector<8x8xf32>
    %cst_32 = arith.constant 0.000000e+00 : f32
    %101 = vector.broadcast %cst_32 : f32 to vector<8x8xf32>
    %102 = arith.select %96, %100, %101 : vector<8x8xi1>, vector<8x8xf32>
    %cst_33 = arith.constant dense<0.000000e+00> : vector<8xf32>
    %103 = vector.multi_reduction <add>, %102, %cst_33 [1] : vector<8x8xf32> to vector<8xf32>
    %104 = vector.shape_cast %103 : vector<8xf32> to vector<8x1xf32>
    %105 = vector.extract_strided_slice %2 {offsets = [0, 24], sizes = [8, 8], strides = [1, 1]} : vector<8x32xbf16> to vector<8x8xbf16>
    %106 = vector.extract_strided_slice %3 {offsets = [0, 24], sizes = [8, 8], strides = [1, 1]} : vector<8x32xbf16> to vector<8x8xbf16>
    %107 = vector.extract_strided_slice %4 {offsets = [0, 24], sizes = [8, 8], strides = [1, 1]} : vector<8x32xbf16> to vector<8x8xbf16>
    %108 = tpu.transpose %106, [1, 0] : vector<8x8xbf16> -> vector<8x8xbf16>
    %cst_34 = arith.constant dense<0.000000e+00> : vector<8x8xf32>
    %109 = tpu.matmul %105, %108, %cst_34 {dimension_numbers = #tpu.dot_dimension_numbers<[1], [0], [0], [1], [0, 0, 1, 1], [], []>} : vector<8x8xbf16>, vector<8x8xbf16>, vector<8x8xf32> -> vector<8x8xf32>
    %cst_35 = arith.constant 0.353553385 : f32
    %110 = vector.broadcast %cst_35 : f32 to vector<8x8xf32>
    %111 = arith.mulf %109, %110 : vector<8x8xf32>
    %112 = vector.broadcast %11 : vector<1x8xf32> to vector<8x8xf32>
    %113 = arith.addf %111, %112 : vector<8x8xf32>
    %cst_36 = arith.constant dense<0xFF800000> : vector<8xf32>
    %114 = vector.multi_reduction <maximumf>, %113, %cst_36 [1] : vector<8x8xf32> to vector<8xf32>
    %115 = vector.shape_cast %114 : vector<8xf32> to vector<8x1xf32>
    %116 = vector.broadcast %115 : vector<8x1xf32> to vector<8x8xf32>
    %117 = arith.subf %113, %116 : vector<8x8xf32>
    %118 = math.exp %117 : vector<8x8xf32>
    %cst_37 = arith.constant dense<0.000000e+00> : vector<8xf32>
    %119 = vector.multi_reduction <add>, %118, %cst_37 [1] : vector<8x8xf32> to vector<8xf32>
    %120 = vector.shape_cast %119 : vector<8xf32> to vector<8x1xf32>
    %121 = tpu.reciprocal %120 {approx = true} : vector<8x1xf32> -> vector<8x1xf32>
    %122 = vector.broadcast %121 : vector<8x1xf32> to vector<8x8xf32>
    %123 = arith.mulf %118, %122 : vector<8x8xf32>
    %124 = arith.truncf %123 : vector<8x8xf32> to vector<8x8xbf16>
    %cst_38 = arith.constant dense<0.000000e+00> : vector<8x8xf32>
    %125 = tpu.matmul %124, %107, %cst_38 {dimension_numbers = #tpu.dot_dimension_numbers<[1], [0], [0], [1], [0, 0, 1, 1], [], []>} : vector<8x8xbf16>, vector<8x8xbf16>, vector<8x8xf32> -> vector<8x8xf32>
    %cst_39 = arith.constant 0.000000e+00 : f32
    %126 = vector.broadcast %cst_39 : f32 to vector<8x8xf32>
    %127 = arith.cmpf ogt, %123, %126 : vector<8x8xf32>
    %cst_40 = arith.constant 0.000000e+00 : f32
    %128 = vector.broadcast %cst_40 : f32 to vector<8x8xf32>
    %129 = arith.subf %128, %123 : vector<8x8xf32>
    %130 = math.log %123 : vector<8x8xf32>
    %131 = arith.mulf %129, %130 : vector<8x8xf32>
    %cst_41 = arith.constant 0.000000e+00 : f32
    %132 = vector.broadcast %cst_41 : f32 to vector<8x8xf32>
    %133 = arith.select %127, %131, %132 : vector<8x8xi1>, vector<8x8xf32>
    %cst_42 = arith.constant dense<0.000000e+00> : vector<8xf32>
    %134 = vector.multi_reduction <add>, %133, %cst_42 [1] : vector<8x8xf32> to vector<8xf32>
    %135 = vector.shape_cast %134 : vector<8xf32> to vector<8x1xf32>
    %136 = tpu.concatenate %32, %63, %94, %125 in 1 : vector<8x8xf32>, vector<8x8xf32>, vector<8x8xf32>, vector<8x8xf32> -> vector<8x32xf32>
    %137 = arith.truncf %136 : vector<8x32xf32> to vector<8x32xbf16>
    %c0_43 = arith.constant 0 : index
    %c0_44 = arith.constant 0 : index
    %c0_45 = arith.constant 0 : index
    %138 = vector.load %arg3[%c0_43, %c0_44, %c0_45] : memref<1x8x32xbf16, #tpu.memory_space<vmem>>, vector<1x8x32xbf16>
    %139 = vector.shape_cast %138 : vector<1x8x32xbf16> to vector<8x32xbf16>
    %140 = vector.shape_cast %137 : vector<8x32xbf16> to vector<1x8x32xbf16>
    tpu.vector_store %arg3[%c0_43, %c0_44, %c0_45], %140 {strides = array<i32>} : memref<1x8x32xbf16, #tpu.memory_space<vmem>>, vector<1x8x32xbf16>,
    %141 = vector.shape_cast %30 : vector<8x8xf32> to vector<1x8x8xf32>
    %142 = vector.shape_cast %61 : vector<8x8xf32> to vector<1x8x8xf32>
    %143 = vector.shape_cast %92 : vector<8x8xf32> to vector<1x8x8xf32>
    %144 = vector.shape_cast %123 : vector<8x8xf32> to vector<1x8x8xf32>
    %145 = tpu.concatenate %141, %142, %143, %144 in 0 : vector<1x8x8xf32>, vector<1x8x8xf32>, vector<1x8x8xf32>, vector<1x8x8xf32> -> vector<4x8x8xf32>
    %146 = arith.truncf %145 : vector<4x8x8xf32> to vector<4x8x8xbf16>
    %c0_46 = arith.constant 0 : index
    %c0_47 = arith.constant 0 : index
    %c0_48 = arith.constant 0 : index
    %c0_49 = arith.constant 0 : index
    %147 = vector.load %arg4[%c0_46, %c0_47, %c0_48, %c0_49] : memref<1x4x8x8xbf16, #tpu.memory_space<vmem>>, vector<1x4x8x8xbf16>
    %148 = vector.shape_cast %147 : vector<1x4x8x8xbf16> to vector<4x8x8xbf16>
    %149 = vector.shape_cast %146 : vector<4x8x8xbf16> to vector<1x4x8x8xbf16>
    tpu.vector_store %arg4[%c0_46, %c0_47, %c0_48, %c0_49], %149 {strides = array<i32>} : memref<1x4x8x8xbf16, #tpu.memory_space<vmem>>, vector<1x4x8x8xbf16>,
    %150 = vector.shape_cast %42 : vector<8x1xf32> to vector<1x8x1xf32>
    %151 = vector.shape_cast %73 : vector<8x1xf32> to vector<1x8x1xf32>
    %152 = vector.shape_cast %104 : vector<8x1xf32> to vector<1x8x1xf32>
    %153 = vector.shape_cast %135 : vector<8x1xf32> to vector<1x8x1xf32>
    %154 = tpu.concatenate %150, %151, %152, %153 in 0 : vector<1x8x1xf32>, vector<1x8x1xf32>, vector<1x8x1xf32>, vector<1x8x1xf32> -> vector<4x8x1xf32>
    %c0_50 = arith.constant 0 : index
    %c0_51 = arith.constant 0 : index
    %c0_52 = arith.constant 0 : index
    %c0_53 = arith.constant 0 : index
    %155 = vector.load %arg5[%c0_50, %c0_51, %c0_52, %c0_53] : memref<1x4x8x1xf32, #tpu.memory_space<vmem>>, vector<1x4x8x1xf32>
    %156 = vector.shape_cast %155 : vector<1x4x8x1xf32> to vector<4x8x1xf32>
    %157 = vector.shape_cast %154 : vector<4x8x1xf32> to vector<1x4x8x1xf32>
    tpu.vector_store %arg5[%c0_50, %c0_51, %c0_52, %c0_53], %157 {strides = array<i32>} : memref<1x4x8x1xf32, #tpu.memory_space<vmem>>, vector<1x4x8x1xf32>,
    return
  }
  func.func @transform_0(%arg0: i32) -> (i32, i32, i32) {
    %c0_i32 = arith.constant 0 : i32
    %c0_i32_0 = arith.constant 0 : i32
    %c0_i32_1 = arith.constant 0 : i32
    return %arg0, %c0_i32, %c0_i32_0 : i32, i32, i32
  }
  func.func @transform_1(%arg0: i32) -> (i32, i32, i32) {
    %c0_i32 = arith.constant 0 : i32
    %c0_i32_0 = arith.constant 0 : i32
    %c0_i32_1 = arith.constant 0 : i32
    return %arg0, %c0_i32, %c0_i32_0 : i32, i32, i32
  }
  func.func @transform_2(%arg0: i32) -> (i32, i32, i32) {
    %c0_i32 = arith.constant 0 : i32
    %c0_i32_0 = arith.constant 0 : i32
    %c0_i32_1 = arith.constant 0 : i32
    return %arg0, %c0_i32, %c0_i32_0 : i32, i32, i32
  }
  func.func @transform_3(%arg0: i32) -> (i32, i32, i32, i32) {
    %c0_i32 = arith.constant 0 : i32
    %c0_i32_0 = arith.constant 0 : i32
    %c0_i32_1 = arith.constant 0 : i32
    %c0_i32_2 = arith.constant 0 : i32
    return %arg0, %c0_i32, %c0_i32_0, %c0_i32_1 : i32, i32, i32, i32
  }
  func.func @transform_4(%arg0: i32) -> (i32, i32, i32, i32) {
    %c0_i32 = arith.constant 0 : i32
    %c0_i32_0 = arith.constant 0 : i32
    %c0_i32_1 = arith.constant 0 : i32
    %c0_i32_2 = arith.constant 0 : i32
    return %arg0, %c0_i32, %c0_i32_0, %c0_i32_1 : i32, i32, i32, i32
  }
}

module attributes {stable_mosaic.version = 11 : i64} {
  func.func @_mha_kernel(%arg0: i32, %arg1: memref<1x8x32xbf16, #tpu.memory_space<vmem>>, %arg2: memref<1x8x64xbf16, #tpu.memory_space<vmem>>, %arg3: memref<1x1x8xf32, #tpu.memory_space<vmem>>, %arg4: memref<1x8x32xbf16, #tpu.memory_space<vmem>>, %arg5: memref<1x4x8x8xbf16, #tpu.memory_space<vmem>>, %arg6: memref<1x4x8x1xf32, #tpu.memory_space<vmem>>) attributes {dimension_semantics = [#tpu.dimension_semantics<parallel>], iteration_bounds = array<i64: 2>, scalar_prefetch = 0 : i64, scratch_operands = 0 : i64, tpu.core_type = #tpu.core_type<tc>, window_params = [{transform_indices = @transform_0, window_bounds = array<i64: 1, 8, 32>}, {transform_indices = @transform_1, window_bounds = array<i64: 1, 8, 64>}, {transform_indices = @transform_2, window_bounds = array<i64: 1, 1, 8>}, {transform_indices = @transform_3, window_bounds = array<i64: 1, 8, 32>}, {transform_indices = @transform_4, window_bounds = array<i64: 1, 4, 8, 8>}, {transform_indices = @transform_5, window_bounds = array<i64: 1, 4, 8, 1>}]} {
    %c0 = arith.constant 0 : index
    %c0_0 = arith.constant 0 : index
    %c0_1 = arith.constant 0 : index
    %0 = vector.load %arg1[%c0, %c0_0, %c0_1] : memref<1x8x32xbf16, #tpu.memory_space<vmem>>, vector<1x8x32xbf16>
    %1 = vector.shape_cast %0 : vector<1x8x32xbf16> to vector<8x32xbf16>
    %c0_2 = arith.constant 0 : index
    %c0_3 = arith.constant 0 : index
    %c0_4 = arith.constant 0 : index
    %2 = vector.load %arg2[%c0_2, %c0_3, %c0_4] : memref<1x8x64xbf16, #tpu.memory_space<vmem>>, vector<1x8x64xbf16>
    %3 = vector.shape_cast %2 : vector<1x8x64xbf16> to vector<8x64xbf16>
    %4 = vector.extract_strided_slice %3 {offsets = [0, 0], sizes = [8, 32], strides = [1, 1]} : vector<8x64xbf16> to vector<8x32xbf16>
    %5 = vector.extract_strided_slice %3 {offsets = [0, 32], sizes = [8, 32], strides = [1, 1]} : vector<8x64xbf16> to vector<8x32xbf16>
    %c0_5 = arith.constant 0 : index
    %c0_6 = arith.constant 0 : index
    %c0_7 = arith.constant 0 : index
    %6 = vector.load %arg3[%c0_5, %c0_6, %c0_7] : memref<1x1x8xf32, #tpu.memory_space<vmem>>, vector<1x1x8xf32>
    %7 = vector.shape_cast %6 : vector<1x1x8xf32> to vector<1x8xf32>
    %cst = arith.constant 0.000000e+00 : f32
    %8 = vector.broadcast %cst : f32 to vector<1x8xf32>
    %9 = arith.cmpf ogt, %7, %8 : vector<1x8xf32>
    %cst_8 = arith.constant 0.000000e+00 : f32
    %cst_9 = arith.constant -1.000000e+09 : f32
    %10 = vector.broadcast %cst_8 : f32 to vector<1x8xf32>
    %11 = vector.broadcast %cst_9 : f32 to vector<1x8xf32>
    %12 = arith.select %9, %10, %11 : vector<1x8xi1>, vector<1x8xf32>
    %13 = vector.extract_strided_slice %1 {offsets = [0, 0], sizes = [8, 8], strides = [1, 1]} : vector<8x32xbf16> to vector<8x8xbf16>
    %14 = vector.extract_strided_slice %4 {offsets = [0, 0], sizes = [8, 8], strides = [1, 1]} : vector<8x32xbf16> to vector<8x8xbf16>
    %15 = vector.extract_strided_slice %5 {offsets = [0, 0], sizes = [8, 8], strides = [1, 1]} : vector<8x32xbf16> to vector<8x8xbf16>
    %16 = tpu.transpose %14, [1, 0] : vector<8x8xbf16> -> vector<8x8xbf16>
    %cst_10 = arith.constant dense<0.000000e+00> : vector<8x8xf32>
    %17 = tpu.matmul %13, %16, %cst_10 {dimension_numbers = #tpu.dot_dimension_numbers<[1], [0], [0], [1], [0, 0, 1, 1], [], []>} : vector<8x8xbf16>, vector<8x8xbf16>, vector<8x8xf32> -> vector<8x8xf32>
    %cst_11 = arith.constant 0.353553385 : f32
    %18 = vector.broadcast %cst_11 : f32 to vector<8x8xf32>
    %19 = arith.mulf %17, %18 : vector<8x8xf32>
    %20 = vector.broadcast %12 : vector<1x8xf32> to vector<8x8xf32>
    %21 = arith.addf %19, %20 : vector<8x8xf32>
    %cst_12 = arith.constant dense<0xFF800000> : vector<8xf32>
    %22 = vector.multi_reduction <maximumf>, %21, %cst_12 [1] : vector<8x8xf32> to vector<8xf32>
    %23 = vector.shape_cast %22 : vector<8xf32> to vector<8x1xf32>
    %24 = vector.broadcast %23 : vector<8x1xf32> to vector<8x8xf32>
    %25 = arith.subf %21, %24 : vector<8x8xf32>
    %26 = math.exp %25 : vector<8x8xf32>
    %cst_13 = arith.constant dense<0.000000e+00> : vector<8xf32>
    %27 = vector.multi_reduction <add>, %26, %cst_13 [1] : vector<8x8xf32> to vector<8xf32>
    %28 = vector.shape_cast %27 : vector<8xf32> to vector<8x1xf32>
    %29 = tpu.reciprocal %28 {approx = true} : vector<8x1xf32> -> vector<8x1xf32>
    %30 = vector.broadcast %29 : vector<8x1xf32> to vector<8x8xf32>
    %31 = arith.mulf %26, %30 : vector<8x8xf32>
    %32 = arith.truncf %31 : vector<8x8xf32> to vector<8x8xbf16>
    %cst_14 = arith.constant dense<0.000000e+00> : vector<8x8xf32>
    %33 = tpu.matmul %32, %15, %cst_14 {dimension_numbers = #tpu.dot_dimension_numbers<[1], [0], [0], [1], [0, 0, 1, 1], [], []>} : vector<8x8xbf16>, vector<8x8xbf16>, vector<8x8xf32> -> vector<8x8xf32>
    %cst_15 = arith.constant 0.000000e+00 : f32
    %34 = vector.broadcast %cst_15 : f32 to vector<8x8xf32>
    %35 = arith.cmpf ogt, %31, %34 : vector<8x8xf32>
    %cst_16 = arith.constant 0.000000e+00 : f32
    %36 = vector.broadcast %cst_16 : f32 to vector<8x8xf32>
    %37 = arith.subf %36, %31 : vector<8x8xf32>
    %38 = math.log %31 : vector<8x8xf32>
    %39 = arith.mulf %37, %38 : vector<8x8xf32>
    %cst_17 = arith.constant 0.000000e+00 : f32
    %40 = vector.broadcast %cst_17 : f32 to vector<8x8xf32>
    %41 = arith.select %35, %39, %40 : vector<8x8xi1>, vector<8x8xf32>
    %cst_18 = arith.constant dense<0.000000e+00> : vector<8xf32>
    %42 = vector.multi_reduction <add>, %41, %cst_18 [1] : vector<8x8xf32> to vector<8xf32>
    %43 = vector.shape_cast %42 : vector<8xf32> to vector<8x1xf32>
    %44 = vector.extract_strided_slice %1 {offsets = [0, 8], sizes = [8, 8], strides = [1, 1]} : vector<8x32xbf16> to vector<8x8xbf16>
    %45 = vector.extract_strided_slice %4 {offsets = [0, 8], sizes = [8, 8], strides = [1, 1]} : vector<8x32xbf16> to vector<8x8xbf16>
    %46 = vector.extract_strided_slice %5 {offsets = [0, 8], sizes = [8, 8], strides = [1, 1]} : vector<8x32xbf16> to vector<8x8xbf16>
    %47 = tpu.transpose %45, [1, 0] : vector<8x8xbf16> -> vector<8x8xbf16>
    %cst_19 = arith.constant dense<0.000000e+00> : vector<8x8xf32>
    %48 = tpu.matmul %44, %47, %cst_19 {dimension_numbers = #tpu.dot_dimension_numbers<[1], [0], [0], [1], [0, 0, 1, 1], [], []>} : vector<8x8xbf16>, vector<8x8xbf16>, vector<8x8xf32> -> vector<8x8xf32>
    %cst_20 = arith.constant 0.353553385 : f32
    %49 = vector.broadcast %cst_20 : f32 to vector<8x8xf32>
    %50 = arith.mulf %48, %49 : vector<8x8xf32>
    %51 = vector.broadcast %12 : vector<1x8xf32> to vector<8x8xf32>
    %52 = arith.addf %50, %51 : vector<8x8xf32>
    %cst_21 = arith.constant dense<0xFF800000> : vector<8xf32>
    %53 = vector.multi_reduction <maximumf>, %52, %cst_21 [1] : vector<8x8xf32> to vector<8xf32>
    %54 = vector.shape_cast %53 : vector<8xf32> to vector<8x1xf32>
    %55 = vector.broadcast %54 : vector<8x1xf32> to vector<8x8xf32>
    %56 = arith.subf %52, %55 : vector<8x8xf32>
    %57 = math.exp %56 : vector<8x8xf32>
    %cst_22 = arith.constant dense<0.000000e+00> : vector<8xf32>
    %58 = vector.multi_reduction <add>, %57, %cst_22 [1] : vector<8x8xf32> to vector<8xf32>
    %59 = vector.shape_cast %58 : vector<8xf32> to vector<8x1xf32>
    %60 = tpu.reciprocal %59 {approx = true} : vector<8x1xf32> -> vector<8x1xf32>
    %61 = vector.broadcast %60 : vector<8x1xf32> to vector<8x8xf32>
    %62 = arith.mulf %57, %61 : vector<8x8xf32>
    %63 = arith.truncf %62 : vector<8x8xf32> to vector<8x8xbf16>
    %cst_23 = arith.constant dense<0.000000e+00> : vector<8x8xf32>
    %64 = tpu.matmul %63, %46, %cst_23 {dimension_numbers = #tpu.dot_dimension_numbers<[1], [0], [0], [1], [0, 0, 1, 1], [], []>} : vector<8x8xbf16>, vector<8x8xbf16>, vector<8x8xf32> -> vector<8x8xf32>
    %cst_24 = arith.constant 0.000000e+00 : f32
    %65 = vector.broadcast %cst_24 : f32 to vector<8x8xf32>
    %66 = arith.cmpf ogt, %62, %65 : vector<8x8xf32>
    %cst_25 = arith.constant 0.000000e+00 : f32
    %67 = vector.broadcast %cst_25 : f32 to vector<8x8xf32>
    %68 = arith.subf %67, %62 : vector<8x8xf32>
    %69 = math.log %62 : vector<8x8xf32>
    %70 = arith.mulf %68, %69 : vector<8x8xf32>
    %cst_26 = arith.constant 0.000000e+00 : f32
    %71 = vector.broadcast %cst_26 : f32 to vector<8x8xf32>
    %72 = arith.select %66, %70, %71 : vector<8x8xi1>, vector<8x8xf32>
    %cst_27 = arith.constant dense<0.000000e+00> : vector<8xf32>
    %73 = vector.multi_reduction <add>, %72, %cst_27 [1] : vector<8x8xf32> to vector<8xf32>
    %74 = vector.shape_cast %73 : vector<8xf32> to vector<8x1xf32>
    %75 = vector.extract_strided_slice %1 {offsets = [0, 16], sizes = [8, 8], strides = [1, 1]} : vector<8x32xbf16> to vector<8x8xbf16>
    %76 = vector.extract_strided_slice %4 {offsets = [0, 16], sizes = [8, 8], strides = [1, 1]} : vector<8x32xbf16> to vector<8x8xbf16>
    %77 = vector.extract_strided_slice %5 {offsets = [0, 16], sizes = [8, 8], strides = [1, 1]} : vector<8x32xbf16> to vector<8x8xbf16>
    %78 = tpu.transpose %76, [1, 0] : vector<8x8xbf16> -> vector<8x8xbf16>
    %cst_28 = arith.constant dense<0.000000e+00> : vector<8x8xf32>
    %79 = tpu.matmul %75, %78, %cst_28 {dimension_numbers = #tpu.dot_dimension_numbers<[1], [0], [0], [1], [0, 0, 1, 1], [], []>} : vector<8x8xbf16>, vector<8x8xbf16>, vector<8x8xf32> -> vector<8x8xf32>
    %cst_29 = arith.constant 0.353553385 : f32
    %80 = vector.broadcast %cst_29 : f32 to vector<8x8xf32>
    %81 = arith.mulf %79, %80 : vector<8x8xf32>
    %82 = vector.broadcast %12 : vector<1x8xf32> to vector<8x8xf32>
    %83 = arith.addf %81, %82 : vector<8x8xf32>
    %cst_30 = arith.constant dense<0xFF800000> : vector<8xf32>
    %84 = vector.multi_reduction <maximumf>, %83, %cst_30 [1] : vector<8x8xf32> to vector<8xf32>
    %85 = vector.shape_cast %84 : vector<8xf32> to vector<8x1xf32>
    %86 = vector.broadcast %85 : vector<8x1xf32> to vector<8x8xf32>
    %87 = arith.subf %83, %86 : vector<8x8xf32>
    %88 = math.exp %87 : vector<8x8xf32>
    %cst_31 = arith.constant dense<0.000000e+00> : vector<8xf32>
    %89 = vector.multi_reduction <add>, %88, %cst_31 [1] : vector<8x8xf32> to vector<8xf32>
    %90 = vector.shape_cast %89 : vector<8xf32> to vector<8x1xf32>
    %91 = tpu.reciprocal %90 {approx = true} : vector<8x1xf32> -> vector<8x1xf32>
    %92 = vector.broadcast %91 : vector<8x1xf32> to vector<8x8xf32>
    %93 = arith.mulf %88, %92 : vector<8x8xf32>
    %94 = arith.truncf %93 : vector<8x8xf32> to vector<8x8xbf16>
    %cst_32 = arith.constant dense<0.000000e+00> : vector<8x8xf32>
    %95 = tpu.matmul %94, %77, %cst_32 {dimension_numbers = #tpu.dot_dimension_numbers<[1], [0], [0], [1], [0, 0, 1, 1], [], []>} : vector<8x8xbf16>, vector<8x8xbf16>, vector<8x8xf32> -> vector<8x8xf32>
    %cst_33 = arith.constant 0.000000e+00 : f32
    %96 = vector.broadcast %cst_33 : f32 to vector<8x8xf32>
    %97 = arith.cmpf ogt, %93, %96 : vector<8x8xf32>
    %cst_34 = arith.constant 0.000000e+00 : f32
    %98 = vector.broadcast %cst_34 : f32 to vector<8x8xf32>
    %99 = arith.subf %98, %93 : vector<8x8xf32>
    %100 = math.log %93 : vector<8x8xf32>
    %101 = arith.mulf %99, %100 : vector<8x8xf32>
    %cst_35 = arith.constant 0.000000e+00 : f32
    %102 = vector.broadcast %cst_35 : f32 to vector<8x8xf32>
    %103 = arith.select %97, %101, %102 : vector<8x8xi1>, vector<8x8xf32>
    %cst_36 = arith.constant dense<0.000000e+00> : vector<8xf32>
    %104 = vector.multi_reduction <add>, %103, %cst_36 [1] : vector<8x8xf32> to vector<8xf32>
    %105 = vector.shape_cast %104 : vector<8xf32> to vector<8x1xf32>
    %106 = vector.extract_strided_slice %1 {offsets = [0, 24], sizes = [8, 8], strides = [1, 1]} : vector<8x32xbf16> to vector<8x8xbf16>
    %107 = vector.extract_strided_slice %4 {offsets = [0, 24], sizes = [8, 8], strides = [1, 1]} : vector<8x32xbf16> to vector<8x8xbf16>
    %108 = vector.extract_strided_slice %5 {offsets = [0, 24], sizes = [8, 8], strides = [1, 1]} : vector<8x32xbf16> to vector<8x8xbf16>
    %109 = tpu.transpose %107, [1, 0] : vector<8x8xbf16> -> vector<8x8xbf16>
    %cst_37 = arith.constant dense<0.000000e+00> : vector<8x8xf32>
    %110 = tpu.matmul %106, %109, %cst_37 {dimension_numbers = #tpu.dot_dimension_numbers<[1], [0], [0], [1], [0, 0, 1, 1], [], []>} : vector<8x8xbf16>, vector<8x8xbf16>, vector<8x8xf32> -> vector<8x8xf32>
    %cst_38 = arith.constant 0.353553385 : f32
    %111 = vector.broadcast %cst_38 : f32 to vector<8x8xf32>
    %112 = arith.mulf %110, %111 : vector<8x8xf32>
    %113 = vector.broadcast %12 : vector<1x8xf32> to vector<8x8xf32>
    %114 = arith.addf %112, %113 : vector<8x8xf32>
    %cst_39 = arith.constant dense<0xFF800000> : vector<8xf32>
    %115 = vector.multi_reduction <maximumf>, %114, %cst_39 [1] : vector<8x8xf32> to vector<8xf32>
    %116 = vector.shape_cast %115 : vector<8xf32> to vector<8x1xf32>
    %117 = vector.broadcast %116 : vector<8x1xf32> to vector<8x8xf32>
    %118 = arith.subf %114, %117 : vector<8x8xf32>
    %119 = math.exp %118 : vector<8x8xf32>
    %cst_40 = arith.constant dense<0.000000e+00> : vector<8xf32>
    %120 = vector.multi_reduction <add>, %119, %cst_40 [1] : vector<8x8xf32> to vector<8xf32>
    %121 = vector.shape_cast %120 : vector<8xf32> to vector<8x1xf32>
    %122 = tpu.reciprocal %121 {approx = true} : vector<8x1xf32> -> vector<8x1xf32>
    %123 = vector.broadcast %122 : vector<8x1xf32> to vector<8x8xf32>
    %124 = arith.mulf %119, %123 : vector<8x8xf32>
    %125 = arith.truncf %124 : vector<8x8xf32> to vector<8x8xbf16>
    %cst_41 = arith.constant dense<0.000000e+00> : vector<8x8xf32>
    %126 = tpu.matmul %125, %108, %cst_41 {dimension_numbers = #tpu.dot_dimension_numbers<[1], [0], [0], [1], [0, 0, 1, 1], [], []>} : vector<8x8xbf16>, vector<8x8xbf16>, vector<8x8xf32> -> vector<8x8xf32>
    %cst_42 = arith.constant 0.000000e+00 : f32
    %127 = vector.broadcast %cst_42 : f32 to vector<8x8xf32>
    %128 = arith.cmpf ogt, %124, %127 : vector<8x8xf32>
    %cst_43 = arith.constant 0.000000e+00 : f32
    %129 = vector.broadcast %cst_43 : f32 to vector<8x8xf32>
    %130 = arith.subf %129, %124 : vector<8x8xf32>
    %131 = math.log %124 : vector<8x8xf32>
    %132 = arith.mulf %130, %131 : vector<8x8xf32>
    %cst_44 = arith.constant 0.000000e+00 : f32
    %133 = vector.broadcast %cst_44 : f32 to vector<8x8xf32>
    %134 = arith.select %128, %132, %133 : vector<8x8xi1>, vector<8x8xf32>
    %cst_45 = arith.constant dense<0.000000e+00> : vector<8xf32>
    %135 = vector.multi_reduction <add>, %134, %cst_45 [1] : vector<8x8xf32> to vector<8xf32>
    %136 = vector.shape_cast %135 : vector<8xf32> to vector<8x1xf32>
    %137 = tpu.concatenate %33, %64, %95, %126 in 1 : vector<8x8xf32>, vector<8x8xf32>, vector<8x8xf32>, vector<8x8xf32> -> vector<8x32xf32>
    %138 = arith.truncf %137 : vector<8x32xf32> to vector<8x32xbf16>
    %c0_46 = arith.constant 0 : index
    %c0_47 = arith.constant 0 : index
    %c0_48 = arith.constant 0 : index
    %139 = vector.load %arg4[%c0_46, %c0_47, %c0_48] : memref<1x8x32xbf16, #tpu.memory_space<vmem>>, vector<1x8x32xbf16>
    %140 = vector.shape_cast %139 : vector<1x8x32xbf16> to vector<8x32xbf16>
    %141 = vector.shape_cast %138 : vector<8x32xbf16> to vector<1x8x32xbf16>
    tpu.vector_store %arg4[%c0_46, %c0_47, %c0_48], %141 {strides = array<i32>} : memref<1x8x32xbf16, #tpu.memory_space<vmem>>, vector<1x8x32xbf16>,
    %142 = vector.shape_cast %31 : vector<8x8xf32> to vector<1x8x8xf32>
    %143 = vector.shape_cast %62 : vector<8x8xf32> to vector<1x8x8xf32>
    %144 = vector.shape_cast %93 : vector<8x8xf32> to vector<1x8x8xf32>
    %145 = vector.shape_cast %124 : vector<8x8xf32> to vector<1x8x8xf32>
    %146 = tpu.concatenate %142, %143, %144, %145 in 0 : vector<1x8x8xf32>, vector<1x8x8xf32>, vector<1x8x8xf32>, vector<1x8x8xf32> -> vector<4x8x8xf32>
    %147 = arith.truncf %146 : vector<4x8x8xf32> to vector<4x8x8xbf16>
    %c0_49 = arith.constant 0 : index
    %c0_50 = arith.constant 0 : index
    %c0_51 = arith.constant 0 : index
    %c0_52 = arith.constant 0 : index
    %148 = vector.load %arg5[%c0_49, %c0_50, %c0_51, %c0_52] : memref<1x4x8x8xbf16, #tpu.memory_space<vmem>>, vector<1x4x8x8xbf16>
    %149 = vector.shape_cast %148 : vector<1x4x8x8xbf16> to vector<4x8x8xbf16>
    %150 = vector.shape_cast %147 : vector<4x8x8xbf16> to vector<1x4x8x8xbf16>
    tpu.vector_store %arg5[%c0_49, %c0_50, %c0_51, %c0_52], %150 {strides = array<i32>} : memref<1x4x8x8xbf16, #tpu.memory_space<vmem>>, vector<1x4x8x8xbf16>,
    %151 = vector.shape_cast %43 : vector<8x1xf32> to vector<1x8x1xf32>
    %152 = vector.shape_cast %74 : vector<8x1xf32> to vector<1x8x1xf32>
    %153 = vector.shape_cast %105 : vector<8x1xf32> to vector<1x8x1xf32>
    %154 = vector.shape_cast %136 : vector<8x1xf32> to vector<1x8x1xf32>
    %155 = tpu.concatenate %151, %152, %153, %154 in 0 : vector<1x8x1xf32>, vector<1x8x1xf32>, vector<1x8x1xf32>, vector<1x8x1xf32> -> vector<4x8x1xf32>
    %c0_53 = arith.constant 0 : index
    %c0_54 = arith.constant 0 : index
    %c0_55 = arith.constant 0 : index
    %c0_56 = arith.constant 0 : index
    %156 = vector.load %arg6[%c0_53, %c0_54, %c0_55, %c0_56] : memref<1x4x8x1xf32, #tpu.memory_space<vmem>>, vector<1x4x8x1xf32>
    %157 = vector.shape_cast %156 : vector<1x4x8x1xf32> to vector<4x8x1xf32>
    %158 = vector.shape_cast %155 : vector<4x8x1xf32> to vector<1x4x8x1xf32>
    tpu.vector_store %arg6[%c0_53, %c0_54, %c0_55, %c0_56], %158 {strides = array<i32>} : memref<1x4x8x1xf32, #tpu.memory_space<vmem>>, vector<1x4x8x1xf32>,
    return
  }
  func.func @transform_0(%arg0: i32) -> (i32, i32, i32) {
    %c0_i32 = arith.constant 0 : i32
    %c0_i32_0 = arith.constant 0 : i32
    %c0_i32_1 = arith.constant 0 : i32
    return %arg0, %c0_i32, %c0_i32_0 : i32, i32, i32
  }
  func.func @transform_1(%arg0: i32) -> (i32, i32, i32) {
    %c0_i32 = arith.constant 0 : i32
    %c0_i32_0 = arith.constant 0 : i32
    %c0_i32_1 = arith.constant 0 : i32
    return %arg0, %c0_i32, %c0_i32_0 : i32, i32, i32
  }
  func.func @transform_2(%arg0: i32) -> (i32, i32, i32) {
    %c0_i32 = arith.constant 0 : i32
    %c0_i32_0 = arith.constant 0 : i32
    %c0_i32_1 = arith.constant 0 : i32
    return %arg0, %c0_i32, %c0_i32_0 : i32, i32, i32
  }
  func.func @transform_3(%arg0: i32) -> (i32, i32, i32) {
    %c0_i32 = arith.constant 0 : i32
    %c0_i32_0 = arith.constant 0 : i32
    %c0_i32_1 = arith.constant 0 : i32
    return %arg0, %c0_i32, %c0_i32_0 : i32, i32, i32
  }
  func.func @transform_4(%arg0: i32) -> (i32, i32, i32, i32) {
    %c0_i32 = arith.constant 0 : i32
    %c0_i32_0 = arith.constant 0 : i32
    %c0_i32_1 = arith.constant 0 : i32
    %c0_i32_2 = arith.constant 0 : i32
    return %arg0, %c0_i32, %c0_i32_0, %c0_i32_1 : i32, i32, i32, i32
  }
  func.func @transform_5(%arg0: i32) -> (i32, i32, i32, i32) {
    %c0_i32 = arith.constant 0 : i32
    %c0_i32_0 = arith.constant 0 : i32
    %c0_i32_1 = arith.constant 0 : i32
    %c0_i32_2 = arith.constant 0 : i32
    return %arg0, %c0_i32, %c0_i32_0, %c0_i32_1 : i32, i32, i32, i32
  }
}

module attributes {stable_mosaic.version = 11 : i64} {
  func.func @_matmul_kernel(%arg0: i32, %arg1: i32, %arg2: i32, %arg3: memref<16x32xbf16, #tpu.memory_space<vmem>>, %arg4: memref<32x32xbf16, #tpu.memory_space<vmem>>, %arg5: memref<1x32xf32, #tpu.memory_space<vmem>>, %arg6: memref<16x32xf32, #tpu.memory_space<vmem>>, %arg7: memref<16x32xf32, #tpu.memory_space<vmem>>) attributes {dimension_semantics = [#tpu.dimension_semantics<parallel>, #tpu.dimension_semantics<parallel>, #tpu.dimension_semantics<arbitrary>], iteration_bounds = array<i64: 1, 1, 1>, scalar_prefetch = 0 : i64, scratch_operands = 1 : i64, tpu.core_type = #tpu.core_type<tc>, window_params = [{transform_indices = @transform_0, window_bounds = array<i64: 16, 32>}, {transform_indices = @transform_1, window_bounds = array<i64: 32, 32>}, {transform_indices = @transform_2, window_bounds = array<i64: 1, 32>}, {transform_indices = @transform_3, window_bounds = array<i64: 16, 32>}]} {
    %c0_i32 = arith.constant 0 : i32
    %0 = arith.cmpi eq, %arg2, %c0_i32 : i32
    %1 = arith.extui %0 : i1 to i32
    %c0_i32_0 = arith.constant 0 : i32
    %2 = arith.cmpi ne, %1, %c0_i32_0 : i32
    scf.if %2 {
      %cst_10 = arith.constant 0.000000e+00 : f32
      %12 = vector.broadcast %cst_10 : f32 to vector<16x32xf32>
      %c0_11 = arith.constant 0 : index
      %c0_12 = arith.constant 0 : index
      %13 = vector.load %arg7[%c0_11, %c0_12] : memref<16x32xf32, #tpu.memory_space<vmem>>, vector<16x32xf32>
      tpu.vector_store %arg7[%c0_11, %c0_12], %12 {strides = array<i32>} : memref<16x32xf32, #tpu.memory_space<vmem>>, vector<16x32xf32>,
    } else {
    }
    %c0 = arith.constant 0 : index
    %c0_1 = arith.constant 0 : index
    %3 = vector.load %arg7[%c0, %c0_1] : memref<16x32xf32, #tpu.memory_space<vmem>>, vector<16x32xf32>
    %c0_2 = arith.constant 0 : index
    %c0_3 = arith.constant 0 : index
    %4 = vector.load %arg3[%c0_2, %c0_3] : memref<16x32xbf16, #tpu.memory_space<vmem>>, vector<16x32xbf16>
    %c0_4 = arith.constant 0 : index
    %c0_5 = arith.constant 0 : index
    %5 = vector.load %arg4[%c0_4, %c0_5] : memref<32x32xbf16, #tpu.memory_space<vmem>>, vector<32x32xbf16>
    %cst = arith.constant dense<0.000000e+00> : vector<16x32xf32>
    %6 = tpu.matmul %4, %5, %cst {dimension_numbers = #tpu.dot_dimension_numbers<[1], [0], [0], [1], [0, 0, 1, 1], [], []>} : vector<16x32xbf16>, vector<32x32xbf16>, vector<16x32xf32> -> vector<16x32xf32>
    %7 = arith.addf %3, %6 : vector<16x32xf32>
    %c0_6 = arith.constant 0 : index
    %c0_7 = arith.constant 0 : index
    %8 = vector.load %arg7[%c0_6, %c0_7] : memref<16x32xf32, #tpu.memory_space<vmem>>, vector<16x32xf32>
    tpu.vector_store %arg7[%c0_6, %c0_7], %7 {strides = array<i32>} : memref<16x32xf32, #tpu.memory_space<vmem>>, vector<16x32xf32>,
    %c0_i32_8 = arith.constant 0 : i32
    %9 = arith.cmpi eq, %arg2, %c0_i32_8 : i32
    %10 = arith.extui %9 : i1 to i32
    %c0_i32_9 = arith.constant 0 : i32
    %11 = arith.cmpi ne, %10, %c0_i32_9 : i32
    scf.if %11 {
      %c0_10 = arith.constant 0 : index
      %c0_11 = arith.constant 0 : index
      %12 = vector.load %arg7[%c0_10, %c0_11] : memref<16x32xf32, #tpu.memory_space<vmem>>, vector<16x32xf32>
      %c0_12 = arith.constant 0 : index
      %c0_13 = arith.constant 0 : index
      %13 = vector.load %arg5[%c0_12, %c0_13] : memref<1x32xf32, #tpu.memory_space<vmem>>, vector<1x32xf32>
      %14 = vector.broadcast %13 : vector<1x32xf32> to vector<16x32xf32>
      %15 = arith.addf %12, %14 : vector<16x32xf32>
      %c0_14 = arith.constant 0 : index
      %c0_15 = arith.constant 0 : index
      %16 = vector.load %arg6[%c0_14, %c0_15] : memref<16x32xf32, #tpu.memory_space<vmem>>, vector<16x32xf32>
      tpu.vector_store %arg6[%c0_14, %c0_15], %15 {strides = array<i32>} : memref<16x32xf32, #tpu.memory_space<vmem>>, vector<16x32xf32>,
    } else {
    }
    return
  }
  func.func @transform_0(%arg0: i32, %arg1: i32, %arg2: i32) -> (i32, i32) {
    %c0_i32 = arith.constant 0 : i32
    return %arg0, %arg2 : i32, i32
  }
  func.func @transform_1(%arg0: i32, %arg1: i32, %arg2: i32) -> (i32, i32) {
    %c0_i32 = arith.constant 0 : i32
    return %arg2, %arg1 : i32, i32
  }
  func.func @transform_2(%arg0: i32, %arg1: i32, %arg2: i32) -> (i32, i32) {
    %c0_i32 = arith.constant 0 : i32
    %c0_i32_0 = arith.constant 0 : i32
    return %c0_i32, %arg1 : i32, i32
  }
  func.func @transform_3(%arg0: i32, %arg1: i32, %arg2: i32) -> (i32, i32) {
    %c0_i32 = arith.constant 0 : i32
    return %arg0, %arg1 : i32, i32
  }
}

module attributes {stable_mosaic.version = 11 : i64} {
  func.func @_xent_kernel(%arg0: i32, %arg1: i32, %arg2: memref<16x32xf32, #tpu.memory_space<vmem>>, %arg3: memref<16x1xi32, #tpu.memory_space<vmem>>, %arg4: memref<16x1xf32, #tpu.memory_space<vmem>>, %arg5: memref<16x1xf32, #tpu.memory_space<vmem>>, %arg6: memref<16x1xf32, #tpu.memory_space<vmem>>, %arg7: memref<16x1xf32, #tpu.memory_space<vmem>>, %arg8: memref<16x1xf32, #tpu.memory_space<vmem>>) attributes {dimension_semantics = [#tpu.dimension_semantics<parallel>, #tpu.dimension_semantics<arbitrary>], iteration_bounds = array<i64: 1, 1>, scalar_prefetch = 0 : i64, scratch_operands = 3 : i64, tpu.core_type = #tpu.core_type<tc>, window_params = [{transform_indices = @transform_0, window_bounds = array<i64: 16, 32>}, {transform_indices = @transform_1, window_bounds = array<i64: 16, 1>}, {transform_indices = @transform_2, window_bounds = array<i64: 16, 1>}, {transform_indices = @transform_3, window_bounds = array<i64: 16, 1>}]} {
    %c0_i32 = arith.constant 0 : i32
    %0 = arith.cmpi eq, %arg1, %c0_i32 : i32
    %1 = arith.extui %0 : i1 to i32
    %c0_i32_0 = arith.constant 0 : i32
    %2 = arith.cmpi ne, %1, %c0_i32_0 : i32
    scf.if %2 {
      %cst_23 = arith.constant 0xFF800000 : f32
      %38 = vector.broadcast %cst_23 : f32 to vector<16x1xf32>
      %c0_24 = arith.constant 0 : index
      %c0_25 = arith.constant 0 : index
      %39 = vector.load %arg6[%c0_24, %c0_25] : memref<16x1xf32, #tpu.memory_space<vmem>>, vector<16x1xf32>
      tpu.vector_store %arg6[%c0_24, %c0_25], %38 {strides = array<i32>} : memref<16x1xf32, #tpu.memory_space<vmem>>, vector<16x1xf32>,
      %cst_26 = arith.constant 0.000000e+00 : f32
      %40 = vector.broadcast %cst_26 : f32 to vector<16x1xf32>
      %c0_27 = arith.constant 0 : index
      %c0_28 = arith.constant 0 : index
      %41 = vector.load %arg7[%c0_27, %c0_28] : memref<16x1xf32, #tpu.memory_space<vmem>>, vector<16x1xf32>
      tpu.vector_store %arg7[%c0_27, %c0_28], %40 {strides = array<i32>} : memref<16x1xf32, #tpu.memory_space<vmem>>, vector<16x1xf32>,
      %cst_29 = arith.constant 0.000000e+00 : f32
      %42 = vector.broadcast %cst_29 : f32 to vector<16x1xf32>
      %c0_30 = arith.constant 0 : index
      %c0_31 = arith.constant 0 : index
      %43 = vector.load %arg8[%c0_30, %c0_31] : memref<16x1xf32, #tpu.memory_space<vmem>>, vector<16x1xf32>
      tpu.vector_store %arg8[%c0_30, %c0_31], %42 {strides = array<i32>} : memref<16x1xf32, #tpu.memory_space<vmem>>, vector<16x1xf32>,
    } else {
    }
    %c0 = arith.constant 0 : index
    %c0_1 = arith.constant 0 : index
    %3 = vector.load %arg2[%c0, %c0_1] : memref<16x32xf32, #tpu.memory_space<vmem>>, vector<16x32xf32>
    %cst = arith.constant dense<0xFF800000> : vector<16xf32>
    %4 = vector.multi_reduction <maximumf>, %3, %cst [1] : vector<16x32xf32> to vector<16xf32>
    %5 = vector.shape_cast %4 : vector<16xf32> to vector<16x1xf32>
    %c0_2 = arith.constant 0 : index
    %c0_3 = arith.constant 0 : index
    %6 = vector.load %arg6[%c0_2, %c0_3] : memref<16x1xf32, #tpu.memory_space<vmem>>, vector<16x1xf32>
    %7 = arith.maximumf %6, %5 : vector<16x1xf32>
    %c0_4 = arith.constant 0 : index
    %c0_5 = arith.constant 0 : index
    %8 = vector.load %arg7[%c0_4, %c0_5] : memref<16x1xf32, #tpu.memory_space<vmem>>, vector<16x1xf32>
    %c0_6 = arith.constant 0 : index
    %c0_7 = arith.constant 0 : index
    %9 = vector.load %arg6[%c0_6, %c0_7] : memref<16x1xf32, #tpu.memory_space<vmem>>, vector<16x1xf32>
    %10 = arith.subf %9, %7 : vector<16x1xf32>
    %11 = math.exp %10 : vector<16x1xf32>
    %12 = arith.mulf %8, %11 : vector<16x1xf32>
    %13 = vector.broadcast %7 : vector<16x1xf32> to vector<16x32xf32>
    %14 = arith.subf %3, %13 : vector<16x32xf32>
    %15 = math.exp %14 : vector<16x32xf32>
    %cst_8 = arith.constant dense<0.000000e+00> : vector<16xf32>
    %16 = vector.multi_reduction <add>, %15, %cst_8 [1] : vector<16x32xf32> to vector<16xf32>
    %17 = vector.shape_cast %16 : vector<16xf32> to vector<16x1xf32>
    %18 = arith.addf %12, %17 : vector<16x1xf32>
    %c0_9 = arith.constant 0 : index
    %c0_10 = arith.constant 0 : index
    %19 = vector.load %arg7[%c0_9, %c0_10] : memref<16x1xf32, #tpu.memory_space<vmem>>, vector<16x1xf32>
    tpu.vector_store %arg7[%c0_9, %c0_10], %18 {strides = array<i32>} : memref<16x1xf32, #tpu.memory_space<vmem>>, vector<16x1xf32>,
    %c0_11 = arith.constant 0 : index
    %c0_12 = arith.constant 0 : index
    %20 = vector.load %arg6[%c0_11, %c0_12] : memref<16x1xf32, #tpu.memory_space<vmem>>, vector<16x1xf32>
    tpu.vector_store %arg6[%c0_11, %c0_12], %7 {strides = array<i32>} : memref<16x1xf32, #tpu.memory_space<vmem>>, vector<16x1xf32>,
    %c0_13 = arith.constant 0 : index
    %c0_14 = arith.constant 0 : index
    %21 = vector.load %arg3[%c0_13, %c0_14] : memref<16x1xi32, #tpu.memory_space<vmem>>, vector<16x1xi32>
    %22 = tpu.iota {dimensions = array<i32: 1>} : vector<16x32xi32>
    %c32_i32 = arith.constant 32 : i32
    %23 = arith.muli %arg1, %c32_i32 : i32
    %24 = vector.broadcast %23 : i32 to vector<16x32xi32>
    %25 = arith.addi %22, %24 : vector<16x32xi32>
    %c0_15 = arith.constant 0 : index
    %c0_16 = arith.constant 0 : index
    %26 = vector.load %arg8[%c0_15, %c0_16] : memref<16x1xf32, #tpu.memory_space<vmem>>, vector<16x1xf32>
    %27 = vector.broadcast %21 : vector<16x1xi32> to vector<16x32xi32>
    %28 = arith.cmpi eq, %25, %27 : vector<16x32xi32>
    %cst_17 = arith.constant 0.000000e+00 : f32
    %29 = vector.broadcast %cst_17 : f32 to vector<16x32xf32>
    %30 = arith.select %28, %3, %29 : vector<16x32xi1>, vector<16x32xf32>
    %cst_18 = arith.constant dense<0.000000e+00> : vector<16xf32>
    %31 = vector.multi_reduction <add>, %30, %cst_18 [1] : vector<16x32xf32> to vector<16xf32>
    %32 = vector.shape_cast %31 : vector<16xf32> to vector<16x1xf32>
    %33 = arith.addf %26, %32 : vector<16x1xf32>
    %c0_19 = arith.constant 0 : index
    %c0_20 = arith.constant 0 : index
    %34 = vector.load %arg8[%c0_19, %c0_20] : memref<16x1xf32, #tpu.memory_space<vmem>>, vector<16x1xf32>
    tpu.vector_store %arg8[%c0_19, %c0_20], %33 {strides = array<i32>} : memref<16x1xf32, #tpu.memory_space<vmem>>, vector<16x1xf32>,
    %c0_i32_21 = arith.constant 0 : i32
    %35 = arith.cmpi eq, %arg1, %c0_i32_21 : i32
    %36 = arith.extui %35 : i1 to i32
    %c0_i32_22 = arith.constant 0 : i32
    %37 = arith.cmpi ne, %36, %c0_i32_22 : i32
    scf.if %37 {
      %c0_23 = arith.constant 0 : index
      %c0_24 = arith.constant 0 : index
      %38 = vector.load %arg7[%c0_23, %c0_24] : memref<16x1xf32, #tpu.memory_space<vmem>>, vector<16x1xf32>
      %39 = math.log %38 : vector<16x1xf32>
      %c0_25 = arith.constant 0 : index
      %c0_26 = arith.constant 0 : index
      %40 = vector.load %arg6[%c0_25, %c0_26] : memref<16x1xf32, #tpu.memory_space<vmem>>, vector<16x1xf32>
      %41 = arith.addf %39, %40 : vector<16x1xf32>
      %c0_27 = arith.constant 0 : index
      %c0_28 = arith.constant 0 : index
      %42 = vector.load %arg8[%c0_27, %c0_28] : memref<16x1xf32, #tpu.memory_space<vmem>>, vector<16x1xf32>
      %43 = arith.subf %41, %42 : vector<16x1xf32>
      %c0_29 = arith.constant 0 : index
      %c0_30 = arith.constant 0 : index
      %44 = vector.load %arg4[%c0_29, %c0_30] : memref<16x1xf32, #tpu.memory_space<vmem>>, vector<16x1xf32>
      %45 = arith.mulf %43, %44 : vector<16x1xf32>
      %c0_31 = arith.constant 0 : index
      %c0_32 = arith.constant 0 : index
      %46 = vector.load %arg5[%c0_31, %c0_32] : memref<16x1xf32, #tpu.memory_space<vmem>>, vector<16x1xf32>
      tpu.vector_store %arg5[%c0_31, %c0_32], %45 {strides = array<i32>} : memref<16x1xf32, #tpu.memory_space<vmem>>, vector<16x1xf32>,
    } else {
    }
    return
  }
  func.func @transform_0(%arg0: i32, %arg1: i32) -> (i32, i32) {
    %c0_i32 = arith.constant 0 : i32
    return %arg0, %arg1 : i32, i32
  }
  func.func @transform_1(%arg0: i32, %arg1: i32) -> (i32, i32) {
    %c0_i32 = arith.constant 0 : i32
    %c0_i32_0 = arith.constant 0 : i32
    return %arg0, %c0_i32 : i32, i32
  }
  func.func @transform_2(%arg0: i32, %arg1: i32) -> (i32, i32) {
    %c0_i32 = arith.constant 0 : i32
    %c0_i32_0 = arith.constant 0 : i32
    return %arg0, %c0_i32 : i32, i32
  }
  func.func @transform_3(%arg0: i32, %arg1: i32) -> (i32, i32) {
    %c0_i32 = arith.constant 0 : i32
    %c0_i32_0 = arith.constant 0 : i32
    return %arg0, %c0_i32 : i32, i32
  }
}

</mosaic_0001>

<llo_original>
// kernel: run.26
$region0: #{run.26}
  #allocation0 [shape = 'u32[]', space=smem, size = 0x4, offset = 0x4, fixed_abs, tag = 'smem constant byte address 0x4 - core index']
  #allocation1 [shape = 'u32[144,128]{1,0:T(1,128)}', space=vmem, size = 0x12000, scoped, tag = 'internal scratch']
  #allocation2 [shape = 'f32[16,96]{1,0:T(8,128)}', space=vmem, size = 0x2000, scoped, tag = 'scratch operand']
  %s0 = inlined_call_operand.vmem [shape: bf16[16,32], index: 0, kind: input, shape index: {}]
  %s1 = inlined_call_operand.vmem [shape: bf16[32,96], index: 1, kind: input, shape index: {}]
  %s2 = inlined_call_operand.vmem [shape: f32[1,96], index: 2, kind: input, shape index: {}]
  %s3 = inlined_call_operand.vmem [shape: bf16[16,96], index: 3, kind: output, shape index: {}]
  %s4 = sld [smem:[#allocation0]]
  $region30: #{run.26} parent=0
    _
  %s6 = ssub.s32 1, %s4
  %s7 = scalar_select 0, %s6, %s4
  // Predicated region
  $region2: #{run.26} parent=0 // pred_check
    _
  $region3: #{run.26} parent=0 // pred_check_branch
    %9 = sbr.rel (0) target = $region5
  $region4: #{run.26} parent=0 // pred_region
    _
  $region5: #{run.26} parent=0 // pred_fallthru
    _
  // Predicated region
  $region6: #{run.26} parent=0 // pred_check
    _
  $region7: #{run.26} parent=0 // pred_check_branch
    %11 = sbr.rel (0) target = $region9
  $region8: #{run.26} parent=0 // pred_region
    _
  $region9: #{run.26} parent=0 // pred_fallthru
    _
  // Predicated region
  $region10: #{run.26} parent=0 // pred_check
    _
  $region11: #{run.26} parent=0 // pred_check_branch
    %13 = sbr.rel (0) target = $region13
  $region12: #{run.26} parent=0 // pred_region
    _
  $region13: #{run.26} parent=0 // pred_fallthru
    _
  %p15 = scmp.eq.s32.totalorder 0, 0
  // Predicated region
  $region14: #{run.26} parent=0 // pred_check
    %p16 = pneg %p15
  $region15: #{run.26} parent=0 // pred_check_branch
    %18 = sbr.rel (%p16) target = $region17
  $region16: #{run.26} parent=0 // pred_region
    %vm19 = vcmask 785408
    %20 = vst.msk [vmem:[#allocation2] sm:$0xff] %vm19, 0.0
    %21 = vst.msk [vmem:[#allocation2 + $0x8] sm:$0xff] %vm19, 0.0
  $region17: #{run.26} parent=0 // pred_fallthru
    _
  %v22 = vld [vmem:[#allocation2] sm:$0xff]
  %v23 = vld [vmem:[#allocation2 + $0x8] sm:$0xff]
  %v24 = vld [vmem:[%s0] sm:$0xf]
  %v25 = vld [vmem:[%s0 + $0x4] sm:$0xf]
  %v26 = vld [vmem:[%s1] sm:$0xf]
  %v27 = vld [vmem:[%s1 + $0x4] sm:$0xf]
  %v28 = vld [vmem:[%s1 + $0x8] sm:$0xf]
  %v29 = vld [vmem:[%s1 + $0xc] sm:$0xf]
  %v32 = vunpack.c.l.b16 %v24
  %v33 = vunpack.c.l.b16 %v25
  %v34 = vpack.c.b16 %v33, %v32
  %v39 = vunpack.c.l.b16 %v26
  %v40 = vunpack.c.l.b16 %v27
  %v41 = vunpack.c.l.b16 %v28
  %v42 = vunpack.c.l.b16 %v29
  %v43 = vpack.c.b16 %v40, %v39
  %v44 = vpack.c.b16 %v42, %v41
  %vm47 = vcmask 261120
  %v49 = vsel %vm47, %v34, 0
  %51 = vmatprep.subr.bf16.mxu0 0
  %52 = vmatpush1.bf16.msra.mxu0 %v43
  %53 = vmatprep.subr.bf16.mxu0 0
  %54 = vmatpush1.bf16.msra.mxu0 %v44
  %55 = vmatprep.subr.bf16.mxu0 0
  %56 = vmatpush1.bf16.msra.mxu0 0
  %57 = vmatprep.subr.bf16.mxu0 0
  %58 = vmatpush1.bf16.msra.mxu0 0
  %59 = vmatprep.subr.bf16.mxu0 0
  %60 = vmatpush1.bf16.msra.mxu0 0
  %61 = vmatprep.subr.bf16.mxu0 0
  %62 = vmatpush1.bf16.msra.mxu0 0
  %63 = vmatprep.subr.bf16.mxu0 0
  %64 = vmatpush1.bf16.msra.mxu0 0
  %65 = vmatprep.subr.bf16.mxu0 0
  %66 = vmatpush1.bf16.msra.mxu0 0
  %67 = vmatprep.subr.bf16.mxu0 0
  %68 = vmatpush1.bf16.msra.mxu0 0
  %69 = vmatprep.subr.bf16.mxu0 0
  %70 = vmatpush1.bf16.msra.mxu0 0
  %71 = vmatprep.subr.bf16.mxu0 0
  %72 = vmatpush1.bf16.msra.mxu0 0
  %73 = vmatprep.subr.bf16.mxu0 0
  %74 = vmatpush1.bf16.msra.mxu0 0
  %75 = vmatprep.subr.bf16.mxu0 0
  %76 = vmatpush1.bf16.msra.mxu0 0
  %77 = vmatprep.subr.bf16.mxu0 0
  %78 = vmatpush1.bf16.msra.mxu0 0
  %79 = vmatprep.subr.bf16.mxu0 0
  %80 = vmatpush1.bf16.msra.mxu0 0
  %81 = vmatprep.subr.bf16.mxu0 0
  %82 = vmatpush1.bf16.msra.mxu0 0
  %83 = vmatprep.mubr.bf16.mxu0 0
  %84 = vmatmul.mubr.bf16.gmra.mrb[0].mxu0 %v49
  %v85 = vpop.f32.mrb[0].mxu0
  %v86 = vadd.f32 0.0, %v85
  %v87 = vpop.f32.mrb[0].mxu0
  %v88 = vpop.f32.mrb[0].mxu0
  %v89 = vadd.f32 0.0, %v88
  %v90 = vpop.f32.mrb[0].mxu0
  %91 = vdwg.mxu0
  %v92 = vadd.f32 %v22, %v86
  %v93 = vadd.f32 %v23, %v89
  %vm94 = vcmask 785408
  %95 = vst.msk [vmem:[#allocation2] sm:$0xff] %vm94, %v92
  %96 = vst.msk [vmem:[#allocation2 + $0x8] sm:$0xff] %vm94, %v93
  // Predicated region
  $region18: #{run.26} parent=0 // pred_check
    %p97 = pneg %p15
  $region19: #{run.26} parent=0 // pred_check_branch
    %99 = sbr.rel (%p97) target = $region21
  $region20: #{run.26} parent=0 // pred_region
    %v100 = vld [vmem:[#allocation2] sm:$0xff]
    %v101 = vld [vmem:[#allocation2 + $0x8] sm:$0xff]
    %v102 = vld [vmem:[%s2] sm:$0x1]
    %v104 = vlaneseq
    %v105 = vshrl.u32 %v104, 7
    %v106 = vsub.s32 0, %v105
    %v107 = vrot.slane %v102, %v106
    %v109 = vadd.f32 %v100, %v107
    %v110 = vadd.f32 %v101, %v107
    %v111 = vpack.c.bf16 %v110, %v109
    %v113 = vunpack.c.l.b16 %v111
    %v114 = vunpack.c.h.b16 %v111
    %v115 = vpack.c.b16 %v113, %v113
    %v116 = vpack.c.b16 %v114, %v114
    %vm119 = vcmask 781312
    %120 = vst.msk [vmem:[%s3] sm:$0xf] %vm119, %v115
    %121 = vst.msk [vmem:[%s3 + $0x4] sm:$0xf] %vm119, %v116
  $region21: #{run.26} parent=0 // pred_fallthru
    _
  // Predicated region
  $region22: #{run.26} parent=0 // pred_check
    _
  $region23: #{run.26} parent=0 // pred_check_branch
    %123 = sbr.rel (0) target = $region25
  $region24: #{run.26} parent=0 // pred_region
    _
  $region25: #{run.26} parent=0 // pred_fallthru
    _
  // Predicated region
  $region26: #{run.26} parent=0 // pred_check
    _
  $region27: #{run.26} parent=0 // pred_check_branch
    %125 = sbr.rel (0) target = $region29
  $region28: #{run.26} parent=0 // pred_region
    _
  $region29: #{run.26} parent=0 // pred_fallthru
    _

// kernel: run.37
$region0: #{run.37}
  #allocation0 [shape = 'u32[]', space=smem, size = 0x4, offset = 0x4, fixed_abs, tag = 'smem constant byte address 0x4 - core index']
  #allocation1 [shape = 'u32[144,128]{1,0:T(1,128)}', space=vmem, size = 0x12000, scoped, tag = 'internal scratch']
  #allocation2 [shape = 'f32[16,32]{1,0:T(8,128)}', space=vmem, size = 0x2000, scoped, tag = 'scratch operand']
  %s0 = inlined_call_operand.vmem [shape: bf16[16,32], index: 0, kind: input, shape index: {}]
  %s1 = inlined_call_operand.vmem [shape: bf16[32,32], index: 1, kind: input, shape index: {}]
  %s2 = inlined_call_operand.vmem [shape: f32[1,32], index: 2, kind: input, shape index: {}]
  %s3 = inlined_call_operand.vmem [shape: bf16[16,32], index: 3, kind: output, shape index: {}]
  %s4 = sld [smem:[#allocation0]]
  $region30: #{run.37} parent=0
    _
  %s6 = ssub.s32 1, %s4
  %s7 = scalar_select 0, %s6, %s4
  // Predicated region
  $region2: #{run.37} parent=0 // pred_check
    _
  $region3: #{run.37} parent=0 // pred_check_branch
    %9 = sbr.rel (0) target = $region5
  $region4: #{run.37} parent=0 // pred_region
    _
  $region5: #{run.37} parent=0 // pred_fallthru
    _
  // Predicated region
  $region6: #{run.37} parent=0 // pred_check
    _
  $region7: #{run.37} parent=0 // pred_check_branch
    %11 = sbr.rel (0) target = $region9
  $region8: #{run.37} parent=0 // pred_region
    _
  $region9: #{run.37} parent=0 // pred_fallthru
    _
  // Predicated region
  $region10: #{run.37} parent=0 // pred_check
    _
  $region11: #{run.37} parent=0 // pred_check_branch
    %13 = sbr.rel (0) target = $region13
  $region12: #{run.37} parent=0 // pred_region
    _
  $region13: #{run.37} parent=0 // pred_fallthru
    _
  %p15 = scmp.eq.s32.totalorder 0, 0
  // Predicated region
  $region14: #{run.37} parent=0 // pred_check
    %p16 = pneg %p15
  $region15: #{run.37} parent=0 // pred_check_branch
    %18 = sbr.rel (%p16) target = $region17
  $region16: #{run.37} parent=0 // pred_region
    %vm19 = vcmask 261120
    %20 = vst.msk [vmem:[#allocation2] sm:$0xff] %vm19, 0.0
    %21 = vst.msk [vmem:[#allocation2 + $0x8] sm:$0xff] %vm19, 0.0
  $region17: #{run.37} parent=0 // pred_fallthru
    _
  %v22 = vld [vmem:[#allocation2] sm:$0xff]
  %v23 = vld [vmem:[#allocation2 + $0x8] sm:$0xff]
  %v24 = vld [vmem:[%s0] sm:$0xf]
  %v25 = vld [vmem:[%s0 + $0x4] sm:$0xf]
  %v26 = vld [vmem:[%s1] sm:$0xf]
  %v27 = vld [vmem:[%s1 + $0x4] sm:$0xf]
  %v28 = vld [vmem:[%s1 + $0x8] sm:$0xf]
  %v29 = vld [vmem:[%s1 + $0xc] sm:$0xf]
  %v32 = vunpack.c.l.b16 %v24
  %v33 = vunpack.c.l.b16 %v25
  %v34 = vpack.c.b16 %v33, %v32
  %v39 = vunpack.c.l.b16 %v26
  %v40 = vunpack.c.l.b16 %v27
  %v41 = vunpack.c.l.b16 %v28
  %v42 = vunpack.c.l.b16 %v29
  %v43 = vpack.c.b16 %v40, %v39
  %v44 = vpack.c.b16 %v42, %v41
  %vm47 = vcmask 261120
  %v49 = vsel %vm47, %v34, 0
  %51 = vmatprep.subr.bf16.mxu0 0
  %52 = vmatpush1.bf16.msra.mxu0 %v43
  %53 = vmatprep.subr.bf16.mxu0 0
  %54 = vmatpush1.bf16.msra.mxu0 %v44
  %55 = vmatprep.subr.bf16.mxu0 0
  %56 = vmatpush1.bf16.msra.mxu0 0
  %57 = vmatprep.subr.bf16.mxu0 0
  %58 = vmatpush1.bf16.msra.mxu0 0
  %59 = vmatprep.subr.bf16.mxu0 0
  %60 = vmatpush1.bf16.msra.mxu0 0
  %61 = vmatprep.subr.bf16.mxu0 0
  %62 = vmatpush1.bf16.msra.mxu0 0
  %63 = vmatprep.subr.bf16.mxu0 0
  %64 = vmatpush1.bf16.msra.mxu0 0
  %65 = vmatprep.subr.bf16.mxu0 0
  %66 = vmatpush1.bf16.msra.mxu0 0
  %67 = vmatprep.subr.bf16.mxu0 0
  %68 = vmatpush1.bf16.msra.mxu0 0
  %69 = vmatprep.subr.bf16.mxu0 0
  %70 = vmatpush1.bf16.msra.mxu0 0
  %71 = vmatprep.subr.bf16.mxu0 0
  %72 = vmatpush1.bf16.msra.mxu0 0
  %73 = vmatprep.subr.bf16.mxu0 0
  %74 = vmatpush1.bf16.msra.mxu0 0
  %75 = vmatprep.subr.bf16.mxu0 0
  %76 = vmatpush1.bf16.msra.mxu0 0
  %77 = vmatprep.subr.bf16.mxu0 0
  %78 = vmatpush1.bf16.msra.mxu0 0
  %79 = vmatprep.subr.bf16.mxu0 0
  %80 = vmatpush1.bf16.msra.mxu0 0
  %81 = vmatprep.subr.bf16.mxu0 0
  %82 = vmatpush1.bf16.msra.mxu0 0
  %83 = vmatprep.mubr.bf16.mxu0 0
  %84 = vmatmul.mubr.bf16.gmra.mrb[0].mxu0 %v49
  %v85 = vpop.f32.mrb[0].mxu0
  %v86 = vadd.f32 0.0, %v85
  %v87 = vpop.f32.mrb[0].mxu0
  %v88 = vpop.f32.mrb[0].mxu0
  %v89 = vadd.f32 0.0, %v88
  %v90 = vpop.f32.mrb[0].mxu0
  %91 = vdwg.mxu0
  %v92 = vadd.f32 %v22, %v86
  %v93 = vadd.f32 %v23, %v89
  %94 = vst.msk [vmem:[#allocation2] sm:$0xff] %vm47, %v92
  %95 = vst.msk [vmem:[#allocation2 + $0x8] sm:$0xff] %vm47, %v93
  // Predicated region
  $region18: #{run.37} parent=0 // pred_check
    %p96 = pneg %p15
  $region19: #{run.37} parent=0 // pred_check_branch
    %98 = sbr.rel (%p96) target = $region21
  $region20: #{run.37} parent=0 // pred_region
    %v99 = vld [vmem:[#allocation2] sm:$0xff]
    %v100 = vld [vmem:[#allocation2 + $0x8] sm:$0xff]
    %v101 = vld [vmem:[%s2] sm:$0x1]
    %v103 = vlaneseq
    %v104 = vshrl.u32 %v103, 7
    %v105 = vsub.s32 0, %v104
    %v106 = vrot.slane %v101, %v105
    %v108 = vadd.f32 %v99, %v106
    %v109 = vadd.f32 %v100, %v106
    %v110 = vpack.c.bf16 %v109, %v108
    %v112 = vunpack.c.l.b16 %v110
    %v113 = vunpack.c.h.b16 %v110
    %v114 = vpack.c.b16 %v112, %v112
    %v115 = vpack.c.b16 %v113, %v113
    %vm118 = vcmask 257024
    %119 = vst.msk [vmem:[%s3] sm:$0xf] %vm118, %v114
    %120 = vst.msk [vmem:[%s3 + $0x4] sm:$0xf] %vm118, %v115
  $region21: #{run.37} parent=0 // pred_fallthru
    _
  // Predicated region
  $region22: #{run.37} parent=0 // pred_check
    _
  $region23: #{run.37} parent=0 // pred_check_branch
    %122 = sbr.rel (0) target = $region25
  $region24: #{run.37} parent=0 // pred_region
    _
  $region25: #{run.37} parent=0 // pred_fallthru
    _
  // Predicated region
  $region26: #{run.37} parent=0 // pred_check
    _
  $region27: #{run.37} parent=0 // pred_check_branch
    %124 = sbr.rel (0) target = $region29
  $region28: #{run.37} parent=0 // pred_region
    _
  $region29: #{run.37} parent=0 // pred_fallthru
    _

// kernel: run.35
$region0: #{run.35}
  #allocation0 [shape = 'u32[]', space=smem, size = 0x4, offset = 0x4, fixed_abs, tag = 'smem constant byte address 0x4 - core index']
  #allocation1 [shape = 'u32[144,128]{1,0:T(1,128)}', space=vmem, size = 0x12000, scoped, tag = 'internal scratch']
  %s0 = inlined_call_operand.vmem [shape: bf16[2,8,96], index: 0, kind: input, shape index: {}]
  %s1 = inlined_call_operand.vmem [shape: f32[2,1,8], index: 1, kind: input, shape index: {}]
  %s2 = inlined_call_operand.vmem [shape: bf16[2,8,32], index: 2, kind: output, shape index: {0}]
  %s3 = inlined_call_operand.hbm [shape: bf16[2,4,8,8], index: 3, kind: output, shape index: {1}]
  %s4 = inlined_call_operand.vmem [shape: f32[2,4,8,1], index: 4, kind: output, shape index: {2}]
  %5 = xla_tuple %s2, %s3, %s4
  %s6 = sld [smem:[#allocation0]]
  $region57: #{run.35} parent=0
    _
  %s8 = ssub.s32 1, %s6
  %s9 = scalar_select 0, %s8, %s6
  $region1: #{run.35} parent=0
    #allocation2 [shape = 'u8[16384]{0}', space=vmem, size = 0x4000, scoped, tag = 'output window, operand 1']
    #allocation3 [shape = 's32[2]{0}', space=sflag, size = 0x8, scoped, tag = 'scoped memory for run.35']
    %10 = vsyncpa [#allocation3], 0
    %s11 = scalar_lea.sflag [#allocation3], 1
    %12 = vsyncpa %s11, 0
    loop: start=0, step=1, limit=4
    $region2: #{run.35} parent=1 // loop_pre_header
      _
    $region3: #{run.35} parent=1 // loop_header
      %s14 = sphi 0, %s18
      %p15 = scmp.ge.s32.totalorder %s14, 4
      %s24 = sphi 0, %s26
      %s27 = sphi 0, %s24
      %s28 = sphi 0, %s27
      %s44 = sphi 0, %s28
      %s50 = sphi 0, %s52
      %s53 = sphi 0, %s50
      %s54 = sphi 0, %s53
      %s70 = sphi 0, %s54
      %s76 = sphi 0, %s78
      %s79 = sphi 0, %s76
      %s80 = sphi 0, %s79
      %s96 = sphi 0, %s80
      %s102 = sphi 0, %s104
      %s105 = sphi 0, %s102
      %s106 = sphi 0, %s105
      %s122 = sphi 0, %s106
      %s128 = sphi 0, %s130
      %s131 = sphi 0, %s128
      %s132 = sphi 0, %s131
      %s148 = sphi 0, %s132
    $region4: #{run.35} parent=1 // loop_header_branch
      %17 = sbr.rel (%p15) target = $region8
    $region5: #{run.35} parent=1 // loop_body
      %s19 = ssub.s32 %s14, 1
      %s20 = ssub.s32 %s14, 2
      %s21 = sadd.s32 %s14, 1
      %s22 = ssub.s32 %s14, %s21
      %p23 = scmp.eq.s32.totalorder %s22, 0
      %s25 = sadd.s32 %s24, 1
      %s26 = scalar_select %p23, %s24, %s25
      %p29 = pneg %p23
      %p30 = scmp.eq.s32.totalorder %s14, 1
      %p31 = por %p29, %p30
      %p32 = scmp.ne.s32.totalorder %s24, %s27
      %p33 = scmp.eq.s32.totalorder %s14, 0
      %p34 = por %p32, %p33
      %p35 = scmp.ne.s32.totalorder %s24, %s27
      %p36 = scmp.eq.s32.totalorder %s19, 1
      %p37 = por %p35, %p36
      %p38 = scmp.ne.s32.totalorder %s27, %s28
      %p39 = scmp.eq.s32.totalorder %s19, 0
      %p40 = por %p38, %p39
      %p41 = scmp.ne.s32.totalorder %s27, %s28
      %p42 = scmp.eq.s32.totalorder %s20, 1
      %p43 = por %p41, %p42
      %p45 = scmp.ne.s32.totalorder %s28, %s44
      %p46 = scmp.eq.s32.totalorder %s20, 0
      %p47 = por %p45, %p46
      %s48 = ssub.s32 %s14, %s21
      %p49 = scmp.eq.s32.totalorder %s48, 0
      %s51 = sadd.s32 %s50, 1
      %s52 = scalar_select %p49, %s50, %s51
      %p55 = pneg %p49
      %p56 = scmp.eq.s32.totalorder %s14, 1
      %p57 = por %p55, %p56
      %p58 = scmp.ne.s32.totalorder %s50, %s53
      %p59 = scmp.eq.s32.totalorder %s14, 0
      %p60 = por %p58, %p59
      %p61 = scmp.ne.s32.totalorder %s50, %s53
      %p62 = scmp.eq.s32.totalorder %s19, 1
      %p63 = por %p61, %p62
      %p64 = scmp.ne.s32.totalorder %s53, %s54
      %p65 = scmp.eq.s32.totalorder %s19, 0
      %p66 = por %p64, %p65
      %p67 = scmp.ne.s32.totalorder %s53, %s54
      %p68 = scmp.eq.s32.totalorder %s20, 1
      %p69 = por %p67, %p68
      %p71 = scmp.ne.s32.totalorder %s54, %s70
      %p72 = scmp.eq.s32.totalorder %s20, 0
      %p73 = por %p71, %p72
      %s74 = ssub.s32 %s14, %s21
      %p75 = scmp.eq.s32.totalorder %s74, 0
      %s77 = sadd.s32 %s76, 1
      %s78 = scalar_select %p75, %s76, %s77
      %p81 = pneg %p75
      %p82 = scmp.eq.s32.totalorder %s14, 1
      %p83 = por %p81, %p82
      %p84 = scmp.ne.s32.totalorder %s76, %s79
      %p85 = scmp.eq.s32.totalorder %s14, 0
      %p86 = por %p84, %p85
      %p87 = scmp.ne.s32.totalorder %s76, %s79
      %p88 = scmp.eq.s32.totalorder %s19, 1
      %p89 = por %p87, %p88
      %p90 = scmp.ne.s32.totalorder %s79, %s80
      %p91 = scmp.eq.s32.totalorder %s19, 0
      %p92 = por %p90, %p91
      %p93 = scmp.ne.s32.totalorder %s79, %s80
      %p94 = scmp.eq.s32.totalorder %s20, 1
      %p95 = por %p93, %p94
      %p97 = scmp.ne.s32.totalorder %s80, %s96
      %p98 = scmp.eq.s32.totalorder %s20, 0
      %p99 = por %p97, %p98
      %s100 = ssub.s32 %s14, %s21
      %p101 = scmp.eq.s32.totalorder %s100, 0
      %s103 = sadd.s32 %s102, 1
      %s104 = scalar_select %p101, %s102, %s103
      %p107 = pneg %p101
      %p108 = scmp.eq.s32.totalorder %s14, 1
      %p109 = por %p107, %p108
      %p110 = scmp.ne.s32.totalorder %s102, %s105
      %p111 = scmp.eq.s32.totalorder %s14, 0
      %p112 = por %p110, %p111
      %p113 = scmp.ne.s32.totalorder %s102, %s105
      %p114 = scmp.eq.s32.totalorder %s19, 1
      %p115 = por %p113, %p114
      %p116 = scmp.ne.s32.totalorder %s105, %s106
      %p117 = scmp.eq.s32.totalorder %s19, 0
      %p118 = por %p116, %p117
      %p119 = scmp.ne.s32.totalorder %s105, %s106
      %p120 = scmp.eq.s32.totalorder %s20, 1
      %p121 = por %p119, %p120
      %p123 = scmp.ne.s32.totalorder %s106, %s122
      %p124 = scmp.eq.s32.totalorder %s20, 0
      %p125 = por %p123, %p124
      %s126 = ssub.s32 %s14, %s21
      %p127 = scmp.eq.s32.totalorder %s126, 0
      %s129 = sadd.s32 %s128, 1
      %s130 = scalar_select %p127, %s128, %s129
      %p133 = pneg %p127
      %p134 = scmp.eq.s32.totalorder %s14, 1
      %p135 = por %p133, %p134
      %p136 = scmp.ne.s32.totalorder %s128, %s131
      %p137 = scmp.eq.s32.totalorder %s14, 0
      %p138 = por %p136, %p137
      %p139 = scmp.ne.s32.totalorder %s128, %s131
      %p140 = scmp.eq.s32.totalorder %s19, 1
      %p141 = por %p139, %p140
      %p142 = scmp.ne.s32.totalorder %s131, %s132
      %p143 = scmp.eq.s32.totalorder %s19, 0
      %p144 = por %p142, %p143
      %p145 = scmp.ne.s32.totalorder %s131, %s132
      %p146 = scmp.eq.s32.totalorder %s20, 1
      %p147 = por %p145, %p146
      %p149 = scmp.ne.s32.totalorder %s132, %s148
      %p150 = scmp.eq.s32.totalorder %s20, 0
      %p151 = por %p149, %p150
      %p152 = scmp.le.s32.totalorder 1, %s14
      %p153 = scmp.lt.s32.totalorder %s14, 3
      %p154 = pnand %p152, %p153
      %p155 = pneg %p154
      // Predicated region
      $region9: #{run.35} parent=5 // pred_check
        _
      $region10: #{run.35} parent=5 // pred_check_branch
        %157 = sbr.rel (%p154) target = $region12
      $region11: #{run.35} parent=5 // pred_region
        %s158 = ssub.s32 %s14, 1
      $region12: #{run.35} parent=5 // pred_fallthru
        _
      %p159 = scmp.lt.s32.totalorder %s14, 2
      // Predicated region
      $region13: #{run.35} parent=5 // pred_check
        %p160 = pneg %p159
      $region14: #{run.35} parent=5 // pred_check_branch
        %162 = sbr.rel (%p160) target = $region16
      $region15: #{run.35} parent=5 // pred_region
        // Predicated region
        $region17: #{run.35} parent=15 // pred_check
          %p163 = pneg %p34
        $region18: #{run.35} parent=15 // pred_check_branch
          %165 = sbr.rel (%p163) target = $region20
        $region19: #{run.35} parent=15 // pred_region
          %p166 = scmp.lt.s32.totalorder %s14, 1
          %s167 = scalar_select %p166, %s14, 1
          %s168 = smul.addr %s167, 4
          %s169 = scalar_lea.vmem %s0, %s168
        $region20: #{run.35} parent=15 // pred_fallthru
          _
        // Predicated region
        $region21: #{run.35} parent=15 // pred_check
          %p170 = pneg %p60
        $region22: #{run.35} parent=15 // pred_check_branch
          %172 = sbr.rel (%p170) target = $region24
        $region23: #{run.35} parent=15 // pred_region
          %p173 = scmp.lt.s32.totalorder %s14, 1
          %s174 = scalar_select %p173, %s14, 1
          %s175 = scalar_lea.vmem %s1, %s174
        $region24: #{run.35} parent=15 // pred_fallthru
          _
      $region16: #{run.35} parent=5 // pred_fallthru
        _
      %p176 = scmp.le.s32.totalorder 1, %s14
      %p177 = scmp.lt.s32.totalorder %s14, 3
      %p178 = pnand %p176, %p177
      %p179 = pneg %p178
      // Predicated region
      $region25: #{run.35} parent=5 // pred_check
        _
      $region26: #{run.35} parent=5 // pred_check_branch
        %181 = sbr.rel (%p178) target = $region28
      $region27: #{run.35} parent=5 // pred_region
        %s182 = ssub.s32 %s14, 1
        %p183 = scmp.lt.s32.totalorder %s19, 1
        %s184 = scalar_select %p183, %s19, 1
        %s185 = smul.addr %s184, 4
        %s186 = scalar_lea.vmem %s0, %s185
        %p187 = pneg %p40
        %p188 = pneg %p37
        %p189 = scmp.lt.s32.totalorder %s19, 1
        %s190 = scalar_select %p189, %s19, 1
        %s191 = scalar_lea.vmem %s1, %s190
        %p192 = pneg %p66
        %p193 = pneg %p63
        %p194 = pneg %p92
        %p195 = pneg %p89
        %p196 = scmp.lt.s32.totalorder %s19, 1
        %s197 = scalar_select %p196, %s19, 1
        %s198 = smul.addr %s197, 4
        %s199 = scalar_lea.vmem %s2, %s198
        %p200 = pneg %p118
        %p201 = pneg %p115
        %s202 = sand.u32 %s105, 1
        %s203 = scalar_lea.sflag [#allocation3], %s202
        %s204 = sand.u32 %s105, 1
        %s205 = smul.addr %s204, 16
        %s206 = scalar_lea.vmem [#allocation2], %s205
        %p207 = pneg %p144
        %p208 = pneg %p141
        %p209 = scmp.lt.s32.totalorder %s19, 1
        %s210 = scalar_select %p209, %s19, 1
        %s211 = smul.addr %s210, 4
        %s212 = smul.addr %s211, 8
        %s213 = scalar_lea.vmem %s4, %s212
        %p214 = scmp.lt.s32.totalorder %s19, 1
        %s215 = scalar_select %p214, %s19, 1
        %s216 = smul.addr %s215, 4
        %s217 = scalar_lea.vmem %s0, %s216
        %p218 = scmp.lt.s32.totalorder %s19, 1
        %s219 = scalar_select %p218, %s19, 1
        %s220 = scalar_lea.vmem %s1, %s219
        %p221 = scmp.lt.s32.totalorder %s19, 1
        %s222 = scalar_select %p221, %s19, 1
        %s223 = smul.addr %s222, 4
        %s224 = scalar_lea.vmem %s2, %s223
        %p225 = scmp.lt.s32.totalorder %s19, 1
        %s226 = scalar_select %p225, %s19, 1
        %s227 = smul.addr %s226, 4
        %s228 = smul.addr %s227, 8
        %s229 = scalar_lea.vmem %s4, %s228
        %v231 = vld [vmem:[%s217] sm:$0xf]
        %v232 = vld [vmem:[%s220] sm:$0x1]
        %vm233 = vcmp.gt.f32.partialorder %v232, 0.0
        %v234 = vsel %vm233, 0.0, -1e+09
        %v235 = vlaneseq
        %v236 = vshrl.u32 %v235, 7
        %v237 = vlaneseq
        %v238 = vand.u32 %v237, 127
        %vm239 = vcmp.le.s32.totalorder %v238, %v236
        %v240 = vsel %vm239, 0.0, -1e+09
        %v242 = vlaneseq
        %v243 = vshrl.u32 %v242, 7
        %v244 = vsub.s32 0, %v243
        %v245 = vrot.slane %v234, %v244
        %v247 = vadd.f32 %v245, %v240
        %v249 = vunpack.c.l.b16 %v231
        %v250 = vpack.c.b16 %v249, %v249
        %251 = vrot.lane.b32.xlu0 %v250, 96
        %v252 = vpop.permute.xlu0 %251
        %vm253 = vcmask 64512
        %v255 = vsel %vm253, %v231, 0
        %v258 = vsel %vm253, %v252, 0
        %260 = vmatprep.subr.bf16.mxu0 0
        %261 = vmatpush1.bf16.xpose.msra.mxu0 %v258
        %262 = vmatprep.subr.bf16.mxu0 0
        %263 = vmatpush1.bf16.xpose.msra.mxu0 0
        %264 = vmatprep.subr.bf16.mxu0 0
        %265 = vmatpush1.bf16.xpose.msra.mxu0 0
        %266 = vmatprep.subr.bf16.mxu0 0
        %267 = vmatpush1.bf16.xpose.msra.mxu0 0
        %268 = vmatprep.subr.bf16.mxu0 0
        %269 = vmatpush1.bf16.xpose.msra.mxu0 0
        %270 = vmatprep.subr.bf16.mxu0 0
        %271 = vmatpush1.bf16.xpose.msra.mxu0 0
        %272 = vmatprep.subr.bf16.mxu0 0
        %273 = vmatpush1.bf16.xpose.msra.mxu0 0
        %274 = vmatprep.subr.bf16.mxu0 0
        %275 = vmatpush1.bf16.xpose.msra.mxu0 0
        %276 = vmatprep.subr.bf16.mxu0 0
        %277 = vmatpush1.bf16.xpose.msra.mxu0 0
        %278 = vmatprep.subr.bf16.mxu0 0
        %279 = vmatpush1.bf16.xpose.msra.mxu0 0
        %280 = vmatprep.subr.bf16.mxu0 0
        %281 = vmatpush1.bf16.xpose.msra.mxu0 0
        %282 = vmatprep.subr.bf16.mxu0 0
        %283 = vmatpush1.bf16.xpose.msra.mxu0 0
        %284 = vmatprep.subr.bf16.mxu0 0
        %285 = vmatpush1.bf16.xpose.msra.mxu0 0
        %286 = vmatprep.subr.bf16.mxu0 0
        %287 = vmatpush1.bf16.xpose.msra.mxu0 0
        %288 = vmatprep.subr.bf16.mxu0 0
        %289 = vmatpush1.bf16.xpose.msra.mxu0 0
        %290 = vmatprep.subr.bf16.mxu0 0
        %291 = vmatpush1.bf16.xpose.msra.mxu0 0
        %292 = vmatprep.mubr.bf16.mxu0 0
        %293 = vmatmul.mubr.bf16.gmra.mrb[0].mxu0 %v255
        %v294 = vpop.f32.mrb[0].mxu0
        %v295 = vadd.f32 0.0, %v294
        %v296 = vpop.f32.mrb[0].mxu0
        %v297 = vpop.f32.mrb[0].mxu0
        %v298 = vpop.f32.mrb[0].mxu0
        %299 = vdwg.mxu0
        %v300 = vmul.f32 %v295, 0.35355338
        %v301 = vadd.f32 %v300, %v247
        %v302 = vsel %vm253, %v301, -inf
        %303 = vmax.xlane.f32.xlu0 %v302
        %v304 = vpop.xlane.xlu0 %303
        %v305 = vsub.f32 %v301, %v304
        %v306 = vmul.f32 %v305, 1.442695
        %v307 = vpow.pop %v306
        %v308 = vsel %vm253, %v307, 0.0
        %309 = vadd.xlane.f32.xlu0 %v308
        %v310 = vpop.xlane.xlu0 %309
        %v311 = vrcp.pop %v310
        %v312 = vmul.f32 %v307, %v311
        %v313 = vpack.c.bf16 %v312, %v312
        %314 = vrot.lane.b32.xlu0 %v250, 64
        %v315 = vpop.permute.xlu0 %314
        %v317 = vsel %vm253, %v313, 0
        %vm319 = vcmask 1043456
        %v321 = vsel %vm319, %v315, 0
        %323 = vmatprep.subr.bf16.mxu0 0
        %324 = vmatpush1.bf16.msra.mxu0 %v321
        %325 = vmatprep.subr.bf16.mxu0 0
        %326 = vmatpush1.bf16.msra.mxu0 0
        %327 = vmatprep.subr.bf16.mxu0 0
        %328 = vmatpush1.bf16.msra.mxu0 0
        %329 = vmatprep.subr.bf16.mxu0 0
        %330 = vmatpush1.bf16.msra.mxu0 0
        %331 = vmatprep.subr.bf16.mxu0 0
        %332 = vmatpush1.bf16.msra.mxu0 0
        %333 = vmatprep.subr.bf16.mxu0 0
        %334 = vmatpush1.bf16.msra.mxu0 0
        %335 = vmatprep.subr.bf16.mxu0 0
        %336 = vmatpush1.bf16.msra.mxu0 0
        %337 = vmatprep.subr.bf16.mxu0 0
        %338 = vmatpush1.bf16.msra.mxu0 0
        %339 = vmatprep.subr.bf16.mxu0 0
        %340 = vmatpush1.bf16.msra.mxu0 0
        %341 = vmatprep.subr.bf16.mxu0 0
        %342 = vmatpush1.bf16.msra.mxu0 0
        %343 = vmatprep.subr.bf16.mxu0 0
        %344 = vmatpush1.bf16.msra.mxu0 0
        %345 = vmatprep.subr.bf16.mxu0 0
        %346 = vmatpush1.bf16.msra.mxu0 0
        %347 = vmatprep.subr.bf16.mxu0 0
        %348 = vmatpush1.bf16.msra.mxu0 0
        %349 = vmatprep.subr.bf16.mxu0 0
        %350 = vmatpush1.bf16.msra.mxu0 0
        %351 = vmatprep.subr.bf16.mxu0 0
        %352 = vmatpush1.bf16.msra.mxu0 0
        %353 = vmatprep.subr.bf16.mxu0 0
        %354 = vmatpush1.bf16.msra.mxu0 0
        %355 = vmatprep.mubr.bf16.mxu0 0
        %356 = vmatmul.mubr.bf16.gmra.mrb[0].mxu0 %v317
        %v357 = vpop.f32.mrb[0].mxu0
        %v358 = vadd.f32 0.0, %v357
        %v359 = vpop.f32.mrb[0].mxu0
        %v360 = vpop.f32.mrb[0].mxu0
        %v361 = vpop.f32.mrb[0].mxu0
        %362 = vdwg.mxu0
        %vm363 = vcmp.gt.f32.partialorder %v312, 0.0
        %v364 = vsub.f32 0.0, %v312
        %v365 = vlog2.pop %v312
        %v366 = vmul.f32 %v365, 0.6931472
        %v367 = vmul.f32 %v364, %v366
        %v368 = vsel %vm363, %v367, 0.0
        %v369 = vsel %vm253, %v368, 0.0
        %370 = vadd.xlane.f32.xlu0 %v369
        %v371 = vpop.xlane.xlu0 %370
        %372 = vrot.lane.b32.xlu0 %v250, 120
        %v373 = vpop.permute.xlu0 %372
        %374 = vrot.lane.b32.xlu0 %v250, 88
        %v375 = vpop.permute.xlu0 %374
        %v377 = vsel %vm253, %v373, 0
        %v380 = vsel %vm253, %v375, 0
        %382 = vmatprep.subr.bf16.mxu0 0
        %383 = vmatpush1.bf16.xpose.msra.mxu0 %v380
        %384 = vmatprep.subr.bf16.mxu0 0
        %385 = vmatpush1.bf16.xpose.msra.mxu0 0
        %386 = vmatprep.subr.bf16.mxu0 0
        %387 = vmatpush1.bf16.xpose.msra.mxu0 0
        %388 = vmatprep.subr.bf16.mxu0 0
        %389 = vmatpush1.bf16.xpose.msra.mxu0 0
        %390 = vmatprep.subr.bf16.mxu0 0
        %391 = vmatpush1.bf16.xpose.msra.mxu0 0
        %392 = vmatprep.subr.bf16.mxu0 0
        %393 = vmatpush1.bf16.xpose.msra.mxu0 0
        %394 = vmatprep.subr.bf16.mxu0 0
        %395 = vmatpush1.bf16.xpose.msra.mxu0 0
        %396 = vmatprep.subr.bf16.mxu0 0
        %397 = vmatpush1.bf16.xpose.msra.mxu0 0
        %398 = vmatprep.subr.bf16.mxu0 0
        %399 = vmatpush1.bf16.xpose.msra.mxu0 0
        %400 = vmatprep.subr.bf16.mxu0 0
        %401 = vmatpush1.bf16.xpose.msra.mxu0 0
        %402 = vmatprep.subr.bf16.mxu0 0
        %403 = vmatpush1.bf16.xpose.msra.mxu0 0
        %404 = vmatprep.subr.bf16.mxu0 0
        %405 = vmatpush1.bf16.xpose.msra.mxu0 0
        %406 = vmatprep.subr.bf16.mxu0 0
        %407 = vmatpush1.bf16.xpose.msra.mxu0 0
        %408 = vmatprep.subr.bf16.mxu0 0
        %409 = vmatpush1.bf16.xpose.msra.mxu0 0
        %410 = vmatprep.subr.bf16.mxu0 0
        %411 = vmatpush1.bf16.xpose.msra.mxu0 0
        %412 = vmatprep.subr.bf16.mxu0 0
        %413 = vmatpush1.bf16.xpose.msra.mxu0 0
        %414 = vmatprep.mubr.bf16.mxu0 0
        %415 = vmatmul.mubr.bf16.gmra.mrb[0].mxu0 %v377
        %v416 = vpop.f32.mrb[0].mxu0
        %v417 = vadd.f32 0.0, %v416
        %v418 = vpop.f32.mrb[0].mxu0
        %v419 = vpop.f32.mrb[0].mxu0
        %v420 = vpop.f32.mrb[0].mxu0
        %421 = vdwg.mxu0
        %v422 = vmul.f32 %v417, 0.35355338
        %v423 = vadd.f32 %v422, %v247
        %v424 = vsel %vm253, %v423, -inf
        %425 = vmax.xlane.f32.xlu0 %v424
        %v426 = vpop.xlane.xlu0 %425
        %v427 = vsub.f32 %v423, %v426
        %v428 = vmul.f32 %v427, 1.442695
        %v429 = vpow.pop %v428
        %v430 = vsel %vm253, %v429, 0.0
        %431 = vadd.xlane.f32.xlu0 %v430
        %v432 = vpop.xlane.xlu0 %431
        %v433 = vrcp.pop %v432
        %v434 = vmul.f32 %v429, %v433
        %v435 = vpack.c.bf16 %v434, %v434
        %436 = vrot.lane.b32.xlu0 %v250, 56
        %v437 = vpop.permute.xlu0 %436
        %v439 = vsel %vm253, %v435, 0
        %v442 = vsel %vm319, %v437, 0
        %444 = vmatprep.subr.bf16.mxu0 0
        %445 = vmatpush1.bf16.msra.mxu0 %v442
        %446 = vmatprep.subr.bf16.mxu0 0
        %447 = vmatpush1.bf16.msra.mxu0 0
        %448 = vmatprep.subr.bf16.mxu0 0
        %449 = vmatpush1.bf16.msra.mxu0 0
        %450 = vmatprep.subr.bf16.mxu0 0
        %451 = vmatpush1.bf16.msra.mxu0 0
        %452 = vmatprep.subr.bf16.mxu0 0
        %453 = vmatpush1.bf16.msra.mxu0 0
        %454 = vmatprep.subr.bf16.mxu0 0
        %455 = vmatpush1.bf16.msra.mxu0 0
        %456 = vmatprep.subr.bf16.mxu0 0
        %457 = vmatpush1.bf16.msra.mxu0 0
        %458 = vmatprep.subr.bf16.mxu0 0
        %459 = vmatpush1.bf16.msra.mxu0 0
        %460 = vmatprep.subr.bf16.mxu0 0
        %461 = vmatpush1.bf16.msra.mxu0 0
        %462 = vmatprep.subr.bf16.mxu0 0
        %463 = vmatpush1.bf16.msra.mxu0 0
        %464 = vmatprep.subr.bf16.mxu0 0
        %465 = vmatpush1.bf16.msra.mxu0 0
        %466 = vmatprep.subr.bf16.mxu0 0
        %467 = vmatpush1.bf16.msra.mxu0 0
        %468 = vmatprep.subr.bf16.mxu0 0
        %469 = vmatpush1.bf16.msra.mxu0 0
        %470 = vmatprep.subr.bf16.mxu0 0
        %471 = vmatpush1.bf16.msra.mxu0 0
        %472 = vmatprep.subr.bf16.mxu0 0
        %473 = vmatpush1.bf16.msra.mxu0 0
        %474 = vmatprep.subr.bf16.mxu0 0
        %475 = vmatpush1.bf16.msra.mxu0 0
        %476 = vmatprep.mubr.bf16.mxu0 0
        %477 = vmatmul.mubr.bf16.gmra.mrb[0].mxu0 %v439
        %v478 = vpop.f32.mrb[0].mxu0
        %v479 = vadd.f32 0.0, %v478
        %v480 = vpop.f32.mrb[0].mxu0
        %v481 = vpop.f32.mrb[0].mxu0
        %v482 = vpop.f32.mrb[0].mxu0
        %483 = vdwg.mxu0
        %vm484 = vcmp.gt.f32.partialorder %v434, 0.0
        %v485 = vsub.f32 0.0, %v434
        %v486 = vlog2.pop %v434
        %v487 = vmul.f32 %v486, 0.6931472
        %v488 = vmul.f32 %v485, %v487
        %v489 = vsel %vm484, %v488, 0.0
        %v490 = vsel %vm253, %v489, 0.0
        %491 = vadd.xlane.f32.xlu0 %v490
        %v492 = vpop.xlane.xlu0 %491
        %493 = vrot.lane.b32.xlu0 %v250, 112
        %v494 = vpop.permute.xlu0 %493
        %495 = vrot.lane.b32.xlu0 %v250, 80
        %v496 = vpop.permute.xlu0 %495
        %v498 = vsel %vm253, %v494, 0
        %v501 = vsel %vm253, %v496, 0
        %503 = vmatprep.subr.bf16.mxu0 0
        %504 = vmatpush1.bf16.xpose.msra.mxu0 %v501
        %505 = vmatprep.subr.bf16.mxu0 0
        %506 = vmatpush1.bf16.xpose.msra.mxu0 0
        %507 = vmatprep.subr.bf16.mxu0 0
        %508 = vmatpush1.bf16.xpose.msra.mxu0 0
        %509 = vmatprep.subr.bf16.mxu0 0
        %510 = vmatpush1.bf16.xpose.msra.mxu0 0
        %511 = vmatprep.subr.bf16.mxu0 0
        %512 = vmatpush1.bf16.xpose.msra.mxu0 0
        %513 = vmatprep.subr.bf16.mxu0 0
        %514 = vmatpush1.bf16.xpose.msra.mxu0 0
        %515 = vmatprep.subr.bf16.mxu0 0
        %516 = vmatpush1.bf16.xpose.msra.mxu0 0
        %517 = vmatprep.subr.bf16.mxu0 0
        %518 = vmatpush1.bf16.xpose.msra.mxu0 0
        %519 = vmatprep.subr.bf16.mxu0 0
        %520 = vmatpush1.bf16.xpose.msra.mxu0 0
        %521 = vmatprep.subr.bf16.mxu0 0
        %522 = vmatpush1.bf16.xpose.msra.mxu0 0
        %523 = vmatprep.subr.bf16.mxu0 0
        %524 = vmatpush1.bf16.xpose.msra.mxu0 0
        %525 = vmatprep.subr.bf16.mxu0 0
        %526 = vmatpush1.bf16.xpose.msra.mxu0 0
        %527 = vmatprep.subr.bf16.mxu0 0
        %528 = vmatpush1.bf16.xpose.msra.mxu0 0
        %529 = vmatprep.subr.bf16.mxu0 0
        %530 = vmatpush1.bf16.xpose.msra.mxu0 0
        %531 = vmatprep.subr.bf16.mxu0 0
        %532 = vmatpush1.bf16.xpose.msra.mxu0 0
        %533 = vmatprep.subr.bf16.mxu0 0
        %534 = vmatpush1.bf16.xpose.msra.mxu0 0
        %535 = vmatprep.mubr.bf16.mxu0 0
        %536 = vmatmul.mubr.bf16.gmra.mrb[0].mxu0 %v498
        %v537 = vpop.f32.mrb[0].mxu0
        %v538 = vadd.f32 0.0, %v537
        %v539 = vpop.f32.mrb[0].mxu0
        %v540 = vpop.f32.mrb[0].mxu0
        %v541 = vpop.f32.mrb[0].mxu0
        %542 = vdwg.mxu0
        %v543 = vmul.f32 %v538, 0.35355338
        %v544 = vadd.f32 %v543, %v247
        %v545 = vsel %vm253, %v544, -inf
        %546 = vmax.xlane.f32.xlu0 %v545
        %v547 = vpop.xlane.xlu0 %546
        %v548 = vsub.f32 %v544, %v547
        %v549 = vmul.f32 %v548, 1.442695
        %v550 = vpow.pop %v549
        %v551 = vsel %vm253, %v550, 0.0
        %552 = vadd.xlane.f32.xlu0 %v551
        %v553 = vpop.xlane.xlu0 %552
        %v554 = vrcp.pop %v553
        %v555 = vmul.f32 %v550, %v554
        %v556 = vpack.c.bf16 %v555, %v555
        %557 = vrot.lane.b32.xlu0 %v250, 48
        %v558 = vpop.permute.xlu0 %557
        %v560 = vsel %vm253, %v556, 0
        %v563 = vsel %vm319, %v558, 0
        %565 = vmatprep.subr.bf16.mxu0 0
        %566 = vmatpush1.bf16.msra.mxu0 %v563
        %567 = vmatprep.subr.bf16.mxu0 0
        %568 = vmatpush1.bf16.msra.mxu0 0
        %569 = vmatprep.subr.bf16.mxu0 0
        %570 = vmatpush1.bf16.msra.mxu0 0
        %571 = vmatprep.subr.bf16.mxu0 0
        %572 = vmatpush1.bf16.msra.mxu0 0
        %573 = vmatprep.subr.bf16.mxu0 0
        %574 = vmatpush1.bf16.msra.mxu0 0
        %575 = vmatprep.subr.bf16.mxu0 0
        %576 = vmatpush1.bf16.msra.mxu0 0
        %577 = vmatprep.subr.bf16.mxu0 0
        %578 = vmatpush1.bf16.msra.mxu0 0
        %579 = vmatprep.subr.bf16.mxu0 0
        %580 = vmatpush1.bf16.msra.mxu0 0
        %581 = vmatprep.subr.bf16.mxu0 0
        %582 = vmatpush1.bf16.msra.mxu0 0
        %583 = vmatprep.subr.bf16.mxu0 0
        %584 = vmatpush1.bf16.msra.mxu0 0
        %585 = vmatprep.subr.bf16.mxu0 0
        %586 = vmatpush1.bf16.msra.mxu0 0
        %587 = vmatprep.subr.bf16.mxu0 0
        %588 = vmatpush1.bf16.msra.mxu0 0
        %589 = vmatprep.subr.bf16.mxu0 0
        %590 = vmatpush1.bf16.msra.mxu0 0
        %591 = vmatprep.subr.bf16.mxu0 0
        %592 = vmatpush1.bf16.msra.mxu0 0
        %593 = vmatprep.subr.bf16.mxu0 0
        %594 = vmatpush1.bf16.msra.mxu0 0
        %595 = vmatprep.subr.bf16.mxu0 0
        %596 = vmatpush1.bf16.msra.mxu0 0
        %597 = vmatprep.mubr.bf16.mxu0 0
        %598 = vmatmul.mubr.bf16.gmra.mrb[0].mxu0 %v560
        %v599 = vpop.f32.mrb[0].mxu0
        %v600 = vadd.f32 0.0, %v599
        %v601 = vpop.f32.mrb[0].mxu0
        %v602 = vpop.f32.mrb[0].mxu0
        %v603 = vpop.f32.mrb[0].mxu0
        %604 = vdwg.mxu0
        %vm605 = vcmp.gt.f32.partialorder %v555, 0.0
        %v606 = vsub.f32 0.0, %v555
        %v607 = vlog2.pop %v555
        %v608 = vmul.f32 %v607, 0.6931472
        %v609 = vmul.f32 %v606, %v608
        %v610 = vsel %vm605, %v609, 0.0
        %v611 = vsel %vm253, %v610, 0.0
        %612 = vadd.xlane.f32.xlu0 %v611
        %v613 = vpop.xlane.xlu0 %612
        %614 = vrot.lane.b32.xlu0 %v250, 104
        %v615 = vpop.permute.xlu0 %614
        %616 = vrot.lane.b32.xlu0 %v250, 72
        %v617 = vpop.permute.xlu0 %616
        %v619 = vsel %vm253, %v615, 0
        %v622 = vsel %vm253, %v617, 0
        %624 = vmatprep.subr.bf16.mxu0 0
        %625 = vmatpush1.bf16.xpose.msra.mxu0 %v622
        %626 = vmatprep.subr.bf16.mxu0 0
        %627 = vmatpush1.bf16.xpose.msra.mxu0 0
        %628 = vmatprep.subr.bf16.mxu0 0
        %629 = vmatpush1.bf16.xpose.msra.mxu0 0
        %630 = vmatprep.subr.bf16.mxu0 0
        %631 = vmatpush1.bf16.xpose.msra.mxu0 0
        %632 = vmatprep.subr.bf16.mxu0 0
        %633 = vmatpush1.bf16.xpose.msra.mxu0 0
        %634 = vmatprep.subr.bf16.mxu0 0
        %635 = vmatpush1.bf16.xpose.msra.mxu0 0
        %636 = vmatprep.subr.bf16.mxu0 0
        %637 = vmatpush1.bf16.xpose.msra.mxu0 0
        %638 = vmatprep.subr.bf16.mxu0 0
        %639 = vmatpush1.bf16.xpose.msra.mxu0 0
        %640 = vmatprep.subr.bf16.mxu0 0
        %641 = vmatpush1.bf16.xpose.msra.mxu0 0
        %642 = vmatprep.subr.bf16.mxu0 0
        %643 = vmatpush1.bf16.xpose.msra.mxu0 0
        %644 = vmatprep.subr.bf16.mxu0 0
        %645 = vmatpush1.bf16.xpose.msra.mxu0 0
        %646 = vmatprep.subr.bf16.mxu0 0
        %647 = vmatpush1.bf16.xpose.msra.mxu0 0
        %648 = vmatprep.subr.bf16.mxu0 0
        %649 = vmatpush1.bf16.xpose.msra.mxu0 0
        %650 = vmatprep.subr.bf16.mxu0 0
        %651 = vmatpush1.bf16.xpose.msra.mxu0 0
        %652 = vmatprep.subr.bf16.mxu0 0
        %653 = vmatpush1.bf16.xpose.msra.mxu0 0
        %654 = vmatprep.subr.bf16.mxu0 0
        %655 = vmatpush1.bf16.xpose.msra.mxu0 0
        %656 = vmatprep.mubr.bf16.mxu0 0
        %657 = vmatmul.mubr.bf16.gmra.mrb[0].mxu0 %v619
        %v658 = vpop.f32.mrb[0].mxu0
        %v659 = vadd.f32 0.0, %v658
        %v660 = vpop.f32.mrb[0].mxu0
        %v661 = vpop.f32.mrb[0].mxu0
        %v662 = vpop.f32.mrb[0].mxu0
        %663 = vdwg.mxu0
        %v664 = vmul.f32 %v659, 0.35355338
        %v665 = vadd.f32 %v664, %v247
        %v666 = vsel %vm253, %v665, -inf
        %667 = vmax.xlane.f32.xlu0 %v666
        %v668 = vpop.xlane.xlu0 %667
        %v669 = vsub.f32 %v665, %v668
        %v670 = vmul.f32 %v669, 1.442695
        %v671 = vpow.pop %v670
        %v672 = vsel %vm253, %v671, 0.0
        %673 = vadd.xlane.f32.xlu0 %v672
        %v674 = vpop.xlane.xlu0 %673
        %v675 = vrcp.pop %v674
        %v676 = vmul.f32 %v671, %v675
        %v677 = vpack.c.bf16 %v676, %v676
        %678 = vrot.lane.b32.xlu0 %v250, 40
        %v679 = vpop.permute.xlu0 %678
        %v681 = vsel %vm253, %v677, 0
        %v684 = vsel %vm319, %v679, 0
        %686 = vmatprep.subr.bf16.mxu0 0
        %687 = vmatpush1.bf16.msra.mxu0 %v684
        %688 = vmatprep.subr.bf16.mxu0 0
        %689 = vmatpush1.bf16.msra.mxu0 0
        %690 = vmatprep.subr.bf16.mxu0 0
        %691 = vmatpush1.bf16.msra.mxu0 0
        %692 = vmatprep.subr.bf16.mxu0 0
        %693 = vmatpush1.bf16.msra.mxu0 0
        %694 = vmatprep.subr.bf16.mxu0 0
        %695 = vmatpush1.bf16.msra.mxu0 0
        %696 = vmatprep.subr.bf16.mxu0 0
        %697 = vmatpush1.bf16.msra.mxu0 0
        %698 = vmatprep.subr.bf16.mxu0 0
        %699 = vmatpush1.bf16.msra.mxu0 0
        %700 = vmatprep.subr.bf16.mxu0 0
        %701 = vmatpush1.bf16.msra.mxu0 0
        %702 = vmatprep.subr.bf16.mxu0 0
        %703 = vmatpush1.bf16.msra.mxu0 0
        %704 = vmatprep.subr.bf16.mxu0 0
        %705 = vmatpush1.bf16.msra.mxu0 0
        %706 = vmatprep.subr.bf16.mxu0 0
        %707 = vmatpush1.bf16.msra.mxu0 0
        %708 = vmatprep.subr.bf16.mxu0 0
        %709 = vmatpush1.bf16.msra.mxu0 0
        %710 = vmatprep.subr.bf16.mxu0 0
        %711 = vmatpush1.bf16.msra.mxu0 0
        %712 = vmatprep.subr.bf16.mxu0 0
        %713 = vmatpush1.bf16.msra.mxu0 0
        %714 = vmatprep.subr.bf16.mxu0 0
        %715 = vmatpush1.bf16.msra.mxu0 0
        %716 = vmatprep.subr.bf16.mxu0 0
        %717 = vmatpush1.bf16.msra.mxu0 0
        %718 = vmatprep.mubr.bf16.mxu0 0
        %719 = vmatmul.mubr.bf16.gmra.mrb[0].mxu0 %v681
        %v720 = vpop.f32.mrb[0].mxu0
        %v721 = vadd.f32 0.0, %v720
        %v722 = vpop.f32.mrb[0].mxu0
        %v723 = vpop.f32.mrb[0].mxu0
        %v724 = vpop.f32.mrb[0].mxu0
        %725 = vdwg.mxu0
        %vm726 = vcmp.gt.f32.partialorder %v676, 0.0
        %v727 = vsub.f32 0.0, %v676
        %v728 = vlog2.pop %v676
        %v729 = vmul.f32 %v728, 0.6931472
        %v730 = vmul.f32 %v727, %v729
        %v731 = vsel %vm726, %v730, 0.0
        %v732 = vsel %vm253, %v731, 0.0
        %733 = vadd.xlane.f32.xlu0 %v732
        %v734 = vpop.xlane.xlu0 %733
        %736 = vrot.lane.b32.xlu0 %v479, 8
        %v737 = vpop.permute.xlu0 %736
        %740 = vrot.lane.b32.xlu0 %v600, 16
        %v741 = vpop.permute.xlu0 %740
        %744 = vrot.lane.b32.xlu0 %v721, 24
        %v745 = vpop.permute.xlu0 %744
        %v747 = vsel %vm253, %v358, %v737
        %vm748 = vcmask 130048
        %v749 = vsel %vm748, %v747, %v741
        %vm750 = vcmask 195584
        %v751 = vsel %vm750, %v749, %v745
        %v752 = vpack.c.bf16 %v751, %v751
        %vm753 = vcmask 257024
        %754 = vst.msk [vmem:[%s224] sm:$0xf] %vm753, %v752
        %vm755 = vcmask 60416
        %756 = vst.msk [vmem:[%s206] sm:$0xf] %vm755, %v313
        %757 = vst.msk [vmem:[%s206 + $0x4] sm:$0xf] %vm755, %v435
        %758 = vst.msk [vmem:[%s206 + $0x8] sm:$0xf] %vm755, %v556
        %759 = vst.msk [vmem:[%s206 + $0xc] sm:$0xf] %vm755, %v677
        %vm760 = vcmask 7168
        %761 = vst.msk [vmem:[%s229] sm:$0xff] %vm760, %v371
        %762 = vst.msk [vmem:[%s229 + $0x8] sm:$0xff] %vm760, %v492
        %763 = vst.msk [vmem:[%s229 + $0x10] sm:$0xff] %vm760, %v613
        %764 = vst.msk [vmem:[%s229 + $0x18] sm:$0xff] %vm760, %v734
        %p765 = scmp.lt.s32.totalorder %s19, 1
        %s766 = scalar_select %p765, %s19, 1
        %s767 = smul.addr %s766, 4
        %s768 = scalar_lea.vmem %s2, %s767
        %s769 = sand.u32 %s105, 1
        %s770 = scalar_lea.sflag [#allocation3], %s769
        %s771 = sand.u32 %s105, 1
        %s772 = smul.addr %s771, 16
        %s773 = scalar_lea.vmem [#allocation2], %s772
        %p774 = scmp.lt.s32.totalorder %s19, 1
        %s775 = scalar_select %p774, %s19, 1
        %s776 = smul.addr %s775, 4
        %s777 = smul.addr %s776, 8
        %s778 = scalar_lea.vmem %s4, %s777
        // Predicated region
        $region29: #{run.35} parent=27 // pred_check
          %p779 = pneg %p89
        $region30: #{run.35} parent=27 // pred_check_branch
          %781 = sbr.rel (%p779) target = $region32
        $region31: #{run.35} parent=27 // pred_region
          _
        $region32: #{run.35} parent=27 // pred_fallthru
          _
        // Predicated region
        $region33: #{run.35} parent=27 // pred_check
          %p782 = pneg %p115
        $region34: #{run.35} parent=27 // pred_check_branch
          %784 = sbr.rel (%p782) target = $region36
        $region35: #{run.35} parent=27 // pred_region
          %s786 = ssub.s32 256, 256
          %787 = vsyncadd %s770, %s786
          %s788 = smul.addr %s19, 4
          %s789 = smul.addr %s788, 64
          %s790 = scalar_lea.hbm %s3, %s789
          %s791 = sshll.u32 %s773, 4
          %s792 = int_to_ptr.vmem [resolvable:$true] %s791
          %797 = dma.vmem_to_hbm [thread:$0]  %s792, 256, %s790, %s770, 64, 64, 4
        $region36: #{run.35} parent=27 // pred_fallthru
          _
        // Predicated region
        $region37: #{run.35} parent=27 // pred_check
          %p798 = pneg %p141
        $region38: #{run.35} parent=27 // pred_check_branch
          %800 = sbr.rel (%p798) target = $region40
        $region39: #{run.35} parent=27 // pred_region
          _
        $region40: #{run.35} parent=27 // pred_fallthru
          _
      $region28: #{run.35} parent=5 // pred_fallthru
        _
      %p801 = scmp.le.s32.totalorder 2, %s14
      // Predicated region
      $region41: #{run.35} parent=5 // pred_check
        %p802 = pneg %p801
      $region42: #{run.35} parent=5 // pred_check_branch
        %804 = sbr.rel (%p802) target = $region44
      $region43: #{run.35} parent=5 // pred_region
        %s805 = ssub.s32 %s14, 2
        // Predicated region
        $region45: #{run.35} parent=43 // pred_check
          %p806 = pneg %p95
        $region46: #{run.35} parent=43 // pred_check_branch
          %808 = sbr.rel (%p806) target = $region48
        $region47: #{run.35} parent=43 // pred_region
          %p809 = scmp.lt.s32.totalorder %s20, 1
          %s810 = scalar_select %p809, %s20, 1
          %s811 = smul.addr %s810, 4
          %s812 = scalar_lea.vmem %s2, %s811
        $region48: #{run.35} parent=43 // pred_fallthru
          _
        // Predicated region
        $region49: #{run.35} parent=43 // pred_check
          %p813 = pneg %p121
        $region50: #{run.35} parent=43 // pred_check_branch
          %815 = sbr.rel (%p813) target = $region52
        $region51: #{run.35} parent=43 // pred_region
          %s816 = sand.u32 %s106, 1
          %s817 = scalar_lea.sflag [#allocation3], %s816
          %s818 = sand.u32 %s106, 1
          %s819 = smul.addr %s818, 16
          %s820 = scalar_lea.vmem [#allocation2], %s819
          %821 = dma.done %s817, 256
        $region52: #{run.35} parent=43 // pred_fallthru
          _
        // Predicated region
        $region53: #{run.35} parent=43 // pred_check
          %p822 = pneg %p147
        $region54: #{run.35} parent=43 // pred_check_branch
          %824 = sbr.rel (%p822) target = $region56
        $region55: #{run.35} parent=43 // pred_region
          %p825 = scmp.lt.s32.totalorder %s20, 1
          %s826 = scalar_select %p825, %s20, 1
          %s827 = smul.addr %s826, 4
          %s828 = smul.addr %s827, 8
          %s829 = scalar_lea.vmem %s4, %s828
        $region56: #{run.35} parent=43 // pred_fallthru
          _
      $region44: #{run.35} parent=5 // pred_fallthru
        _
    $region6: #{run.35} parent=1 // loop_footer
      %s18 = sadd.s32 1, %s14
    $region7: #{run.35} parent=1 // loop_footer_branch
      %13 = sbr.rel target = $region3
    $region8: #{run.35} parent=1 // loop_exit
      _
    %830 = vsyncpa [#allocation3], 1
    %s831 = scalar_lea.sflag [#allocation3], 1
    %832 = vsyncpa %s831, 1

// kernel: run.36
$region0: #{run.36}
  #allocation0 [shape = 'u32[]', space=smem, size = 0x4, offset = 0x4, fixed_abs, tag = 'smem constant byte address 0x4 - core index']
  #allocation1 [shape = 'u32[144,128]{1,0:T(1,128)}', space=vmem, size = 0x12000, scoped, tag = 'internal scratch']
  #allocation2 [shape = 'f32[16,32]{1,0:T(8,128)}', space=vmem, size = 0x2000, scoped, tag = 'scratch operand']
  %s0 = inlined_call_operand.vmem [shape: bf16[16,32], index: 0, kind: input, shape index: {}]
  %s1 = inlined_call_operand.vmem [shape: bf16[32,32], index: 1, kind: input, shape index: {}]
  %s2 = inlined_call_operand.vmem [shape: f32[1,32], index: 2, kind: input, shape index: {}, may-alias: {2,5}]
  %s3 = inlined_call_operand.vmem [shape: bf16[16,32], index: 3, kind: input, shape index: {}]
  %s4 = inlined_call_operand.vmem [shape: f32[1,32], index: 4, kind: input, shape index: {}]
  %s5 = inlined_call_operand.vmem [shape: f32[1,32], index: 5, kind: input, shape index: {}, may-alias: {2,5}]
  %s6 = inlined_call_operand.vmem [shape: bf16[16,32], index: 6, kind: output, shape index: {}]
  %s7 = sld [smem:[#allocation0]]
  $region42: #{run.36} parent=0
    _
  %s9 = ssub.s32 1, %s7
  %s10 = scalar_select 0, %s9, %s7
  // Predicated region
  $region2: #{run.36} parent=0 // pred_check
    _
  $region3: #{run.36} parent=0 // pred_check_branch
    %12 = sbr.rel (0) target = $region5
  $region4: #{run.36} parent=0 // pred_region
    _
  $region5: #{run.36} parent=0 // pred_fallthru
    _
  // Predicated region
  $region6: #{run.36} parent=0 // pred_check
    _
  $region7: #{run.36} parent=0 // pred_check_branch
    %14 = sbr.rel (0) target = $region9
  $region8: #{run.36} parent=0 // pred_region
    _
  $region9: #{run.36} parent=0 // pred_fallthru
    _
  // Predicated region
  $region10: #{run.36} parent=0 // pred_check
    _
  $region11: #{run.36} parent=0 // pred_check_branch
    %16 = sbr.rel (0) target = $region13
  $region12: #{run.36} parent=0 // pred_region
    _
  $region13: #{run.36} parent=0 // pred_fallthru
    _
  // Predicated region
  $region14: #{run.36} parent=0 // pred_check
    _
  $region15: #{run.36} parent=0 // pred_check_branch
    %18 = sbr.rel (0) target = $region17
  $region16: #{run.36} parent=0 // pred_region
    _
  $region17: #{run.36} parent=0 // pred_fallthru
    _
  // Predicated region
  $region18: #{run.36} parent=0 // pred_check
    _
  $region19: #{run.36} parent=0 // pred_check_branch
    %20 = sbr.rel (0) target = $region21
  $region20: #{run.36} parent=0 // pred_region
    _
  $region21: #{run.36} parent=0 // pred_fallthru
    _
  // Predicated region
  $region22: #{run.36} parent=0 // pred_check
    _
  $region23: #{run.36} parent=0 // pred_check_branch
    %22 = sbr.rel (0) target = $region25
  $region24: #{run.36} parent=0 // pred_region
    _
  $region25: #{run.36} parent=0 // pred_fallthru
    _
  %p24 = scmp.eq.s32.totalorder 0, 0
  // Predicated region
  $region26: #{run.36} parent=0 // pred_check
    %p25 = pneg %p24
  $region27: #{run.36} parent=0 // pred_check_branch
    %27 = sbr.rel (%p25) target = $region29
  $region28: #{run.36} parent=0 // pred_region
    %vm28 = vcmask 261120
    %29 = vst.msk [vmem:[#allocation2] sm:$0xff] %vm28, 0.0
    %30 = vst.msk [vmem:[#allocation2 + $0x8] sm:$0xff] %vm28, 0.0
  $region29: #{run.36} parent=0 // pred_fallthru
    _
  %v31 = vld [vmem:[#allocation2] sm:$0xff]
  %v32 = vld [vmem:[#allocation2 + $0x8] sm:$0xff]
  %v33 = vld [vmem:[%s0] sm:$0xf]
  %v34 = vld [vmem:[%s0 + $0x4] sm:$0xf]
  %v35 = vld [vmem:[%s1] sm:$0xf]
  %v36 = vld [vmem:[%s1 + $0x4] sm:$0xf]
  %v37 = vld [vmem:[%s1 + $0x8] sm:$0xf]
  %v38 = vld [vmem:[%s1 + $0xc] sm:$0xf]
  %v41 = vunpack.c.l.b16 %v33
  %v42 = vunpack.c.l.b16 %v34
  %v43 = vpack.c.b16 %v42, %v41
  %v48 = vunpack.c.l.b16 %v35
  %v49 = vunpack.c.l.b16 %v36
  %v50 = vunpack.c.l.b16 %v37
  %v51 = vunpack.c.l.b16 %v38
  %v52 = vpack.c.b16 %v49, %v48
  %v53 = vpack.c.b16 %v51, %v50
  %vm56 = vcmask 261120
  %v58 = vsel %vm56, %v43, 0
  %60 = vmatprep.subr.bf16.mxu0 0
  %61 = vmatpush1.bf16.msra.mxu0 %v52
  %62 = vmatprep.subr.bf16.mxu0 0
  %63 = vmatpush1.bf16.msra.mxu0 %v53
  %64 = vmatprep.subr.bf16.mxu0 0
  %65 = vmatpush1.bf16.msra.mxu0 0
  %66 = vmatprep.subr.bf16.mxu0 0
  %67 = vmatpush1.bf16.msra.mxu0 0
  %68 = vmatprep.subr.bf16.mxu0 0
  %69 = vmatpush1.bf16.msra.mxu0 0
  %70 = vmatprep.subr.bf16.mxu0 0
  %71 = vmatpush1.bf16.msra.mxu0 0
  %72 = vmatprep.subr.bf16.mxu0 0
  %73 = vmatpush1.bf16.msra.mxu0 0
  %74 = vmatprep.subr.bf16.mxu0 0
  %75 = vmatpush1.bf16.msra.mxu0 0
  %76 = vmatprep.subr.bf16.mxu0 0
  %77 = vmatpush1.bf16.msra.mxu0 0
  %78 = vmatprep.subr.bf16.mxu0 0
  %79 = vmatpush1.bf16.msra.mxu0 0
  %80 = vmatprep.subr.bf16.mxu0 0
  %81 = vmatpush1.bf16.msra.mxu0 0
  %82 = vmatprep.subr.bf16.mxu0 0
  %83 = vmatpush1.bf16.msra.mxu0 0
  %84 = vmatprep.subr.bf16.mxu0 0
  %85 = vmatpush1.bf16.msra.mxu0 0
  %86 = vmatprep.subr.bf16.mxu0 0
  %87 = vmatpush1.bf16.msra.mxu0 0
  %88 = vmatprep.subr.bf16.mxu0 0
  %89 = vmatpush1.bf16.msra.mxu0 0
  %90 = vmatprep.subr.bf16.mxu0 0
  %91 = vmatpush1.bf16.msra.mxu0 0
  %92 = vmatprep.mubr.bf16.mxu0 0
  %93 = vmatmul.mubr.bf16.gmra.mrb[0].mxu0 %v58
  %v94 = vpop.f32.mrb[0].mxu0
  %v95 = vadd.f32 0.0, %v94
  %v96 = vpop.f32.mrb[0].mxu0
  %v97 = vpop.f32.mrb[0].mxu0
  %v98 = vadd.f32 0.0, %v97
  %v99 = vpop.f32.mrb[0].mxu0
  %100 = vdwg.mxu0
  %v101 = vadd.f32 %v31, %v95
  %v102 = vadd.f32 %v32, %v98
  %103 = vst.msk [vmem:[#allocation2] sm:$0xff] %vm56, %v101
  %104 = vst.msk [vmem:[#allocation2 + $0x8] sm:$0xff] %vm56, %v102
  // Predicated region
  $region30: #{run.36} parent=0 // pred_check
    %p105 = pneg %p24
  $region31: #{run.36} parent=0 // pred_check_branch
    %107 = sbr.rel (%p105) target = $region33
  $region32: #{run.36} parent=0 // pred_region
    %v108 = vld [vmem:[#allocation2] sm:$0xff]
    %v109 = vld [vmem:[#allocation2 + $0x8] sm:$0xff]
    %v110 = vld [vmem:[%s2] sm:$0x1]
    %v112 = vlaneseq
    %v113 = vshrl.u32 %v112, 7
    %v114 = vsub.s32 0, %v113
    %v115 = vrot.slane %v110, %v114
    %v117 = vadd.f32 %v108, %v115
    %v118 = vadd.f32 %v109, %v115
    %v119 = vld [vmem:[%s3] sm:$0xf]
    %v120 = vld [vmem:[%s3 + $0x4] sm:$0xf]
    %v121 = vunpack.c.l.bf16 %v119
    %v122 = vunpack.c.l.bf16 %v120
    %v123 = vadd.f32 %v117, %v121
    %v124 = vadd.f32 %v118, %v122
    %v125 = vsel %vm56, %v123, 0.0
    %126 = vadd.xlane.f32.xlu0 %v125
    %v127 = vpop.xlane.xlu0 %126
    %v128 = vsel %vm56, %v124, 0.0
    %129 = vadd.xlane.f32.xlu0 %v128
    %v130 = vpop.xlane.xlu0 %129
    %v131 = vrcp.pop 32.0
    %v132 = vmul.f32 %v127, %v131
    %v133 = vmul.f32 %v130, %v131
    %v134 = vsub.f32 %v123, %v132
    %v135 = vsub.f32 %v124, %v133
    %v136 = vmul.f32 %v134, %v134
    %v137 = vmul.f32 %v135, %v135
    %v138 = vsel %vm56, %v136, 0.0
    %139 = vadd.xlane.f32.xlu0 %v138
    %v140 = vpop.xlane.xlu0 %139
    %v141 = vsel %vm56, %v137, 0.0
    %142 = vadd.xlane.f32.xlu0 %v141
    %v143 = vpop.xlane.xlu0 %142
    %v144 = vmul.f32 %v140, %v131
    %v145 = vmul.f32 %v143, %v131
    %v146 = vadd.f32 %v144, 1e-05
    %v147 = vadd.f32 %v145, 1e-05
    %v148 = vrsqrt.pop %v146
    %v149 = vrsqrt.pop %v147
    %v150 = vmul.f32 %v134, %v148
    %v151 = vmul.f32 %v135, %v149
    %v152 = vld [vmem:[%s4] sm:$0x1]
    %v154 = vlaneseq
    %v155 = vshrl.u32 %v154, 7
    %v156 = vsub.s32 0, %v155
    %v157 = vrot.slane %v152, %v156
    %v159 = vmul.f32 %v150, %v157
    %v160 = vmul.f32 %v151, %v157
    %v161 = vld [vmem:[%s5] sm:$0x1]
    %v163 = vlaneseq
    %v164 = vshrl.u32 %v163, 7
    %v165 = vsub.s32 0, %v164
    %v166 = vrot.slane %v161, %v165
    %v168 = vadd.f32 %v159, %v166
    %v169 = vadd.f32 %v160, %v166
    %v170 = vpack.c.bf16 %v169, %v168
    %v172 = vunpack.c.l.b16 %v170
    %v173 = vunpack.c.h.b16 %v170
    %v174 = vpack.c.b16 %v172, %v172
    %v175 = vpack.c.b16 %v173, %v173
    %vm178 = vcmask 257024
    %179 = vst.msk [vmem:[%s6] sm:$0xf] %vm178, %v174
    %180 = vst.msk [vmem:[%s6 + $0x4] sm:$0xf] %vm178, %v175
  $region33: #{run.36} parent=0 // pred_fallthru
    _
  // Predicated region
  $region34: #{run.36} parent=0 // pred_check
    _
  $region35: #{run.36} parent=0 // pred_check_branch
    %182 = sbr.rel (0) target = $region37
  $region36: #{run.36} parent=0 // pred_region
    _
  $region37: #{run.36} parent=0 // pred_fallthru
    _
  // Predicated region
  $region38: #{run.36} parent=0 // pred_check
    _
  $region39: #{run.36} parent=0 // pred_check_branch
    %184 = sbr.rel (0) target = $region41
  $region40: #{run.36} parent=0 // pred_region
    _
  $region41: #{run.36} parent=0 // pred_fallthru
    _

// kernel: run.46
$region0: #{run.46}
  #allocation0 [shape = 'u32[]', space=smem, size = 0x4, offset = 0x4, fixed_abs, tag = 'smem constant byte address 0x4 - core index']
  #allocation1 [shape = 'u32[144,128]{1,0:T(1,128)}', space=vmem, size = 0x12000, scoped, tag = 'internal scratch']
  #allocation2 [shape = 'f32[16,64]{1,0:T(8,128)}', space=vmem, size = 0x2000, scoped, tag = 'scratch operand']
  %s0 = inlined_call_operand.vmem [shape: bf16[16,32], index: 0, kind: input, shape index: {}]
  %s1 = inlined_call_operand.vmem [shape: bf16[32,64], index: 1, kind: input, shape index: {}]
  %s2 = inlined_call_operand.vmem [shape: f32[1,64], index: 2, kind: input, shape index: {}]
  %s3 = inlined_call_operand.vmem [shape: bf16[16,64], index: 3, kind: output, shape index: {}]
  %s4 = sld [smem:[#allocation0]]
  $region30: #{run.46} parent=0
    _
  %s6 = ssub.s32 1, %s4
  %s7 = scalar_select 0, %s6, %s4
  // Predicated region
  $region2: #{run.46} parent=0 // pred_check
    _
  $region3: #{run.46} parent=0 // pred_check_branch
    %9 = sbr.rel (0) target = $region5
  $region4: #{run.46} parent=0 // pred_region
    _
  $region5: #{run.46} parent=0 // pred_fallthru
    _
  // Predicated region
  $region6: #{run.46} parent=0 // pred_check
    _
  $region7: #{run.46} parent=0 // pred_check_branch
    %11 = sbr.rel (0) target = $region9
  $region8: #{run.46} parent=0 // pred_region
    _
  $region9: #{run.46} parent=0 // pred_fallthru
    _
  // Predicated region
  $region10: #{run.46} parent=0 // pred_check
    _
  $region11: #{run.46} parent=0 // pred_check_branch
    %13 = sbr.rel (0) target = $region13
  $region12: #{run.46} parent=0 // pred_region
    _
  $region13: #{run.46} parent=0 // pred_fallthru
    _
  %p15 = scmp.eq.s32.totalorder 0, 0
  // Predicated region
  $region14: #{run.46} parent=0 // pred_check
    %p16 = pneg %p15
  $region15: #{run.46} parent=0 // pred_check_branch
    %18 = sbr.rel (%p16) target = $region17
  $region16: #{run.46} parent=0 // pred_region
    %vm19 = vcmask 523264
    %20 = vst.msk [vmem:[#allocation2] sm:$0xff] %vm19, 0.0
    %21 = vst.msk [vmem:[#allocation2 + $0x8] sm:$0xff] %vm19, 0.0
  $region17: #{run.46} parent=0 // pred_fallthru
    _
  %v22 = vld [vmem:[#allocation2] sm:$0xff]
  %v23 = vld [vmem:[#allocation2 + $0x8] sm:$0xff]
  %v24 = vld [vmem:[%s0] sm:$0xf]
  %v25 = vld [vmem:[%s0 + $0x4] sm:$0xf]
  %v26 = vld [vmem:[%s1] sm:$0xf]
  %v27 = vld [vmem:[%s1 + $0x4] sm:$0xf]
  %v28 = vld [vmem:[%s1 + $0x8] sm:$0xf]
  %v29 = vld [vmem:[%s1 + $0xc] sm:$0xf]
  %v32 = vunpack.c.l.b16 %v24
  %v33 = vunpack.c.l.b16 %v25
  %v34 = vpack.c.b16 %v33, %v32
  %v39 = vunpack.c.l.b16 %v26
  %v40 = vunpack.c.l.b16 %v27
  %v41 = vunpack.c.l.b16 %v28
  %v42 = vunpack.c.l.b16 %v29
  %v43 = vpack.c.b16 %v40, %v39
  %v44 = vpack.c.b16 %v42, %v41
  %vm47 = vcmask 261120
  %v49 = vsel %vm47, %v34, 0
  %51 = vmatprep.subr.bf16.mxu0 0
  %52 = vmatpush1.bf16.msra.mxu0 %v43
  %53 = vmatprep.subr.bf16.mxu0 0
  %54 = vmatpush1.bf16.msra.mxu0 %v44
  %55 = vmatprep.subr.bf16.mxu0 0
  %56 = vmatpush1.bf16.msra.mxu0 0
  %57 = vmatprep.subr.bf16.mxu0 0
  %58 = vmatpush1.bf16.msra.mxu0 0
  %59 = vmatprep.subr.bf16.mxu0 0
  %60 = vmatpush1.bf16.msra.mxu0 0
  %61 = vmatprep.subr.bf16.mxu0 0
  %62 = vmatpush1.bf16.msra.mxu0 0
  %63 = vmatprep.subr.bf16.mxu0 0
  %64 = vmatpush1.bf16.msra.mxu0 0
  %65 = vmatprep.subr.bf16.mxu0 0
  %66 = vmatpush1.bf16.msra.mxu0 0
  %67 = vmatprep.subr.bf16.mxu0 0
  %68 = vmatpush1.bf16.msra.mxu0 0
  %69 = vmatprep.subr.bf16.mxu0 0
  %70 = vmatpush1.bf16.msra.mxu0 0
  %71 = vmatprep.subr.bf16.mxu0 0
  %72 = vmatpush1.bf16.msra.mxu0 0
  %73 = vmatprep.subr.bf16.mxu0 0
  %74 = vmatpush1.bf16.msra.mxu0 0
  %75 = vmatprep.subr.bf16.mxu0 0
  %76 = vmatpush1.bf16.msra.mxu0 0
  %77 = vmatprep.subr.bf16.mxu0 0
  %78 = vmatpush1.bf16.msra.mxu0 0
  %79 = vmatprep.subr.bf16.mxu0 0
  %80 = vmatpush1.bf16.msra.mxu0 0
  %81 = vmatprep.subr.bf16.mxu0 0
  %82 = vmatpush1.bf16.msra.mxu0 0
  %83 = vmatprep.mubr.bf16.mxu0 0
  %84 = vmatmul.mubr.bf16.gmra.mrb[0].mxu0 %v49
  %v85 = vpop.f32.mrb[0].mxu0
  %v86 = vadd.f32 0.0, %v85
  %v87 = vpop.f32.mrb[0].mxu0
  %v88 = vpop.f32.mrb[0].mxu0
  %v89 = vadd.f32 0.0, %v88
  %v90 = vpop.f32.mrb[0].mxu0
  %91 = vdwg.mxu0
  %v92 = vadd.f32 %v22, %v86
  %v93 = vadd.f32 %v23, %v89
  %vm94 = vcmask 523264
  %95 = vst.msk [vmem:[#allocation2] sm:$0xff] %vm94, %v92
  %96 = vst.msk [vmem:[#allocation2 + $0x8] sm:$0xff] %vm94, %v93
  // Predicated region
  $region18: #{run.46} parent=0 // pred_check
    %p97 = pneg %p15
  $region19: #{run.46} parent=0 // pred_check_branch
    %99 = sbr.rel (%p97) target = $region21
  $region20: #{run.46} parent=0 // pred_region
    %v100 = vld [vmem:[#allocation2] sm:$0xff]
    %v101 = vld [vmem:[#allocation2 + $0x8] sm:$0xff]
    %v102 = vld [vmem:[%s2] sm:$0x1]
    %v104 = vlaneseq
    %v105 = vshrl.u32 %v104, 7
    %v106 = vsub.s32 0, %v105
    %v107 = vrot.slane %v102, %v106
    %v109 = vadd.f32 %v100, %v107
    %v110 = vadd.f32 %v101, %v107
    %v111 = vpack.c.bf16 %v110, %v109
    %v113 = vunpack.c.l.b16 %v111
    %v114 = vunpack.c.h.b16 %v111
    %v115 = vpack.c.b16 %v113, %v113
    %v116 = vpack.c.b16 %v114, %v114
    %vm119 = vcmask 519168
    %120 = vst.msk [vmem:[%s3] sm:$0xf] %vm119, %v115
    %121 = vst.msk [vmem:[%s3 + $0x4] sm:$0xf] %vm119, %v116
  $region21: #{run.46} parent=0 // pred_fallthru
    _
  // Predicated region
  $region22: #{run.46} parent=0 // pred_check
    _
  $region23: #{run.46} parent=0 // pred_check_branch
    %123 = sbr.rel (0) target = $region25
  $region24: #{run.46} parent=0 // pred_region
    _
  $region25: #{run.46} parent=0 // pred_fallthru
    _
  // Predicated region
  $region26: #{run.46} parent=0 // pred_check
    _
  $region27: #{run.46} parent=0 // pred_check_branch
    %125 = sbr.rel (0) target = $region29
  $region28: #{run.46} parent=0 // pred_region
    _
  $region29: #{run.46} parent=0 // pred_fallthru
    _

// kernel: run.29
$region0: #{run.29}
  #allocation0 [shape = 'u32[]', space=smem, size = 0x4, offset = 0x4, fixed_abs, tag = 'smem constant byte address 0x4 - core index']
  #allocation1 [shape = 'u32[144,128]{1,0:T(1,128)}', space=vmem, size = 0x12000, scoped, tag = 'internal scratch']
  %s0 = inlined_call_operand.vmem [shape: bf16[16,32], index: 0, kind: input, shape index: {}]
  %s1 = inlined_call_operand.vmem [shape: bf16[32,64], index: 1, kind: input, shape index: {}]
  %s2 = inlined_call_operand.vmem [shape: f32[1,64], index: 2, kind: input, shape index: {}]
  %s3 = inlined_call_operand.vmem [shape: bf16[64,32], index: 3, kind: input, shape index: {}]
  %s4 = inlined_call_operand.vmem [shape: f32[1,32], index: 4, kind: input, shape index: {}, may-alias: {4,6}]
  %s5 = inlined_call_operand.vmem [shape: f32[1,32], index: 5, kind: input, shape index: {}]
  %s6 = inlined_call_operand.vmem [shape: f32[1,32], index: 6, kind: input, shape index: {}, may-alias: {4,6}]
  %s7 = inlined_call_operand.vmem [shape: bf16[16,32], index: 7, kind: output, shape index: {}]
  %s8 = sld [smem:[#allocation0]]
  $region38: #{run.29} parent=0
    _
  %s10 = ssub.s32 1, %s8
  %s11 = scalar_select 0, %s10, %s8
  // Predicated region
  $region2: #{run.29} parent=0 // pred_check
    _
  $region3: #{run.29} parent=0 // pred_check_branch
    %13 = sbr.rel (0) target = $region5
  $region4: #{run.29} parent=0 // pred_region
    _
  $region5: #{run.29} parent=0 // pred_fallthru
    _
  // Predicated region
  $region6: #{run.29} parent=0 // pred_check
    _
  $region7: #{run.29} parent=0 // pred_check_branch
    %15 = sbr.rel (0) target = $region9
  $region8: #{run.29} parent=0 // pred_region
    _
  $region9: #{run.29} parent=0 // pred_fallthru
    _
  // Predicated region
  $region10: #{run.29} parent=0 // pred_check
    _
  $region11: #{run.29} parent=0 // pred_check_branch
    %17 = sbr.rel (0) target = $region13
  $region12: #{run.29} parent=0 // pred_region
    _
  $region13: #{run.29} parent=0 // pred_fallthru
    _
  // Predicated region
  $region14: #{run.29} parent=0 // pred_check
    _
  $region15: #{run.29} parent=0 // pred_check_branch
    %19 = sbr.rel (0) target = $region17
  $region16: #{run.29} parent=0 // pred_region
    _
  $region17: #{run.29} parent=0 // pred_fallthru
    _
  // Predicated region
  $region18: #{run.29} parent=0 // pred_check
    _
  $region19: #{run.29} parent=0 // pred_check_branch
    %21 = sbr.rel (0) target = $region21
  $region20: #{run.29} parent=0 // pred_region
    _
  $region21: #{run.29} parent=0 // pred_fallthru
    _
  // Predicated region
  $region22: #{run.29} parent=0 // pred_check
    _
  $region23: #{run.29} parent=0 // pred_check_branch
    %23 = sbr.rel (0) target = $region25
  $region24: #{run.29} parent=0 // pred_region
    _
  $region25: #{run.29} parent=0 // pred_fallthru
    _
  // Predicated region
  $region26: #{run.29} parent=0 // pred_check
    _
  $region27: #{run.29} parent=0 // pred_check_branch
    %25 = sbr.rel (0) target = $region29
  $region28: #{run.29} parent=0 // pred_region
    _
  $region29: #{run.29} parent=0 // pred_fallthru
    _
  %v27 = vld [vmem:[%s0] sm:$0xf]
  %v28 = vld [vmem:[%s0 + $0x4] sm:$0xf]
  %v29 = vld [vmem:[%s1] sm:$0xf]
  %v30 = vld [vmem:[%s1 + $0x4] sm:$0xf]
  %v31 = vld [vmem:[%s1 + $0x8] sm:$0xf]
  %v32 = vld [vmem:[%s1 + $0xc] sm:$0xf]
  %v33 = vld [vmem:[%s2] sm:$0x1]
  %v35 = vlaneseq
  %v36 = vshrl.u32 %v35, 7
  %v37 = vsub.s32 0, %v36
  %v38 = vrot.slane %v33, %v37
  %v42 = vunpack.c.l.b16 %v27
  %v43 = vunpack.c.l.b16 %v28
  %v44 = vpack.c.b16 %v43, %v42
  %v49 = vunpack.c.l.b16 %v29
  %v50 = vunpack.c.l.b16 %v30
  %v51 = vunpack.c.l.b16 %v31
  %v52 = vunpack.c.l.b16 %v32
  %v53 = vpack.c.b16 %v50, %v49
  %v54 = vpack.c.b16 %v52, %v51
  %vm57 = vcmask 261120
  %v59 = vsel %vm57, %v44, 0
  %61 = vmatprep.subr.bf16.mxu0 0
  %62 = vmatpush1.bf16.msra.mxu0 %v53
  %63 = vmatprep.subr.bf16.mxu0 0
  %64 = vmatpush1.bf16.msra.mxu0 %v54
  %65 = vmatprep.subr.bf16.mxu0 0
  %66 = vmatpush1.bf16.msra.mxu0 0
  %67 = vmatprep.subr.bf16.mxu0 0
  %68 = vmatpush1.bf16.msra.mxu0 0
  %69 = vmatprep.subr.bf16.mxu0 0
  %70 = vmatpush1.bf16.msra.mxu0 0
  %71 = vmatprep.subr.bf16.mxu0 0
  %72 = vmatpush1.bf16.msra.mxu0 0
  %73 = vmatprep.subr.bf16.mxu0 0
  %74 = vmatpush1.bf16.msra.mxu0 0
  %75 = vmatprep.subr.bf16.mxu0 0
  %76 = vmatpush1.bf16.msra.mxu0 0
  %77 = vmatprep.subr.bf16.mxu0 0
  %78 = vmatpush1.bf16.msra.mxu0 0
  %79 = vmatprep.subr.bf16.mxu0 0
  %80 = vmatpush1.bf16.msra.mxu0 0
  %81 = vmatprep.subr.bf16.mxu0 0
  %82 = vmatpush1.bf16.msra.mxu0 0
  %83 = vmatprep.subr.bf16.mxu0 0
  %84 = vmatpush1.bf16.msra.mxu0 0
  %85 = vmatprep.subr.bf16.mxu0 0
  %86 = vmatpush1.bf16.msra.mxu0 0
  %87 = vmatprep.subr.bf16.mxu0 0
  %88 = vmatpush1.bf16.msra.mxu0 0
  %89 = vmatprep.subr.bf16.mxu0 0
  %90 = vmatpush1.bf16.msra.mxu0 0
  %91 = vmatprep.subr.bf16.mxu0 0
  %92 = vmatpush1.bf16.msra.mxu0 0
  %93 = vmatprep.mubr.bf16.mxu0 0
  %94 = vmatmul.mubr.bf16.gmra.mrb[0].mxu0 %v59
  %v95 = vpop.f32.mrb[0].mxu0
  %v96 = vadd.f32 %v38, %v95
  %v97 = vpop.f32.mrb[0].mxu0
  %v98 = vpop.f32.mrb[0].mxu0
  %v99 = vadd.f32 %v38, %v98
  %v100 = vpop.f32.mrb[0].mxu0
  %101 = vdwg.mxu0
  %v102 = vmax.f32 %v96, 0.0
  %v103 = vmax.f32 %v99, 0.0
  %v104 = vpack.c.bf16 %v103, %v102
  %v105 = vld [vmem:[%s3] sm:$0xf]
  %v106 = vld [vmem:[%s3 + $0x4] sm:$0xf]
  %v107 = vld [vmem:[%s3 + $0x8] sm:$0xf]
  %v108 = vld [vmem:[%s3 + $0xc] sm:$0xf]
  %v109 = vld [vmem:[%s3 + $0x10] sm:$0xf]
  %v110 = vld [vmem:[%s3 + $0x14] sm:$0xf]
  %v111 = vld [vmem:[%s3 + $0x18] sm:$0xf]
  %v112 = vld [vmem:[%s3 + $0x1c] sm:$0xf]
  %v113 = vld [vmem:[%s4] sm:$0x1]
  %v115 = vlaneseq
  %v116 = vshrl.u32 %v115, 7
  %v117 = vsub.s32 0, %v116
  %v118 = vrot.slane %v113, %v117
  %v128 = vunpack.c.l.b16 %v105
  %v129 = vunpack.c.l.b16 %v106
  %v130 = vunpack.c.l.b16 %v107
  %v131 = vunpack.c.l.b16 %v108
  %v132 = vunpack.c.l.b16 %v109
  %v133 = vunpack.c.l.b16 %v110
  %v134 = vunpack.c.l.b16 %v111
  %v135 = vunpack.c.l.b16 %v112
  %v136 = vpack.c.b16 %v129, %v128
  %v137 = vpack.c.b16 %v131, %v130
  %v138 = vpack.c.b16 %v133, %v132
  %v139 = vpack.c.b16 %v135, %v134
  %vm144 = vcmask 523264
  %v146 = vsel %vm144, %v104, 0
  %148 = vmatprep.subr.bf16.mxu0 0
  %149 = vmatpush1.bf16.msra.mxu0 %v136
  %150 = vmatprep.subr.bf16.mxu0 0
  %151 = vmatpush1.bf16.msra.mxu0 %v137
  %152 = vmatprep.subr.bf16.mxu0 0
  %153 = vmatpush1.bf16.msra.mxu0 %v138
  %154 = vmatprep.subr.bf16.mxu0 0
  %155 = vmatpush1.bf16.msra.mxu0 %v139
  %156 = vmatprep.subr.bf16.mxu0 0
  %157 = vmatpush1.bf16.msra.mxu0 0
  %158 = vmatprep.subr.bf16.mxu0 0
  %159 = vmatpush1.bf16.msra.mxu0 0
  %160 = vmatprep.subr.bf16.mxu0 0
  %161 = vmatpush1.bf16.msra.mxu0 0
  %162 = vmatprep.subr.bf16.mxu0 0
  %163 = vmatpush1.bf16.msra.mxu0 0
  %164 = vmatprep.subr.bf16.mxu0 0
  %165 = vmatpush1.bf16.msra.mxu0 0
  %166 = vmatprep.subr.bf16.mxu0 0
  %167 = vmatpush1.bf16.msra.mxu0 0
  %168 = vmatprep.subr.bf16.mxu0 0
  %169 = vmatpush1.bf16.msra.mxu0 0
  %170 = vmatprep.subr.bf16.mxu0 0
  %171 = vmatpush1.bf16.msra.mxu0 0
  %172 = vmatprep.subr.bf16.mxu0 0
  %173 = vmatpush1.bf16.msra.mxu0 0
  %174 = vmatprep.subr.bf16.mxu0 0
  %175 = vmatpush1.bf16.msra.mxu0 0
  %176 = vmatprep.subr.bf16.mxu0 0
  %177 = vmatpush1.bf16.msra.mxu0 0
  %178 = vmatprep.subr.bf16.mxu0 0
  %179 = vmatpush1.bf16.msra.mxu0 0
  %180 = vmatprep.mubr.bf16.mxu0 0
  %181 = vmatmul.mubr.bf16.gmra.mrb[0].mxu0 %v146
  %v182 = vpop.f32.mrb[0].mxu0
  %v183 = vadd.f32 %v118, %v182
  %v184 = vpop.f32.mrb[0].mxu0
  %v185 = vpop.f32.mrb[0].mxu0
  %v186 = vadd.f32 %v118, %v185
  %v187 = vpop.f32.mrb[0].mxu0
  %188 = vdwg.mxu0
  %v189 = vunpack.c.l.bf16 %v27
  %v190 = vunpack.c.l.bf16 %v28
  %v191 = vadd.f32 %v183, %v189
  %v192 = vadd.f32 %v186, %v190
  %v193 = vsel %vm57, %v191, 0.0
  %194 = vadd.xlane.f32.xlu0 %v193
  %v195 = vpop.xlane.xlu0 %194
  %v196 = vsel %vm57, %v192, 0.0
  %197 = vadd.xlane.f32.xlu0 %v196
  %v198 = vpop.xlane.xlu0 %197
  %v199 = vrcp.pop 32.0
  %v200 = vmul.f32 %v195, %v199
  %v201 = vmul.f32 %v198, %v199
  %v202 = vsub.f32 %v191, %v200
  %v203 = vsub.f32 %v192, %v201
  %v204 = vmul.f32 %v202, %v202
  %v205 = vmul.f32 %v203, %v203
  %v206 = vsel %vm57, %v204, 0.0
  %207 = vadd.xlane.f32.xlu0 %v206
  %v208 = vpop.xlane.xlu0 %207
  %v209 = vsel %vm57, %v205, 0.0
  %210 = vadd.xlane.f32.xlu0 %v209
  %v211 = vpop.xlane.xlu0 %210
  %v212 = vmul.f32 %v208, %v199
  %v213 = vmul.f32 %v211, %v199
  %v214 = vadd.f32 %v212, 1e-05
  %v215 = vadd.f32 %v213, 1e-05
  %v216 = vrsqrt.pop %v214
  %v217 = vrsqrt.pop %v215
  %v218 = vmul.f32 %v202, %v216
  %v219 = vmul.f32 %v203, %v217
  %v220 = vld [vmem:[%s5] sm:$0x1]
  %v222 = vlaneseq
  %v223 = vshrl.u32 %v222, 7
  %v224 = vsub.s32 0, %v223
  %v225 = vrot.slane %v220, %v224
  %v227 = vmul.f32 %v218, %v225
  %v228 = vmul.f32 %v219, %v225
  %v229 = vld [vmem:[%s6] sm:$0x1]
  %v231 = vlaneseq
  %v232 = vshrl.u32 %v231, 7
  %v233 = vsub.s32 0, %v232
  %v234 = vrot.slane %v229, %v233
  %v236 = vadd.f32 %v227, %v234
  %v237 = vadd.f32 %v228, %v234
  %v238 = vpack.c.bf16 %v237, %v236
  %v240 = vunpack.c.l.b16 %v238
  %v241 = vunpack.c.h.b16 %v238
  %v242 = vpack.c.b16 %v240, %v240
  %v243 = vpack.c.b16 %v241, %v241
  %vm246 = vcmask 257024
  %247 = vst.msk [vmem:[%s7] sm:$0xf] %vm246, %v242
  %248 = vst.msk [vmem:[%s7 + $0x4] sm:$0xf] %vm246, %v243
  // Predicated region
  $region30: #{run.29} parent=0 // pred_check
    _
  $region31: #{run.29} parent=0 // pred_check_branch
    %250 = sbr.rel (0) target = $region33
  $region32: #{run.29} parent=0 // pred_region
    _
  $region33: #{run.29} parent=0 // pred_fallthru
    _
  // Predicated region
  $region34: #{run.29} parent=0 // pred_check
    _
  $region35: #{run.29} parent=0 // pred_check_branch
    %252 = sbr.rel (0) target = $region37
  $region36: #{run.29} parent=0 // pred_region
    _
  $region37: #{run.29} parent=0 // pred_fallthru
    _

// kernel: run.27
$region0: #{run.27}
  #allocation0 [shape = 'u32[]', space=smem, size = 0x4, offset = 0x4, fixed_abs, tag = 'smem constant byte address 0x4 - core index']
  #allocation1 [shape = 'u32[144,128]{1,0:T(1,128)}', space=vmem, size = 0x12000, scoped, tag = 'internal scratch']
  %s0 = inlined_call_operand.vmem [shape: bf16[2,8,96], index: 0, kind: input, shape index: {}]
  %s1 = inlined_call_operand.vmem [shape: f32[2,1,8], index: 1, kind: input, shape index: {}]
  %s2 = inlined_call_operand.vmem [shape: bf16[2,8,32], index: 2, kind: output, shape index: {0}]
  %s3 = inlined_call_operand.hbm [shape: bf16[2,4,8,8], index: 3, kind: output, shape index: {1}]
  %s4 = inlined_call_operand.vmem [shape: f32[2,4,8,1], index: 4, kind: output, shape index: {2}]
  %5 = xla_tuple %s2, %s3, %s4
  %s6 = sld [smem:[#allocation0]]
  $region57: #{run.27} parent=0
    _
  %s8 = ssub.s32 1, %s6
  %s9 = scalar_select 0, %s8, %s6
  $region1: #{run.27} parent=0
    #allocation2 [shape = 'u8[16384]{0}', space=vmem, size = 0x4000, scoped, tag = 'output window, operand 1']
    #allocation3 [shape = 's32[2]{0}', space=sflag, size = 0x8, scoped, tag = 'scoped memory for run.27']
    %10 = vsyncpa [#allocation3], 0
    %s11 = scalar_lea.sflag [#allocation3], 1
    %12 = vsyncpa %s11, 0
    loop: start=0, step=1, limit=4
    $region2: #{run.27} parent=1 // loop_pre_header
      _
    $region3: #{run.27} parent=1 // loop_header
      %s14 = sphi 0, %s18
      %p15 = scmp.ge.s32.totalorder %s14, 4
      %s24 = sphi 0, %s26
      %s27 = sphi 0, %s24
      %s28 = sphi 0, %s27
      %s44 = sphi 0, %s28
      %s50 = sphi 0, %s52
      %s53 = sphi 0, %s50
      %s54 = sphi 0, %s53
      %s70 = sphi 0, %s54
      %s76 = sphi 0, %s78
      %s79 = sphi 0, %s76
      %s80 = sphi 0, %s79
      %s96 = sphi 0, %s80
      %s102 = sphi 0, %s104
      %s105 = sphi 0, %s102
      %s106 = sphi 0, %s105
      %s122 = sphi 0, %s106
      %s128 = sphi 0, %s130
      %s131 = sphi 0, %s128
      %s132 = sphi 0, %s131
      %s148 = sphi 0, %s132
    $region4: #{run.27} parent=1 // loop_header_branch
      %17 = sbr.rel (%p15) target = $region8
    $region5: #{run.27} parent=1 // loop_body
      %s19 = ssub.s32 %s14, 1
      %s20 = ssub.s32 %s14, 2
      %s21 = sadd.s32 %s14, 1
      %s22 = ssub.s32 %s14, %s21
      %p23 = scmp.eq.s32.totalorder %s22, 0
      %s25 = sadd.s32 %s24, 1
      %s26 = scalar_select %p23, %s24, %s25
      %p29 = pneg %p23
      %p30 = scmp.eq.s32.totalorder %s14, 1
      %p31 = por %p29, %p30
      %p32 = scmp.ne.s32.totalorder %s24, %s27
      %p33 = scmp.eq.s32.totalorder %s14, 0
      %p34 = por %p32, %p33
      %p35 = scmp.ne.s32.totalorder %s24, %s27
      %p36 = scmp.eq.s32.totalorder %s19, 1
      %p37 = por %p35, %p36
      %p38 = scmp.ne.s32.totalorder %s27, %s28
      %p39 = scmp.eq.s32.totalorder %s19, 0
      %p40 = por %p38, %p39
      %p41 = scmp.ne.s32.totalorder %s27, %s28
      %p42 = scmp.eq.s32.totalorder %s20, 1
      %p43 = por %p41, %p42
      %p45 = scmp.ne.s32.totalorder %s28, %s44
      %p46 = scmp.eq.s32.totalorder %s20, 0
      %p47 = por %p45, %p46
      %s48 = ssub.s32 %s14, %s21
      %p49 = scmp.eq.s32.totalorder %s48, 0
      %s51 = sadd.s32 %s50, 1
      %s52 = scalar_select %p49, %s50, %s51
      %p55 = pneg %p49
      %p56 = scmp.eq.s32.totalorder %s14, 1
      %p57 = por %p55, %p56
      %p58 = scmp.ne.s32.totalorder %s50, %s53
      %p59 = scmp.eq.s32.totalorder %s14, 0
      %p60 = por %p58, %p59
      %p61 = scmp.ne.s32.totalorder %s50, %s53
      %p62 = scmp.eq.s32.totalorder %s19, 1
      %p63 = por %p61, %p62
      %p64 = scmp.ne.s32.totalorder %s53, %s54
      %p65 = scmp.eq.s32.totalorder %s19, 0
      %p66 = por %p64, %p65
      %p67 = scmp.ne.s32.totalorder %s53, %s54
      %p68 = scmp.eq.s32.totalorder %s20, 1
      %p69 = por %p67, %p68
      %p71 = scmp.ne.s32.totalorder %s54, %s70
      %p72 = scmp.eq.s32.totalorder %s20, 0
      %p73 = por %p71, %p72
      %s74 = ssub.s32 %s14, %s21
      %p75 = scmp.eq.s32.totalorder %s74, 0
      %s77 = sadd.s32 %s76, 1
      %s78 = scalar_select %p75, %s76, %s77
      %p81 = pneg %p75
      %p82 = scmp.eq.s32.totalorder %s14, 1
      %p83 = por %p81, %p82
      %p84 = scmp.ne.s32.totalorder %s76, %s79
      %p85 = scmp.eq.s32.totalorder %s14, 0
      %p86 = por %p84, %p85
      %p87 = scmp.ne.s32.totalorder %s76, %s79
      %p88 = scmp.eq.s32.totalorder %s19, 1
      %p89 = por %p87, %p88
      %p90 = scmp.ne.s32.totalorder %s79, %s80
      %p91 = scmp.eq.s32.totalorder %s19, 0
      %p92 = por %p90, %p91
      %p93 = scmp.ne.s32.totalorder %s79, %s80
      %p94 = scmp.eq.s32.totalorder %s20, 1
      %p95 = por %p93, %p94
      %p97 = scmp.ne.s32.totalorder %s80, %s96
      %p98 = scmp.eq.s32.totalorder %s20, 0
      %p99 = por %p97, %p98
      %s100 = ssub.s32 %s14, %s21
      %p101 = scmp.eq.s32.totalorder %s100, 0
      %s103 = sadd.s32 %s102, 1
      %s104 = scalar_select %p101, %s102, %s103
      %p107 = pneg %p101
      %p108 = scmp.eq.s32.totalorder %s14, 1
      %p109 = por %p107, %p108
      %p110 = scmp.ne.s32.totalorder %s102, %s105
      %p111 = scmp.eq.s32.totalorder %s14, 0
      %p112 = por %p110, %p111
      %p113 = scmp.ne.s32.totalorder %s102, %s105
      %p114 = scmp.eq.s32.totalorder %s19, 1
      %p115 = por %p113, %p114
      %p116 = scmp.ne.s32.totalorder %s105, %s106
      %p117 = scmp.eq.s32.totalorder %s19, 0
      %p118 = por %p116, %p117
      %p119 = scmp.ne.s32.totalorder %s105, %s106
      %p120 = scmp.eq.s32.totalorder %s20, 1
      %p121 = por %p119, %p120
      %p123 = scmp.ne.s32.totalorder %s106, %s122
      %p124 = scmp.eq.s32.totalorder %s20, 0
      %p125 = por %p123, %p124
      %s126 = ssub.s32 %s14, %s21
      %p127 = scmp.eq.s32.totalorder %s126, 0
      %s129 = sadd.s32 %s128, 1
      %s130 = scalar_select %p127, %s128, %s129
      %p133 = pneg %p127
      %p134 = scmp.eq.s32.totalorder %s14, 1
      %p135 = por %p133, %p134
      %p136 = scmp.ne.s32.totalorder %s128, %s131
      %p137 = scmp.eq.s32.totalorder %s14, 0
      %p138 = por %p136, %p137
      %p139 = scmp.ne.s32.totalorder %s128, %s131
      %p140 = scmp.eq.s32.totalorder %s19, 1
      %p141 = por %p139, %p140
      %p142 = scmp.ne.s32.totalorder %s131, %s132
      %p143 = scmp.eq.s32.totalorder %s19, 0
      %p144 = por %p142, %p143
      %p145 = scmp.ne.s32.totalorder %s131, %s132
      %p146 = scmp.eq.s32.totalorder %s20, 1
      %p147 = por %p145, %p146
      %p149 = scmp.ne.s32.totalorder %s132, %s148
      %p150 = scmp.eq.s32.totalorder %s20, 0
      %p151 = por %p149, %p150
      %p152 = scmp.le.s32.totalorder 1, %s14
      %p153 = scmp.lt.s32.totalorder %s14, 3
      %p154 = pnand %p152, %p153
      %p155 = pneg %p154
      // Predicated region
      $region9: #{run.27} parent=5 // pred_check
        _
      $region10: #{run.27} parent=5 // pred_check_branch
        %157 = sbr.rel (%p154) target = $region12
      $region11: #{run.27} parent=5 // pred_region
        %s158 = ssub.s32 %s14, 1
      $region12: #{run.27} parent=5 // pred_fallthru
        _
      %p159 = scmp.lt.s32.totalorder %s14, 2
      // Predicated region
      $region13: #{run.27} parent=5 // pred_check
        %p160 = pneg %p159
      $region14: #{run.27} parent=5 // pred_check_branch
        %162 = sbr.rel (%p160) target = $region16
      $region15: #{run.27} parent=5 // pred_region
        // Predicated region
        $region17: #{run.27} parent=15 // pred_check
          %p163 = pneg %p34
        $region18: #{run.27} parent=15 // pred_check_branch
          %165 = sbr.rel (%p163) target = $region20
        $region19: #{run.27} parent=15 // pred_region
          %p166 = scmp.lt.s32.totalorder %s14, 1
          %s167 = scalar_select %p166, %s14, 1
          %s168 = smul.addr %s167, 4
          %s169 = scalar_lea.vmem %s0, %s168
        $region20: #{run.27} parent=15 // pred_fallthru
          _
        // Predicated region
        $region21: #{run.27} parent=15 // pred_check
          %p170 = pneg %p60
        $region22: #{run.27} parent=15 // pred_check_branch
          %172 = sbr.rel (%p170) target = $region24
        $region23: #{run.27} parent=15 // pred_region
          %p173 = scmp.lt.s32.totalorder %s14, 1
          %s174 = scalar_select %p173, %s14, 1
          %s175 = scalar_lea.vmem %s1, %s174
        $region24: #{run.27} parent=15 // pred_fallthru
          _
      $region16: #{run.27} parent=5 // pred_fallthru
        _
      %p176 = scmp.le.s32.totalorder 1, %s14
      %p177 = scmp.lt.s32.totalorder %s14, 3
      %p178 = pnand %p176, %p177
      %p179 = pneg %p178
      // Predicated region
      $region25: #{run.27} parent=5 // pred_check
        _
      $region26: #{run.27} parent=5 // pred_check_branch
        %181 = sbr.rel (%p178) target = $region28
      $region27: #{run.27} parent=5 // pred_region
        %s182 = ssub.s32 %s14, 1
        %p183 = scmp.lt.s32.totalorder %s19, 1
        %s184 = scalar_select %p183, %s19, 1
        %s185 = smul.addr %s184, 4
        %s186 = scalar_lea.vmem %s0, %s185
        %p187 = pneg %p40
        %p188 = pneg %p37
        %p189 = scmp.lt.s32.totalorder %s19, 1
        %s190 = scalar_select %p189, %s19, 1
        %s191 = scalar_lea.vmem %s1, %s190
        %p192 = pneg %p66
        %p193 = pneg %p63
        %p194 = pneg %p92
        %p195 = pneg %p89
        %p196 = scmp.lt.s32.totalorder %s19, 1
        %s197 = scalar_select %p196, %s19, 1
        %s198 = smul.addr %s197, 4
        %s199 = scalar_lea.vmem %s2, %s198
        %p200 = pneg %p118
        %p201 = pneg %p115
        %s202 = sand.u32 %s105, 1
        %s203 = scalar_lea.sflag [#allocation3], %s202
        %s204 = sand.u32 %s105, 1
        %s205 = smul.addr %s204, 16
        %s206 = scalar_lea.vmem [#allocation2], %s205
        %p207 = pneg %p144
        %p208 = pneg %p141
        %p209 = scmp.lt.s32.totalorder %s19, 1
        %s210 = scalar_select %p209, %s19, 1
        %s211 = smul.addr %s210, 4
        %s212 = smul.addr %s211, 8
        %s213 = scalar_lea.vmem %s4, %s212
        %p214 = scmp.lt.s32.totalorder %s19, 1
        %s215 = scalar_select %p214, %s19, 1
        %s216 = smul.addr %s215, 4
        %s217 = scalar_lea.vmem %s0, %s216
        %p218 = scmp.lt.s32.totalorder %s19, 1
        %s219 = scalar_select %p218, %s19, 1
        %s220 = scalar_lea.vmem %s1, %s219
        %p221 = scmp.lt.s32.totalorder %s19, 1
        %s222 = scalar_select %p221, %s19, 1
        %s223 = smul.addr %s222, 4
        %s224 = scalar_lea.vmem %s2, %s223
        %p225 = scmp.lt.s32.totalorder %s19, 1
        %s226 = scalar_select %p225, %s19, 1
        %s227 = smul.addr %s226, 4
        %s228 = smul.addr %s227, 8
        %s229 = scalar_lea.vmem %s4, %s228
        %v231 = vld [vmem:[%s217] sm:$0xf]
        %v232 = vld [vmem:[%s220] sm:$0x1]
        %vm233 = vcmp.gt.f32.partialorder %v232, 0.0
        %v234 = vsel %vm233, 0.0, -1e+09
        %v236 = vunpack.c.l.b16 %v231
        %v237 = vpack.c.b16 %v236, %v236
        %238 = vrot.lane.b32.xlu0 %v237, 96
        %v239 = vpop.permute.xlu0 %238
        %vm240 = vcmask 64512
        %v242 = vsel %vm240, %v231, 0
        %v245 = vsel %vm240, %v239, 0
        %247 = vmatprep.subr.bf16.mxu0 0
        %248 = vmatpush1.bf16.xpose.msra.mxu0 %v245
        %249 = vmatprep.subr.bf16.mxu0 0
        %250 = vmatpush1.bf16.xpose.msra.mxu0 0
        %251 = vmatprep.subr.bf16.mxu0 0
        %252 = vmatpush1.bf16.xpose.msra.mxu0 0
        %253 = vmatprep.subr.bf16.mxu0 0
        %254 = vmatpush1.bf16.xpose.msra.mxu0 0
        %255 = vmatprep.subr.bf16.mxu0 0
        %256 = vmatpush1.bf16.xpose.msra.mxu0 0
        %257 = vmatprep.subr.bf16.mxu0 0
        %258 = vmatpush1.bf16.xpose.msra.mxu0 0
        %259 = vmatprep.subr.bf16.mxu0 0
        %260 = vmatpush1.bf16.xpose.msra.mxu0 0
        %261 = vmatprep.subr.bf16.mxu0 0
        %262 = vmatpush1.bf16.xpose.msra.mxu0 0
        %263 = vmatprep.subr.bf16.mxu0 0
        %264 = vmatpush1.bf16.xpose.msra.mxu0 0
        %265 = vmatprep.subr.bf16.mxu0 0
        %266 = vmatpush1.bf16.xpose.msra.mxu0 0
        %267 = vmatprep.subr.bf16.mxu0 0
        %268 = vmatpush1.bf16.xpose.msra.mxu0 0
        %269 = vmatprep.subr.bf16.mxu0 0
        %270 = vmatpush1.bf16.xpose.msra.mxu0 0
        %271 = vmatprep.subr.bf16.mxu0 0
        %272 = vmatpush1.bf16.xpose.msra.mxu0 0
        %273 = vmatprep.subr.bf16.mxu0 0
        %274 = vmatpush1.bf16.xpose.msra.mxu0 0
        %275 = vmatprep.subr.bf16.mxu0 0
        %276 = vmatpush1.bf16.xpose.msra.mxu0 0
        %277 = vmatprep.subr.bf16.mxu0 0
        %278 = vmatpush1.bf16.xpose.msra.mxu0 0
        %279 = vmatprep.mubr.bf16.mxu0 0
        %280 = vmatmul.mubr.bf16.gmra.mrb[0].mxu0 %v242
        %v281 = vpop.f32.mrb[0].mxu0
        %v282 = vadd.f32 0.0, %v281
        %v283 = vpop.f32.mrb[0].mxu0
        %v284 = vpop.f32.mrb[0].mxu0
        %v285 = vpop.f32.mrb[0].mxu0
        %286 = vdwg.mxu0
        %v287 = vmul.f32 %v282, 0.35355338
        %v289 = vlaneseq
        %v290 = vshrl.u32 %v289, 7
        %v291 = vsub.s32 0, %v290
        %v292 = vrot.slane %v234, %v291
        %v294 = vadd.f32 %v287, %v292
        %v295 = vsel %vm240, %v294, -inf
        %296 = vmax.xlane.f32.xlu0 %v295
        %v297 = vpop.xlane.xlu0 %296
        %v298 = vsub.f32 %v294, %v297
        %v299 = vmul.f32 %v298, 1.442695
        %v300 = vpow.pop %v299
        %v301 = vsel %vm240, %v300, 0.0
        %302 = vadd.xlane.f32.xlu0 %v301
        %v303 = vpop.xlane.xlu0 %302
        %v304 = vrcp.pop %v303
        %v305 = vmul.f32 %v300, %v304
        %v306 = vpack.c.bf16 %v305, %v305
        %307 = vrot.lane.b32.xlu0 %v237, 64
        %v308 = vpop.permute.xlu0 %307
        %v310 = vsel %vm240, %v306, 0
        %vm312 = vcmask 1043456
        %v314 = vsel %vm312, %v308, 0
        %316 = vmatprep.subr.bf16.mxu0 0
        %317 = vmatpush1.bf16.msra.mxu0 %v314
        %318 = vmatprep.subr.bf16.mxu0 0
        %319 = vmatpush1.bf16.msra.mxu0 0
        %320 = vmatprep.subr.bf16.mxu0 0
        %321 = vmatpush1.bf16.msra.mxu0 0
        %322 = vmatprep.subr.bf16.mxu0 0
        %323 = vmatpush1.bf16.msra.mxu0 0
        %324 = vmatprep.subr.bf16.mxu0 0
        %325 = vmatpush1.bf16.msra.mxu0 0
        %326 = vmatprep.subr.bf16.mxu0 0
        %327 = vmatpush1.bf16.msra.mxu0 0
        %328 = vmatprep.subr.bf16.mxu0 0
        %329 = vmatpush1.bf16.msra.mxu0 0
        %330 = vmatprep.subr.bf16.mxu0 0
        %331 = vmatpush1.bf16.msra.mxu0 0
        %332 = vmatprep.subr.bf16.mxu0 0
        %333 = vmatpush1.bf16.msra.mxu0 0
        %334 = vmatprep.subr.bf16.mxu0 0
        %335 = vmatpush1.bf16.msra.mxu0 0
        %336 = vmatprep.subr.bf16.mxu0 0
        %337 = vmatpush1.bf16.msra.mxu0 0
        %338 = vmatprep.subr.bf16.mxu0 0
        %339 = vmatpush1.bf16.msra.mxu0 0
        %340 = vmatprep.subr.bf16.mxu0 0
        %341 = vmatpush1.bf16.msra.mxu0 0
        %342 = vmatprep.subr.bf16.mxu0 0
        %343 = vmatpush1.bf16.msra.mxu0 0
        %344 = vmatprep.subr.bf16.mxu0 0
        %345 = vmatpush1.bf16.msra.mxu0 0
        %346 = vmatprep.subr.bf16.mxu0 0
        %347 = vmatpush1.bf16.msra.mxu0 0
        %348 = vmatprep.mubr.bf16.mxu0 0
        %349 = vmatmul.mubr.bf16.gmra.mrb[0].mxu0 %v310
        %v350 = vpop.f32.mrb[0].mxu0
        %v351 = vadd.f32 0.0, %v350
        %v352 = vpop.f32.mrb[0].mxu0
        %v353 = vpop.f32.mrb[0].mxu0
        %v354 = vpop.f32.mrb[0].mxu0
        %355 = vdwg.mxu0
        %vm356 = vcmp.gt.f32.partialorder %v305, 0.0
        %v357 = vsub.f32 0.0, %v305
        %v358 = vlog2.pop %v305
        %v359 = vmul.f32 %v358, 0.6931472
        %v360 = vmul.f32 %v357, %v359
        %v361 = vsel %vm356, %v360, 0.0
        %v362 = vsel %vm240, %v361, 0.0
        %363 = vadd.xlane.f32.xlu0 %v362
        %v364 = vpop.xlane.xlu0 %363
        %365 = vrot.lane.b32.xlu0 %v237, 120
        %v366 = vpop.permute.xlu0 %365
        %367 = vrot.lane.b32.xlu0 %v237, 88
        %v368 = vpop.permute.xlu0 %367
        %v370 = vsel %vm240, %v366, 0
        %v373 = vsel %vm240, %v368, 0
        %375 = vmatprep.subr.bf16.mxu0 0
        %376 = vmatpush1.bf16.xpose.msra.mxu0 %v373
        %377 = vmatprep.subr.bf16.mxu0 0
        %378 = vmatpush1.bf16.xpose.msra.mxu0 0
        %379 = vmatprep.subr.bf16.mxu0 0
        %380 = vmatpush1.bf16.xpose.msra.mxu0 0
        %381 = vmatprep.subr.bf16.mxu0 0
        %382 = vmatpush1.bf16.xpose.msra.mxu0 0
        %383 = vmatprep.subr.bf16.mxu0 0
        %384 = vmatpush1.bf16.xpose.msra.mxu0 0
        %385 = vmatprep.subr.bf16.mxu0 0
        %386 = vmatpush1.bf16.xpose.msra.mxu0 0
        %387 = vmatprep.subr.bf16.mxu0 0
        %388 = vmatpush1.bf16.xpose.msra.mxu0 0
        %389 = vmatprep.subr.bf16.mxu0 0
        %390 = vmatpush1.bf16.xpose.msra.mxu0 0
        %391 = vmatprep.subr.bf16.mxu0 0
        %392 = vmatpush1.bf16.xpose.msra.mxu0 0
        %393 = vmatprep.subr.bf16.mxu0 0
        %394 = vmatpush1.bf16.xpose.msra.mxu0 0
        %395 = vmatprep.subr.bf16.mxu0 0
        %396 = vmatpush1.bf16.xpose.msra.mxu0 0
        %397 = vmatprep.subr.bf16.mxu0 0
        %398 = vmatpush1.bf16.xpose.msra.mxu0 0
        %399 = vmatprep.subr.bf16.mxu0 0
        %400 = vmatpush1.bf16.xpose.msra.mxu0 0
        %401 = vmatprep.subr.bf16.mxu0 0
        %402 = vmatpush1.bf16.xpose.msra.mxu0 0
        %403 = vmatprep.subr.bf16.mxu0 0
        %404 = vmatpush1.bf16.xpose.msra.mxu0 0
        %405 = vmatprep.subr.bf16.mxu0 0
        %406 = vmatpush1.bf16.xpose.msra.mxu0 0
        %407 = vmatprep.mubr.bf16.mxu0 0
        %408 = vmatmul.mubr.bf16.gmra.mrb[0].mxu0 %v370
        %v409 = vpop.f32.mrb[0].mxu0
        %v410 = vadd.f32 0.0, %v409
        %v411 = vpop.f32.mrb[0].mxu0
        %v412 = vpop.f32.mrb[0].mxu0
        %v413 = vpop.f32.mrb[0].mxu0
        %414 = vdwg.mxu0
        %v415 = vmul.f32 %v410, 0.35355338
        %v416 = vadd.f32 %v415, %v292
        %v417 = vsel %vm240, %v416, -inf
        %418 = vmax.xlane.f32.xlu0 %v417
        %v419 = vpop.xlane.xlu0 %418
        %v420 = vsub.f32 %v416, %v419
        %v421 = vmul.f32 %v420, 1.442695
        %v422 = vpow.pop %v421
        %v423 = vsel %vm240, %v422, 0.0
        %424 = vadd.xlane.f32.xlu0 %v423
        %v425 = vpop.xlane.xlu0 %424
        %v426 = vrcp.pop %v425
        %v427 = vmul.f32 %v422, %v426
        %v428 = vpack.c.bf16 %v427, %v427
        %429 = vrot.lane.b32.xlu0 %v237, 56
        %v430 = vpop.permute.xlu0 %429
        %v432 = vsel %vm240, %v428, 0
        %v435 = vsel %vm312, %v430, 0
        %437 = vmatprep.subr.bf16.mxu0 0
        %438 = vmatpush1.bf16.msra.mxu0 %v435
        %439 = vmatprep.subr.bf16.mxu0 0
        %440 = vmatpush1.bf16.msra.mxu0 0
        %441 = vmatprep.subr.bf16.mxu0 0
        %442 = vmatpush1.bf16.msra.mxu0 0
        %443 = vmatprep.subr.bf16.mxu0 0
        %444 = vmatpush1.bf16.msra.mxu0 0
        %445 = vmatprep.subr.bf16.mxu0 0
        %446 = vmatpush1.bf16.msra.mxu0 0
        %447 = vmatprep.subr.bf16.mxu0 0
        %448 = vmatpush1.bf16.msra.mxu0 0
        %449 = vmatprep.subr.bf16.mxu0 0
        %450 = vmatpush1.bf16.msra.mxu0 0
        %451 = vmatprep.subr.bf16.mxu0 0
        %452 = vmatpush1.bf16.msra.mxu0 0
        %453 = vmatprep.subr.bf16.mxu0 0
        %454 = vmatpush1.bf16.msra.mxu0 0
        %455 = vmatprep.subr.bf16.mxu0 0
        %456 = vmatpush1.bf16.msra.mxu0 0
        %457 = vmatprep.subr.bf16.mxu0 0
        %458 = vmatpush1.bf16.msra.mxu0 0
        %459 = vmatprep.subr.bf16.mxu0 0
        %460 = vmatpush1.bf16.msra.mxu0 0
        %461 = vmatprep.subr.bf16.mxu0 0
        %462 = vmatpush1.bf16.msra.mxu0 0
        %463 = vmatprep.subr.bf16.mxu0 0
        %464 = vmatpush1.bf16.msra.mxu0 0
        %465 = vmatprep.subr.bf16.mxu0 0
        %466 = vmatpush1.bf16.msra.mxu0 0
        %467 = vmatprep.subr.bf16.mxu0 0
        %468 = vmatpush1.bf16.msra.mxu0 0
        %469 = vmatprep.mubr.bf16.mxu0 0
        %470 = vmatmul.mubr.bf16.gmra.mrb[0].mxu0 %v432
        %v471 = vpop.f32.mrb[0].mxu0
        %v472 = vadd.f32 0.0, %v471
        %v473 = vpop.f32.mrb[0].mxu0
        %v474 = vpop.f32.mrb[0].mxu0
        %v475 = vpop.f32.mrb[0].mxu0
        %476 = vdwg.mxu0
        %vm477 = vcmp.gt.f32.partialorder %v427, 0.0
        %v478 = vsub.f32 0.0, %v427
        %v479 = vlog2.pop %v427
        %v480 = vmul.f32 %v479, 0.6931472
        %v481 = vmul.f32 %v478, %v480
        %v482 = vsel %vm477, %v481, 0.0
        %v483 = vsel %vm240, %v482, 0.0
        %484 = vadd.xlane.f32.xlu0 %v483
        %v485 = vpop.xlane.xlu0 %484
        %486 = vrot.lane.b32.xlu0 %v237, 112
        %v487 = vpop.permute.xlu0 %486
        %488 = vrot.lane.b32.xlu0 %v237, 80
        %v489 = vpop.permute.xlu0 %488
        %v491 = vsel %vm240, %v487, 0
        %v494 = vsel %vm240, %v489, 0
        %496 = vmatprep.subr.bf16.mxu0 0
        %497 = vmatpush1.bf16.xpose.msra.mxu0 %v494
        %498 = vmatprep.subr.bf16.mxu0 0
        %499 = vmatpush1.bf16.xpose.msra.mxu0 0
        %500 = vmatprep.subr.bf16.mxu0 0
        %501 = vmatpush1.bf16.xpose.msra.mxu0 0
        %502 = vmatprep.subr.bf16.mxu0 0
        %503 = vmatpush1.bf16.xpose.msra.mxu0 0
        %504 = vmatprep.subr.bf16.mxu0 0
        %505 = vmatpush1.bf16.xpose.msra.mxu0 0
        %506 = vmatprep.subr.bf16.mxu0 0
        %507 = vmatpush1.bf16.xpose.msra.mxu0 0
        %508 = vmatprep.subr.bf16.mxu0 0
        %509 = vmatpush1.bf16.xpose.msra.mxu0 0
        %510 = vmatprep.subr.bf16.mxu0 0
        %511 = vmatpush1.bf16.xpose.msra.mxu0 0
        %512 = vmatprep.subr.bf16.mxu0 0
        %513 = vmatpush1.bf16.xpose.msra.mxu0 0
        %514 = vmatprep.subr.bf16.mxu0 0
        %515 = vmatpush1.bf16.xpose.msra.mxu0 0
        %516 = vmatprep.subr.bf16.mxu0 0
        %517 = vmatpush1.bf16.xpose.msra.mxu0 0
        %518 = vmatprep.subr.bf16.mxu0 0
        %519 = vmatpush1.bf16.xpose.msra.mxu0 0
        %520 = vmatprep.subr.bf16.mxu0 0
        %521 = vmatpush1.bf16.xpose.msra.mxu0 0
        %522 = vmatprep.subr.bf16.mxu0 0
        %523 = vmatpush1.bf16.xpose.msra.mxu0 0
        %524 = vmatprep.subr.bf16.mxu0 0
        %525 = vmatpush1.bf16.xpose.msra.mxu0 0
        %526 = vmatprep.subr.bf16.mxu0 0
        %527 = vmatpush1.bf16.xpose.msra.mxu0 0
        %528 = vmatprep.mubr.bf16.mxu0 0
        %529 = vmatmul.mubr.bf16.gmra.mrb[0].mxu0 %v491
        %v530 = vpop.f32.mrb[0].mxu0
        %v531 = vadd.f32 0.0, %v530
        %v532 = vpop.f32.mrb[0].mxu0
        %v533 = vpop.f32.mrb[0].mxu0
        %v534 = vpop.f32.mrb[0].mxu0
        %535 = vdwg.mxu0
        %v536 = vmul.f32 %v531, 0.35355338
        %v537 = vadd.f32 %v536, %v292
        %v538 = vsel %vm240, %v537, -inf
        %539 = vmax.xlane.f32.xlu0 %v538
        %v540 = vpop.xlane.xlu0 %539
        %v541 = vsub.f32 %v537, %v540
        %v542 = vmul.f32 %v541, 1.442695
        %v543 = vpow.pop %v542
        %v544 = vsel %vm240, %v543, 0.0
        %545 = vadd.xlane.f32.xlu0 %v544
        %v546 = vpop.xlane.xlu0 %545
        %v547 = vrcp.pop %v546
        %v548 = vmul.f32 %v543, %v547
        %v549 = vpack.c.bf16 %v548, %v548
        %550 = vrot.lane.b32.xlu0 %v237, 48
        %v551 = vpop.permute.xlu0 %550
        %v553 = vsel %vm240, %v549, 0
        %v556 = vsel %vm312, %v551, 0
        %558 = vmatprep.subr.bf16.mxu0 0
        %559 = vmatpush1.bf16.msra.mxu0 %v556
        %560 = vmatprep.subr.bf16.mxu0 0
        %561 = vmatpush1.bf16.msra.mxu0 0
        %562 = vmatprep.subr.bf16.mxu0 0
        %563 = vmatpush1.bf16.msra.mxu0 0
        %564 = vmatprep.subr.bf16.mxu0 0
        %565 = vmatpush1.bf16.msra.mxu0 0
        %566 = vmatprep.subr.bf16.mxu0 0
        %567 = vmatpush1.bf16.msra.mxu0 0
        %568 = vmatprep.subr.bf16.mxu0 0
        %569 = vmatpush1.bf16.msra.mxu0 0
        %570 = vmatprep.subr.bf16.mxu0 0
        %571 = vmatpush1.bf16.msra.mxu0 0
        %572 = vmatprep.subr.bf16.mxu0 0
        %573 = vmatpush1.bf16.msra.mxu0 0
        %574 = vmatprep.subr.bf16.mxu0 0
        %575 = vmatpush1.bf16.msra.mxu0 0
        %576 = vmatprep.subr.bf16.mxu0 0
        %577 = vmatpush1.bf16.msra.mxu0 0
        %578 = vmatprep.subr.bf16.mxu0 0
        %579 = vmatpush1.bf16.msra.mxu0 0
        %580 = vmatprep.subr.bf16.mxu0 0
        %581 = vmatpush1.bf16.msra.mxu0 0
        %582 = vmatprep.subr.bf16.mxu0 0
        %583 = vmatpush1.bf16.msra.mxu0 0
        %584 = vmatprep.subr.bf16.mxu0 0
        %585 = vmatpush1.bf16.msra.mxu0 0
        %586 = vmatprep.subr.bf16.mxu0 0
        %587 = vmatpush1.bf16.msra.mxu0 0
        %588 = vmatprep.subr.bf16.mxu0 0
        %589 = vmatpush1.bf16.msra.mxu0 0
        %590 = vmatprep.mubr.bf16.mxu0 0
        %591 = vmatmul.mubr.bf16.gmra.mrb[0].mxu0 %v553
        %v592 = vpop.f32.mrb[0].mxu0
        %v593 = vadd.f32 0.0, %v592
        %v594 = vpop.f32.mrb[0].mxu0
        %v595 = vpop.f32.mrb[0].mxu0
        %v596 = vpop.f32.mrb[0].mxu0
        %597 = vdwg.mxu0
        %vm598 = vcmp.gt.f32.partialorder %v548, 0.0
        %v599 = vsub.f32 0.0, %v548
        %v600 = vlog2.pop %v548
        %v601 = vmul.f32 %v600, 0.6931472
        %v602 = vmul.f32 %v599, %v601
        %v603 = vsel %vm598, %v602, 0.0
        %v604 = vsel %vm240, %v603, 0.0
        %605 = vadd.xlane.f32.xlu0 %v604
        %v606 = vpop.xlane.xlu0 %605
        %607 = vrot.lane.b32.xlu0 %v237, 104
        %v608 = vpop.permute.xlu0 %607
        %609 = vrot.lane.b32.xlu0 %v237, 72
        %v610 = vpop.permute.xlu0 %609
        %v612 = vsel %vm240, %v608, 0
        %v615 = vsel %vm240, %v610, 0
        %617 = vmatprep.subr.bf16.mxu0 0
        %618 = vmatpush1.bf16.xpose.msra.mxu0 %v615
        %619 = vmatprep.subr.bf16.mxu0 0
        %620 = vmatpush1.bf16.xpose.msra.mxu0 0
        %621 = vmatprep.subr.bf16.mxu0 0
        %622 = vmatpush1.bf16.xpose.msra.mxu0 0
        %623 = vmatprep.subr.bf16.mxu0 0
        %624 = vmatpush1.bf16.xpose.msra.mxu0 0
        %625 = vmatprep.subr.bf16.mxu0 0
        %626 = vmatpush1.bf16.xpose.msra.mxu0 0
        %627 = vmatprep.subr.bf16.mxu0 0
        %628 = vmatpush1.bf16.xpose.msra.mxu0 0
        %629 = vmatprep.subr.bf16.mxu0 0
        %630 = vmatpush1.bf16.xpose.msra.mxu0 0
        %631 = vmatprep.subr.bf16.mxu0 0
        %632 = vmatpush1.bf16.xpose.msra.mxu0 0
        %633 = vmatprep.subr.bf16.mxu0 0
        %634 = vmatpush1.bf16.xpose.msra.mxu0 0
        %635 = vmatprep.subr.bf16.mxu0 0
        %636 = vmatpush1.bf16.xpose.msra.mxu0 0
        %637 = vmatprep.subr.bf16.mxu0 0
        %638 = vmatpush1.bf16.xpose.msra.mxu0 0
        %639 = vmatprep.subr.bf16.mxu0 0
        %640 = vmatpush1.bf16.xpose.msra.mxu0 0
        %641 = vmatprep.subr.bf16.mxu0 0
        %642 = vmatpush1.bf16.xpose.msra.mxu0 0
        %643 = vmatprep.subr.bf16.mxu0 0
        %644 = vmatpush1.bf16.xpose.msra.mxu0 0
        %645 = vmatprep.subr.bf16.mxu0 0
        %646 = vmatpush1.bf16.xpose.msra.mxu0 0
        %647 = vmatprep.subr.bf16.mxu0 0
        %648 = vmatpush1.bf16.xpose.msra.mxu0 0
        %649 = vmatprep.mubr.bf16.mxu0 0
        %650 = vmatmul.mubr.bf16.gmra.mrb[0].mxu0 %v612
        %v651 = vpop.f32.mrb[0].mxu0
        %v652 = vadd.f32 0.0, %v651
        %v653 = vpop.f32.mrb[0].mxu0
        %v654 = vpop.f32.mrb[0].mxu0
        %v655 = vpop.f32.mrb[0].mxu0
        %656 = vdwg.mxu0
        %v657 = vmul.f32 %v652, 0.35355338
        %v658 = vadd.f32 %v657, %v292
        %v659 = vsel %vm240, %v658, -inf
        %660 = vmax.xlane.f32.xlu0 %v659
        %v661 = vpop.xlane.xlu0 %660
        %v662 = vsub.f32 %v658, %v661
        %v663 = vmul.f32 %v662, 1.442695
        %v664 = vpow.pop %v663
        %v665 = vsel %vm240, %v664, 0.0
        %666 = vadd.xlane.f32.xlu0 %v665
        %v667 = vpop.xlane.xlu0 %666
        %v668 = vrcp.pop %v667
        %v669 = vmul.f32 %v664, %v668
        %v670 = vpack.c.bf16 %v669, %v669
        %671 = vrot.lane.b32.xlu0 %v237, 40
        %v672 = vpop.permute.xlu0 %671
        %v674 = vsel %vm240, %v670, 0
        %v677 = vsel %vm312, %v672, 0
        %679 = vmatprep.subr.bf16.mxu0 0
        %680 = vmatpush1.bf16.msra.mxu0 %v677
        %681 = vmatprep.subr.bf16.mxu0 0
        %682 = vmatpush1.bf16.msra.mxu0 0
        %683 = vmatprep.subr.bf16.mxu0 0
        %684 = vmatpush1.bf16.msra.mxu0 0
        %685 = vmatprep.subr.bf16.mxu0 0
        %686 = vmatpush1.bf16.msra.mxu0 0
        %687 = vmatprep.subr.bf16.mxu0 0
        %688 = vmatpush1.bf16.msra.mxu0 0
        %689 = vmatprep.subr.bf16.mxu0 0
        %690 = vmatpush1.bf16.msra.mxu0 0
        %691 = vmatprep.subr.bf16.mxu0 0
        %692 = vmatpush1.bf16.msra.mxu0 0
        %693 = vmatprep.subr.bf16.mxu0 0
        %694 = vmatpush1.bf16.msra.mxu0 0
        %695 = vmatprep.subr.bf16.mxu0 0
        %696 = vmatpush1.bf16.msra.mxu0 0
        %697 = vmatprep.subr.bf16.mxu0 0
        %698 = vmatpush1.bf16.msra.mxu0 0
        %699 = vmatprep.subr.bf16.mxu0 0
        %700 = vmatpush1.bf16.msra.mxu0 0
        %701 = vmatprep.subr.bf16.mxu0 0
        %702 = vmatpush1.bf16.msra.mxu0 0
        %703 = vmatprep.subr.bf16.mxu0 0
        %704 = vmatpush1.bf16.msra.mxu0 0
        %705 = vmatprep.subr.bf16.mxu0 0
        %706 = vmatpush1.bf16.msra.mxu0 0
        %707 = vmatprep.subr.bf16.mxu0 0
        %708 = vmatpush1.bf16.msra.mxu0 0
        %709 = vmatprep.subr.bf16.mxu0 0
        %710 = vmatpush1.bf16.msra.mxu0 0
        %711 = vmatprep.mubr.bf16.mxu0 0
        %712 = vmatmul.mubr.bf16.gmra.mrb[0].mxu0 %v674
        %v713 = vpop.f32.mrb[0].mxu0
        %v714 = vadd.f32 0.0, %v713
        %v715 = vpop.f32.mrb[0].mxu0
        %v716 = vpop.f32.mrb[0].mxu0
        %v717 = vpop.f32.mrb[0].mxu0
        %718 = vdwg.mxu0
        %vm719 = vcmp.gt.f32.partialorder %v669, 0.0
        %v720 = vsub.f32 0.0, %v669
        %v721 = vlog2.pop %v669
        %v722 = vmul.f32 %v721, 0.6931472
        %v723 = vmul.f32 %v720, %v722
        %v724 = vsel %vm719, %v723, 0.0
        %v725 = vsel %vm240, %v724, 0.0
        %726 = vadd.xlane.f32.xlu0 %v725
        %v727 = vpop.xlane.xlu0 %726
        %729 = vrot.lane.b32.xlu0 %v472, 8
        %v730 = vpop.permute.xlu0 %729
        %733 = vrot.lane.b32.xlu0 %v593, 16
        %v734 = vpop.permute.xlu0 %733
        %737 = vrot.lane.b32.xlu0 %v714, 24
        %v738 = vpop.permute.xlu0 %737
        %v740 = vsel %vm240, %v351, %v730
        %vm741 = vcmask 130048
        %v742 = vsel %vm741, %v740, %v734
        %vm743 = vcmask 195584
        %v744 = vsel %vm743, %v742, %v738
        %v745 = vpack.c.bf16 %v744, %v744
        %vm746 = vcmask 257024
        %747 = vst.msk [vmem:[%s224] sm:$0xf] %vm746, %v745
        %vm748 = vcmask 60416
        %749 = vst.msk [vmem:[%s206] sm:$0xf] %vm748, %v306
        %750 = vst.msk [vmem:[%s206 + $0x4] sm:$0xf] %vm748, %v428
        %751 = vst.msk [vmem:[%s206 + $0x8] sm:$0xf] %vm748, %v549
        %752 = vst.msk [vmem:[%s206 + $0xc] sm:$0xf] %vm748, %v670
        %vm753 = vcmask 7168
        %754 = vst.msk [vmem:[%s229] sm:$0xff] %vm753, %v364
        %755 = vst.msk [vmem:[%s229 + $0x8] sm:$0xff] %vm753, %v485
        %756 = vst.msk [vmem:[%s229 + $0x10] sm:$0xff] %vm753, %v606
        %757 = vst.msk [vmem:[%s229 + $0x18] sm:$0xff] %vm753, %v727
        %p758 = scmp.lt.s32.totalorder %s19, 1
        %s759 = scalar_select %p758, %s19, 1
        %s760 = smul.addr %s759, 4
        %s761 = scalar_lea.vmem %s2, %s760
        %s762 = sand.u32 %s105, 1
        %s763 = scalar_lea.sflag [#allocation3], %s762
        %s764 = sand.u32 %s105, 1
        %s765 = smul.addr %s764, 16
        %s766 = scalar_lea.vmem [#allocation2], %s765
        %p767 = scmp.lt.s32.totalorder %s19, 1
        %s768 = scalar_select %p767, %s19, 1
        %s769 = smul.addr %s768, 4
        %s770 = smul.addr %s769, 8
        %s771 = scalar_lea.vmem %s4, %s770
        // Predicated region
        $region29: #{run.27} parent=27 // pred_check
          %p772 = pneg %p89
        $region30: #{run.27} parent=27 // pred_check_branch
          %774 = sbr.rel (%p772) target = $region32
        $region31: #{run.27} parent=27 // pred_region
          _
        $region32: #{run.27} parent=27 // pred_fallthru
          _
        // Predicated region
        $region33: #{run.27} parent=27 // pred_check
          %p775 = pneg %p115
        $region34: #{run.27} parent=27 // pred_check_branch
          %777 = sbr.rel (%p775) target = $region36
        $region35: #{run.27} parent=27 // pred_region
          %s779 = ssub.s32 256, 256
          %780 = vsyncadd %s763, %s779
          %s781 = smul.addr %s19, 4
          %s782 = smul.addr %s781, 64
          %s783 = scalar_lea.hbm %s3, %s782
          %s784 = sshll.u32 %s766, 4
          %s785 = int_to_ptr.vmem [resolvable:$true] %s784
          %790 = dma.vmem_to_hbm [thread:$0]  %s785, 256, %s783, %s763, 64, 64, 4
        $region36: #{run.27} parent=27 // pred_fallthru
          _
        // Predicated region
        $region37: #{run.27} parent=27 // pred_check
          %p791 = pneg %p141
        $region38: #{run.27} parent=27 // pred_check_branch
          %793 = sbr.rel (%p791) target = $region40
        $region39: #{run.27} parent=27 // pred_region
          _
        $region40: #{run.27} parent=27 // pred_fallthru
          _
      $region28: #{run.27} parent=5 // pred_fallthru
        _
      %p794 = scmp.le.s32.totalorder 2, %s14
      // Predicated region
      $region41: #{run.27} parent=5 // pred_check
        %p795 = pneg %p794
      $region42: #{run.27} parent=5 // pred_check_branch
        %797 = sbr.rel (%p795) target = $region44
      $region43: #{run.27} parent=5 // pred_region
        %s798 = ssub.s32 %s14, 2
        // Predicated region
        $region45: #{run.27} parent=43 // pred_check
          %p799 = pneg %p95
        $region46: #{run.27} parent=43 // pred_check_branch
          %801 = sbr.rel (%p799) target = $region48
        $region47: #{run.27} parent=43 // pred_region
          %p802 = scmp.lt.s32.totalorder %s20, 1
          %s803 = scalar_select %p802, %s20, 1
          %s804 = smul.addr %s803, 4
          %s805 = scalar_lea.vmem %s2, %s804
        $region48: #{run.27} parent=43 // pred_fallthru
          _
        // Predicated region
        $region49: #{run.27} parent=43 // pred_check
          %p806 = pneg %p121
        $region50: #{run.27} parent=43 // pred_check_branch
          %808 = sbr.rel (%p806) target = $region52
        $region51: #{run.27} parent=43 // pred_region
          %s809 = sand.u32 %s106, 1
          %s810 = scalar_lea.sflag [#allocation3], %s809
          %s811 = sand.u32 %s106, 1
          %s812 = smul.addr %s811, 16
          %s813 = scalar_lea.vmem [#allocation2], %s812
          %814 = dma.done %s810, 256
        $region52: #{run.27} parent=43 // pred_fallthru
          _
        // Predicated region
        $region53: #{run.27} parent=43 // pred_check
          %p815 = pneg %p147
        $region54: #{run.27} parent=43 // pred_check_branch
          %817 = sbr.rel (%p815) target = $region56
        $region55: #{run.27} parent=43 // pred_region
          %p818 = scmp.lt.s32.totalorder %s20, 1
          %s819 = scalar_select %p818, %s20, 1
          %s820 = smul.addr %s819, 4
          %s821 = smul.addr %s820, 8
          %s822 = scalar_lea.vmem %s4, %s821
        $region56: #{run.27} parent=43 // pred_fallthru
          _
      $region44: #{run.27} parent=5 // pred_fallthru
        _
    $region6: #{run.27} parent=1 // loop_footer
      %s18 = sadd.s32 1, %s14
    $region7: #{run.27} parent=1 // loop_footer_branch
      %13 = sbr.rel target = $region3
    $region8: #{run.27} parent=1 // loop_exit
      _
    %823 = vsyncpa [#allocation3], 1
    %s824 = scalar_lea.sflag [#allocation3], 1
    %825 = vsyncpa %s824, 1

// kernel: run.50
$region0: #{run.50}
  #allocation0 [shape = 'u32[]', space=smem, size = 0x4, offset = 0x4, fixed_abs, tag = 'smem constant byte address 0x4 - core index']
  #allocation1 [shape = 'u32[144,128]{1,0:T(1,128)}', space=vmem, size = 0x12000, scoped, tag = 'internal scratch']
  #allocation2 [shape = 'f32[16,32]{1,0:T(8,128)}', space=vmem, size = 0x2000, scoped, tag = 'scratch operand']
  %s0 = inlined_call_operand.vmem [shape: bf16[16,32], index: 0, kind: input, shape index: {}]
  %s1 = inlined_call_operand.vmem [shape: bf16[32,32], index: 1, kind: input, shape index: {}]
  %s2 = inlined_call_operand.vmem [shape: f32[1,32], index: 2, kind: input, shape index: {}]
  %s3 = inlined_call_operand.vmem [shape: f32[16,32], index: 3, kind: output, shape index: {}]
  %s4 = sld [smem:[#allocation0]]
  $region30: #{run.50} parent=0
    _
  %s6 = ssub.s32 1, %s4
  %s7 = scalar_select 0, %s6, %s4
  // Predicated region
  $region2: #{run.50} parent=0 // pred_check
    _
  $region3: #{run.50} parent=0 // pred_check_branch
    %9 = sbr.rel (0) target = $region5
  $region4: #{run.50} parent=0 // pred_region
    _
  $region5: #{run.50} parent=0 // pred_fallthru
    _
  // Predicated region
  $region6: #{run.50} parent=0 // pred_check
    _
  $region7: #{run.50} parent=0 // pred_check_branch
    %11 = sbr.rel (0) target = $region9
  $region8: #{run.50} parent=0 // pred_region
    _
  $region9: #{run.50} parent=0 // pred_fallthru
    _
  // Predicated region
  $region10: #{run.50} parent=0 // pred_check
    _
  $region11: #{run.50} parent=0 // pred_check_branch
    %13 = sbr.rel (0) target = $region13
  $region12: #{run.50} parent=0 // pred_region
    _
  $region13: #{run.50} parent=0 // pred_fallthru
    _
  %p15 = scmp.eq.s32.totalorder 0, 0
  // Predicated region
  $region14: #{run.50} parent=0 // pred_check
    %p16 = pneg %p15
  $region15: #{run.50} parent=0 // pred_check_branch
    %18 = sbr.rel (%p16) target = $region17
  $region16: #{run.50} parent=0 // pred_region
    %vm19 = vcmask 261120
    %20 = vst.msk [vmem:[#allocation2] sm:$0xff] %vm19, 0.0
    %21 = vst.msk [vmem:[#allocation2 + $0x8] sm:$0xff] %vm19, 0.0
  $region17: #{run.50} parent=0 // pred_fallthru
    _
  %v22 = vld [vmem:[#allocation2] sm:$0xff]
  %v23 = vld [vmem:[#allocation2 + $0x8] sm:$0xff]
  %v24 = vld [vmem:[%s0] sm:$0xf]
  %v25 = vld [vmem:[%s0 + $0x4] sm:$0xf]
  %v26 = vld [vmem:[%s1] sm:$0xf]
  %v27 = vld [vmem:[%s1 + $0x4] sm:$0xf]
  %v28 = vld [vmem:[%s1 + $0x8] sm:$0xf]
  %v29 = vld [vmem:[%s1 + $0xc] sm:$0xf]
  %v32 = vunpack.c.l.b16 %v24
  %v33 = vunpack.c.l.b16 %v25
  %v34 = vpack.c.b16 %v33, %v32
  %v39 = vunpack.c.l.b16 %v26
  %v40 = vunpack.c.l.b16 %v27
  %v41 = vunpack.c.l.b16 %v28
  %v42 = vunpack.c.l.b16 %v29
  %v43 = vpack.c.b16 %v40, %v39
  %v44 = vpack.c.b16 %v42, %v41
  %vm47 = vcmask 261120
  %v49 = vsel %vm47, %v34, 0
  %51 = vmatprep.subr.bf16.mxu0 0
  %52 = vmatpush1.bf16.msra.mxu0 %v43
  %53 = vmatprep.subr.bf16.mxu0 0
  %54 = vmatpush1.bf16.msra.mxu0 %v44
  %55 = vmatprep.subr.bf16.mxu0 0
  %56 = vmatpush1.bf16.msra.mxu0 0
  %57 = vmatprep.subr.bf16.mxu0 0
  %58 = vmatpush1.bf16.msra.mxu0 0
  %59 = vmatprep.subr.bf16.mxu0 0
  %60 = vmatpush1.bf16.msra.mxu0 0
  %61 = vmatprep.subr.bf16.mxu0 0
  %62 = vmatpush1.bf16.msra.mxu0 0
  %63 = vmatprep.subr.bf16.mxu0 0
  %64 = vmatpush1.bf16.msra.mxu0 0
  %65 = vmatprep.subr.bf16.mxu0 0
  %66 = vmatpush1.bf16.msra.mxu0 0
  %67 = vmatprep.subr.bf16.mxu0 0
  %68 = vmatpush1.bf16.msra.mxu0 0
  %69 = vmatprep.subr.bf16.mxu0 0
  %70 = vmatpush1.bf16.msra.mxu0 0
  %71 = vmatprep.subr.bf16.mxu0 0
  %72 = vmatpush1.bf16.msra.mxu0 0
  %73 = vmatprep.subr.bf16.mxu0 0
  %74 = vmatpush1.bf16.msra.mxu0 0
  %75 = vmatprep.subr.bf16.mxu0 0
  %76 = vmatpush1.bf16.msra.mxu0 0
  %77 = vmatprep.subr.bf16.mxu0 0
  %78 = vmatpush1.bf16.msra.mxu0 0
  %79 = vmatprep.subr.bf16.mxu0 0
  %80 = vmatpush1.bf16.msra.mxu0 0
  %81 = vmatprep.subr.bf16.mxu0 0
  %82 = vmatpush1.bf16.msra.mxu0 0
  %83 = vmatprep.mubr.bf16.mxu0 0
  %84 = vmatmul.mubr.bf16.gmra.mrb[0].mxu0 %v49
  %v85 = vpop.f32.mrb[0].mxu0
  %v86 = vadd.f32 0.0, %v85
  %v87 = vpop.f32.mrb[0].mxu0
  %v88 = vpop.f32.mrb[0].mxu0
  %v89 = vadd.f32 0.0, %v88
  %v90 = vpop.f32.mrb[0].mxu0
  %91 = vdwg.mxu0
  %v92 = vadd.f32 %v22, %v86
  %v93 = vadd.f32 %v23, %v89
  %94 = vst.msk [vmem:[#allocation2] sm:$0xff] %vm47, %v92
  %95 = vst.msk [vmem:[#allocation2 + $0x8] sm:$0xff] %vm47, %v93
  // Predicated region
  $region18: #{run.50} parent=0 // pred_check
    %p96 = pneg %p15
  $region19: #{run.50} parent=0 // pred_check_branch
    %98 = sbr.rel (%p96) target = $region21
  $region20: #{run.50} parent=0 // pred_region
    %v99 = vld [vmem:[#allocation2] sm:$0xff]
    %v100 = vld [vmem:[#allocation2 + $0x8] sm:$0xff]
    %v101 = vld [vmem:[%s2] sm:$0x1]
    %v103 = vlaneseq
    %v104 = vshrl.u32 %v103, 7
    %v105 = vsub.s32 0, %v104
    %v106 = vrot.slane %v101, %v105
    %v108 = vadd.f32 %v99, %v106
    %v109 = vadd.f32 %v100, %v106
    %110 = vst.msk [vmem:[%s3] sm:$0xff] %vm47, %v108
    %111 = vst.msk [vmem:[%s3 + $0x8] sm:$0xff] %vm47, %v109
  $region21: #{run.50} parent=0 // pred_fallthru
    _
  // Predicated region
  $region22: #{run.50} parent=0 // pred_check
    _
  $region23: #{run.50} parent=0 // pred_check_branch
    %113 = sbr.rel (0) target = $region25
  $region24: #{run.50} parent=0 // pred_region
    _
  $region25: #{run.50} parent=0 // pred_fallthru
    _
  // Predicated region
  $region26: #{run.50} parent=0 // pred_check
    _
  $region27: #{run.50} parent=0 // pred_check_branch
    %115 = sbr.rel (0) target = $region29
  $region28: #{run.50} parent=0 // pred_region
    _
  $region29: #{run.50} parent=0 // pred_fallthru
    _

// kernel: run.39
$region0: #{run.39}
  #allocation0 [shape = 'u32[]', space=smem, size = 0x4, offset = 0x4, fixed_abs, tag = 'smem constant byte address 0x4 - core index']
  #allocation1 [shape = 'u32[144,128]{1,0:T(1,128)}', space=vmem, size = 0x12000, scoped, tag = 'internal scratch']
  %s0 = inlined_call_operand.vmem [shape: bf16[2,8,32], index: 0, kind: input, shape index: {}]
  %s1 = inlined_call_operand.vmem [shape: bf16[2,8,64], index: 1, kind: input, shape index: {}]
  %s2 = inlined_call_operand.vmem [shape: f32[2,1,8], index: 2, kind: input, shape index: {}]
  %s3 = inlined_call_operand.vmem [shape: bf16[2,8,32], index: 3, kind: output, shape index: {0}]
  %s4 = inlined_call_operand.hbm [shape: bf16[2,4,8,8], index: 4, kind: output, shape index: {1}]
  %s5 = inlined_call_operand.hbm [shape: f32[2,4,8,1], index: 5, kind: output, shape index: {2}]
  %6 = xla_tuple %s3, %s4, %s5
  %s7 = sld [smem:[#allocation0]]
  $region61: #{run.39} parent=0
    _
  %s9 = ssub.s32 1, %s7
  %s10 = scalar_select 0, %s9, %s7
  $region1: #{run.39} parent=0
    #allocation2 [shape = 'u8[16384]{0}', space=vmem, size = 0x4000, scoped, tag = 'output window, operand 1']
    #allocation3 [shape = 's32[2]{0}', space=sflag, size = 0x8, scoped, tag = 'scoped memory for run.39']
    #allocation4 [shape = 'u8[32768]{0}', space=vmem, size = 0x8000, scoped, tag = 'output window, operand 2']
    #allocation5 [shape = 's32[2]{0}', space=sflag, size = 0x8, scoped, tag = 'scoped memory for run.39']
    %11 = vsyncpa [#allocation3], 0
    %s12 = scalar_lea.sflag [#allocation3], 1
    %13 = vsyncpa %s12, 0
    %14 = vsyncpa [#allocation5], 0
    %s15 = scalar_lea.sflag [#allocation5], 1
    %16 = vsyncpa %s15, 0
    loop: start=0, step=1, limit=4
    $region2: #{run.39} parent=1 // loop_pre_header
      _
    $region3: #{run.39} parent=1 // loop_header
      %s18 = sphi 0, %s22
      %p19 = scmp.ge.s32.totalorder %s18, 4
      %s28 = sphi 0, %s30
      %s31 = sphi 0, %s28
      %s32 = sphi 0, %s31
      %s48 = sphi 0, %s32
      %s54 = sphi 0, %s56
      %s57 = sphi 0, %s54
      %s58 = sphi 0, %s57
      %s74 = sphi 0, %s58
      %s80 = sphi 0, %s82
      %s83 = sphi 0, %s80
      %s84 = sphi 0, %s83
      %s100 = sphi 0, %s84
      %s106 = sphi 0, %s108
      %s109 = sphi 0, %s106
      %s110 = sphi 0, %s109
      %s126 = sphi 0, %s110
      %s132 = sphi 0, %s134
      %s135 = sphi 0, %s132
      %s136 = sphi 0, %s135
      %s152 = sphi 0, %s136
      %s158 = sphi 0, %s160
      %s161 = sphi 0, %s158
      %s162 = sphi 0, %s161
      %s178 = sphi 0, %s162
    $region4: #{run.39} parent=1 // loop_header_branch
      %21 = sbr.rel (%p19) target = $region8
    $region5: #{run.39} parent=1 // loop_body
      %s23 = ssub.s32 %s18, 1
      %s24 = ssub.s32 %s18, 2
      %s25 = sadd.s32 %s18, 1
      %s26 = ssub.s32 %s18, %s25
      %p27 = scmp.eq.s32.totalorder %s26, 0
      %s29 = sadd.s32 %s28, 1
      %s30 = scalar_select %p27, %s28, %s29
      %p33 = pneg %p27
      %p34 = scmp.eq.s32.totalorder %s18, 1
      %p35 = por %p33, %p34
      %p36 = scmp.ne.s32.totalorder %s28, %s31
      %p37 = scmp.eq.s32.totalorder %s18, 0
      %p38 = por %p36, %p37
      %p39 = scmp.ne.s32.totalorder %s28, %s31
      %p40 = scmp.eq.s32.totalorder %s23, 1
      %p41 = por %p39, %p40
      %p42 = scmp.ne.s32.totalorder %s31, %s32
      %p43 = scmp.eq.s32.totalorder %s23, 0
      %p44 = por %p42, %p43
      %p45 = scmp.ne.s32.totalorder %s31, %s32
      %p46 = scmp.eq.s32.totalorder %s24, 1
      %p47 = por %p45, %p46
      %p49 = scmp.ne.s32.totalorder %s32, %s48
      %p50 = scmp.eq.s32.totalorder %s24, 0
      %p51 = por %p49, %p50
      %s52 = ssub.s32 %s18, %s25
      %p53 = scmp.eq.s32.totalorder %s52, 0
      %s55 = sadd.s32 %s54, 1
      %s56 = scalar_select %p53, %s54, %s55
      %p59 = pneg %p53
      %p60 = scmp.eq.s32.totalorder %s18, 1
      %p61 = por %p59, %p60
      %p62 = scmp.ne.s32.totalorder %s54, %s57
      %p63 = scmp.eq.s32.totalorder %s18, 0
      %p64 = por %p62, %p63
      %p65 = scmp.ne.s32.totalorder %s54, %s57
      %p66 = scmp.eq.s32.totalorder %s23, 1
      %p67 = por %p65, %p66
      %p68 = scmp.ne.s32.totalorder %s57, %s58
      %p69 = scmp.eq.s32.totalorder %s23, 0
      %p70 = por %p68, %p69
      %p71 = scmp.ne.s32.totalorder %s57, %s58
      %p72 = scmp.eq.s32.totalorder %s24, 1
      %p73 = por %p71, %p72
      %p75 = scmp.ne.s32.totalorder %s58, %s74
      %p76 = scmp.eq.s32.totalorder %s24, 0
      %p77 = por %p75, %p76
      %s78 = ssub.s32 %s18, %s25
      %p79 = scmp.eq.s32.totalorder %s78, 0
      %s81 = sadd.s32 %s80, 1
      %s82 = scalar_select %p79, %s80, %s81
      %p85 = pneg %p79
      %p86 = scmp.eq.s32.totalorder %s18, 1
      %p87 = por %p85, %p86
      %p88 = scmp.ne.s32.totalorder %s80, %s83
      %p89 = scmp.eq.s32.totalorder %s18, 0
      %p90 = por %p88, %p89
      %p91 = scmp.ne.s32.totalorder %s80, %s83
      %p92 = scmp.eq.s32.totalorder %s23, 1
      %p93 = por %p91, %p92
      %p94 = scmp.ne.s32.totalorder %s83, %s84
      %p95 = scmp.eq.s32.totalorder %s23, 0
      %p96 = por %p94, %p95
      %p97 = scmp.ne.s32.totalorder %s83, %s84
      %p98 = scmp.eq.s32.totalorder %s24, 1
      %p99 = por %p97, %p98
      %p101 = scmp.ne.s32.totalorder %s84, %s100
      %p102 = scmp.eq.s32.totalorder %s24, 0
      %p103 = por %p101, %p102
      %s104 = ssub.s32 %s18, %s25
      %p105 = scmp.eq.s32.totalorder %s104, 0
      %s107 = sadd.s32 %s106, 1
      %s108 = scalar_select %p105, %s106, %s107
      %p111 = pneg %p105
      %p112 = scmp.eq.s32.totalorder %s18, 1
      %p113 = por %p111, %p112
      %p114 = scmp.ne.s32.totalorder %s106, %s109
      %p115 = scmp.eq.s32.totalorder %s18, 0
      %p116 = por %p114, %p115
      %p117 = scmp.ne.s32.totalorder %s106, %s109
      %p118 = scmp.eq.s32.totalorder %s23, 1
      %p119 = por %p117, %p118
      %p120 = scmp.ne.s32.totalorder %s109, %s110
      %p121 = scmp.eq.s32.totalorder %s23, 0
      %p122 = por %p120, %p121
      %p123 = scmp.ne.s32.totalorder %s109, %s110
      %p124 = scmp.eq.s32.totalorder %s24, 1
      %p125 = por %p123, %p124
      %p127 = scmp.ne.s32.totalorder %s110, %s126
      %p128 = scmp.eq.s32.totalorder %s24, 0
      %p129 = por %p127, %p128
      %s130 = ssub.s32 %s18, %s25
      %p131 = scmp.eq.s32.totalorder %s130, 0
      %s133 = sadd.s32 %s132, 1
      %s134 = scalar_select %p131, %s132, %s133
      %p137 = pneg %p131
      %p138 = scmp.eq.s32.totalorder %s18, 1
      %p139 = por %p137, %p138
      %p140 = scmp.ne.s32.totalorder %s132, %s135
      %p141 = scmp.eq.s32.totalorder %s18, 0
      %p142 = por %p140, %p141
      %p143 = scmp.ne.s32.totalorder %s132, %s135
      %p144 = scmp.eq.s32.totalorder %s23, 1
      %p145 = por %p143, %p144
      %p146 = scmp.ne.s32.totalorder %s135, %s136
      %p147 = scmp.eq.s32.totalorder %s23, 0
      %p148 = por %p146, %p147
      %p149 = scmp.ne.s32.totalorder %s135, %s136
      %p150 = scmp.eq.s32.totalorder %s24, 1
      %p151 = por %p149, %p150
      %p153 = scmp.ne.s32.totalorder %s136, %s152
      %p154 = scmp.eq.s32.totalorder %s24, 0
      %p155 = por %p153, %p154
      %s156 = ssub.s32 %s18, %s25
      %p157 = scmp.eq.s32.totalorder %s156, 0
      %s159 = sadd.s32 %s158, 1
      %s160 = scalar_select %p157, %s158, %s159
      %p163 = pneg %p157
      %p164 = scmp.eq.s32.totalorder %s18, 1
      %p165 = por %p163, %p164
      %p166 = scmp.ne.s32.totalorder %s158, %s161
      %p167 = scmp.eq.s32.totalorder %s18, 0
      %p168 = por %p166, %p167
      %p169 = scmp.ne.s32.totalorder %s158, %s161
      %p170 = scmp.eq.s32.totalorder %s23, 1
      %p171 = por %p169, %p170
      %p172 = scmp.ne.s32.totalorder %s161, %s162
      %p173 = scmp.eq.s32.totalorder %s23, 0
      %p174 = por %p172, %p173
      %p175 = scmp.ne.s32.totalorder %s161, %s162
      %p176 = scmp.eq.s32.totalorder %s24, 1
      %p177 = por %p175, %p176
      %p179 = scmp.ne.s32.totalorder %s162, %s178
      %p180 = scmp.eq.s32.totalorder %s24, 0
      %p181 = por %p179, %p180
      %p182 = scmp.le.s32.totalorder 1, %s18
      %p183 = scmp.lt.s32.totalorder %s18, 3
      %p184 = pnand %p182, %p183
      %p185 = pneg %p184
      // Predicated region
      $region9: #{run.39} parent=5 // pred_check
        _
      $region10: #{run.39} parent=5 // pred_check_branch
        %187 = sbr.rel (%p184) target = $region12
      $region11: #{run.39} parent=5 // pred_region
        %s188 = ssub.s32 %s18, 1
      $region12: #{run.39} parent=5 // pred_fallthru
        _
      %p189 = scmp.lt.s32.totalorder %s18, 2
      // Predicated region
      $region13: #{run.39} parent=5 // pred_check
        %p190 = pneg %p189
      $region14: #{run.39} parent=5 // pred_check_branch
        %192 = sbr.rel (%p190) target = $region16
      $region15: #{run.39} parent=5 // pred_region
        // Predicated region
        $region17: #{run.39} parent=15 // pred_check
          %p193 = pneg %p38
        $region18: #{run.39} parent=15 // pred_check_branch
          %195 = sbr.rel (%p193) target = $region20
        $region19: #{run.39} parent=15 // pred_region
          %p196 = scmp.lt.s32.totalorder %s18, 1
          %s197 = scalar_select %p196, %s18, 1
          %s198 = smul.addr %s197, 4
          %s199 = scalar_lea.vmem %s0, %s198
        $region20: #{run.39} parent=15 // pred_fallthru
          _
        // Predicated region
        $region21: #{run.39} parent=15 // pred_check
          %p200 = pneg %p64
        $region22: #{run.39} parent=15 // pred_check_branch
          %202 = sbr.rel (%p200) target = $region24
        $region23: #{run.39} parent=15 // pred_region
          %p203 = scmp.lt.s32.totalorder %s18, 1
          %s204 = scalar_select %p203, %s18, 1
          %s205 = smul.addr %s204, 4
          %s206 = scalar_lea.vmem %s1, %s205
        $region24: #{run.39} parent=15 // pred_fallthru
          _
        // Predicated region
        $region25: #{run.39} parent=15 // pred_check
          %p207 = pneg %p90
        $region26: #{run.39} parent=15 // pred_check_branch
          %209 = sbr.rel (%p207) target = $region28
        $region27: #{run.39} parent=15 // pred_region
          %p210 = scmp.lt.s32.totalorder %s18, 1
          %s211 = scalar_select %p210, %s18, 1
          %s212 = scalar_lea.vmem %s2, %s211
        $region28: #{run.39} parent=15 // pred_fallthru
          _
      $region16: #{run.39} parent=5 // pred_fallthru
        _
      %p213 = scmp.le.s32.totalorder 1, %s18
      %p214 = scmp.lt.s32.totalorder %s18, 3
      %p215 = pnand %p213, %p214
      %p216 = pneg %p215
      // Predicated region
      $region29: #{run.39} parent=5 // pred_check
        _
      $region30: #{run.39} parent=5 // pred_check_branch
        %218 = sbr.rel (%p215) target = $region32
      $region31: #{run.39} parent=5 // pred_region
        %s219 = ssub.s32 %s18, 1
        %p220 = scmp.lt.s32.totalorder %s23, 1
        %s221 = scalar_select %p220, %s23, 1
        %s222 = smul.addr %s221, 4
        %s223 = scalar_lea.vmem %s0, %s222
        %p224 = pneg %p44
        %p225 = pneg %p41
        %p226 = scmp.lt.s32.totalorder %s23, 1
        %s227 = scalar_select %p226, %s23, 1
        %s228 = smul.addr %s227, 4
        %s229 = scalar_lea.vmem %s1, %s228
        %p230 = pneg %p70
        %p231 = pneg %p67
        %p232 = scmp.lt.s32.totalorder %s23, 1
        %s233 = scalar_select %p232, %s23, 1
        %s234 = scalar_lea.vmem %s2, %s233
        %p235 = pneg %p96
        %p236 = pneg %p93
        %p237 = pneg %p122
        %p238 = pneg %p119
        %p239 = scmp.lt.s32.totalorder %s23, 1
        %s240 = scalar_select %p239, %s23, 1
        %s241 = smul.addr %s240, 4
        %s242 = scalar_lea.vmem %s3, %s241
        %p243 = pneg %p148
        %p244 = pneg %p145
        %s245 = sand.u32 %s135, 1
        %s246 = scalar_lea.sflag [#allocation3], %s245
        %s247 = sand.u32 %s135, 1
        %s248 = smul.addr %s247, 16
        %s249 = scalar_lea.vmem [#allocation2], %s248
        %p250 = pneg %p174
        %p251 = pneg %p171
        %s252 = sand.u32 %s161, 1
        %s253 = scalar_lea.sflag [#allocation5], %s252
        %s254 = sand.u32 %s161, 1
        %s255 = smul.addr %s254, 32
        %s256 = scalar_lea.vmem [#allocation4], %s255
        %p257 = scmp.lt.s32.totalorder %s23, 1
        %s258 = scalar_select %p257, %s23, 1
        %s259 = smul.addr %s258, 4
        %s260 = scalar_lea.vmem %s0, %s259
        %p261 = scmp.lt.s32.totalorder %s23, 1
        %s262 = scalar_select %p261, %s23, 1
        %s263 = smul.addr %s262, 4
        %s264 = scalar_lea.vmem %s1, %s263
        %p265 = scmp.lt.s32.totalorder %s23, 1
        %s266 = scalar_select %p265, %s23, 1
        %s267 = scalar_lea.vmem %s2, %s266
        %p268 = scmp.lt.s32.totalorder %s23, 1
        %s269 = scalar_select %p268, %s23, 1
        %s270 = smul.addr %s269, 4
        %s271 = scalar_lea.vmem %s3, %s270
        %v273 = vld [vmem:[%s260] sm:$0xf]
        %v274 = vld [vmem:[%s264] sm:$0xf]
        %v275 = vld [vmem:[%s267] sm:$0x1]
        %vm276 = vcmp.gt.f32.partialorder %v275, 0.0
        %v277 = vsel %vm276, 0.0, -1e+09
        %vm278 = vcmask 64512
        %v280 = vsel %vm278, %v273, 0
        %v283 = vsel %vm278, %v274, 0
        %285 = vmatprep.subr.bf16.mxu0 0
        %286 = vmatpush1.bf16.xpose.msra.mxu0 %v283
        %287 = vmatprep.subr.bf16.mxu0 0
        %288 = vmatpush1.bf16.xpose.msra.mxu0 0
        %289 = vmatprep.subr.bf16.mxu0 0
        %290 = vmatpush1.bf16.xpose.msra.mxu0 0
        %291 = vmatprep.subr.bf16.mxu0 0
        %292 = vmatpush1.bf16.xpose.msra.mxu0 0
        %293 = vmatprep.subr.bf16.mxu0 0
        %294 = vmatpush1.bf16.xpose.msra.mxu0 0
        %295 = vmatprep.subr.bf16.mxu0 0
        %296 = vmatpush1.bf16.xpose.msra.mxu0 0
        %297 = vmatprep.subr.bf16.mxu0 0
        %298 = vmatpush1.bf16.xpose.msra.mxu0 0
        %299 = vmatprep.subr.bf16.mxu0 0
        %300 = vmatpush1.bf16.xpose.msra.mxu0 0
        %301 = vmatprep.subr.bf16.mxu0 0
        %302 = vmatpush1.bf16.xpose.msra.mxu0 0
        %303 = vmatprep.subr.bf16.mxu0 0
        %304 = vmatpush1.bf16.xpose.msra.mxu0 0
        %305 = vmatprep.subr.bf16.mxu0 0
        %306 = vmatpush1.bf16.xpose.msra.mxu0 0
        %307 = vmatprep.subr.bf16.mxu0 0
        %308 = vmatpush1.bf16.xpose.msra.mxu0 0
        %309 = vmatprep.subr.bf16.mxu0 0
        %310 = vmatpush1.bf16.xpose.msra.mxu0 0
        %311 = vmatprep.subr.bf16.mxu0 0
        %312 = vmatpush1.bf16.xpose.msra.mxu0 0
        %313 = vmatprep.subr.bf16.mxu0 0
        %314 = vmatpush1.bf16.xpose.msra.mxu0 0
        %315 = vmatprep.subr.bf16.mxu0 0
        %316 = vmatpush1.bf16.xpose.msra.mxu0 0
        %317 = vmatprep.mubr.bf16.mxu0 0
        %318 = vmatmul.mubr.bf16.gmra.mrb[0].mxu0 %v280
        %v319 = vpop.f32.mrb[0].mxu0
        %v320 = vadd.f32 0.0, %v319
        %v321 = vpop.f32.mrb[0].mxu0
        %v322 = vpop.f32.mrb[0].mxu0
        %v323 = vpop.f32.mrb[0].mxu0
        %324 = vdwg.mxu0
        %v325 = vmul.f32 %v320, 0.35355338
        %v327 = vlaneseq
        %v328 = vshrl.u32 %v327, 7
        %v329 = vsub.s32 0, %v328
        %v330 = vrot.slane %v277, %v329
        %v332 = vadd.f32 %v325, %v330
        %v333 = vsel %vm278, %v332, -inf
        %334 = vmax.xlane.f32.xlu0 %v333
        %v335 = vpop.xlane.xlu0 %334
        %v336 = vsub.f32 %v332, %v335
        %v337 = vmul.f32 %v336, 1.442695
        %v338 = vpow.pop %v337
        %v339 = vsel %vm278, %v338, 0.0
        %340 = vadd.xlane.f32.xlu0 %v339
        %v341 = vpop.xlane.xlu0 %340
        %v342 = vrcp.pop %v341
        %v343 = vmul.f32 %v338, %v342
        %v344 = vpack.c.bf16 %v343, %v343
        %v346 = vunpack.c.l.b16 %v274
        %v347 = vpack.c.b16 %v346, %v346
        %348 = vrot.lane.b32.xlu0 %v347, 96
        %v349 = vpop.permute.xlu0 %348
        %v351 = vsel %vm278, %v344, 0
        %vm353 = vcmask 1043456
        %v355 = vsel %vm353, %v349, 0
        %357 = vmatprep.subr.bf16.mxu0 0
        %358 = vmatpush1.bf16.msra.mxu0 %v355
        %359 = vmatprep.subr.bf16.mxu0 0
        %360 = vmatpush1.bf16.msra.mxu0 0
        %361 = vmatprep.subr.bf16.mxu0 0
        %362 = vmatpush1.bf16.msra.mxu0 0
        %363 = vmatprep.subr.bf16.mxu0 0
        %364 = vmatpush1.bf16.msra.mxu0 0
        %365 = vmatprep.subr.bf16.mxu0 0
        %366 = vmatpush1.bf16.msra.mxu0 0
        %367 = vmatprep.subr.bf16.mxu0 0
        %368 = vmatpush1.bf16.msra.mxu0 0
        %369 = vmatprep.subr.bf16.mxu0 0
        %370 = vmatpush1.bf16.msra.mxu0 0
        %371 = vmatprep.subr.bf16.mxu0 0
        %372 = vmatpush1.bf16.msra.mxu0 0
        %373 = vmatprep.subr.bf16.mxu0 0
        %374 = vmatpush1.bf16.msra.mxu0 0
        %375 = vmatprep.subr.bf16.mxu0 0
        %376 = vmatpush1.bf16.msra.mxu0 0
        %377 = vmatprep.subr.bf16.mxu0 0
        %378 = vmatpush1.bf16.msra.mxu0 0
        %379 = vmatprep.subr.bf16.mxu0 0
        %380 = vmatpush1.bf16.msra.mxu0 0
        %381 = vmatprep.subr.bf16.mxu0 0
        %382 = vmatpush1.bf16.msra.mxu0 0
        %383 = vmatprep.subr.bf16.mxu0 0
        %384 = vmatpush1.bf16.msra.mxu0 0
        %385 = vmatprep.subr.bf16.mxu0 0
        %386 = vmatpush1.bf16.msra.mxu0 0
        %387 = vmatprep.subr.bf16.mxu0 0
        %388 = vmatpush1.bf16.msra.mxu0 0
        %389 = vmatprep.mubr.bf16.mxu0 0
        %390 = vmatmul.mubr.bf16.gmra.mrb[0].mxu0 %v351
        %v391 = vpop.f32.mrb[0].mxu0
        %v392 = vadd.f32 0.0, %v391
        %v393 = vpop.f32.mrb[0].mxu0
        %v394 = vpop.f32.mrb[0].mxu0
        %v395 = vpop.f32.mrb[0].mxu0
        %396 = vdwg.mxu0
        %vm397 = vcmp.gt.f32.partialorder %v343, 0.0
        %v398 = vsub.f32 0.0, %v343
        %v399 = vlog2.pop %v343
        %v400 = vmul.f32 %v399, 0.6931472
        %v401 = vmul.f32 %v398, %v400
        %v402 = vsel %vm397, %v401, 0.0
        %v403 = vsel %vm278, %v402, 0.0
        %404 = vadd.xlane.f32.xlu0 %v403
        %v405 = vpop.xlane.xlu0 %404
        %v407 = vunpack.c.l.b16 %v273
        %v408 = vpack.c.b16 %v407, %v407
        %409 = vrot.lane.b32.xlu0 %v408, 120
        %v410 = vpop.permute.xlu0 %409
        %411 = vrot.lane.b32.xlu0 %v347, 120
        %v412 = vpop.permute.xlu0 %411
        %v414 = vsel %vm278, %v410, 0
        %v417 = vsel %vm278, %v412, 0
        %419 = vmatprep.subr.bf16.mxu0 0
        %420 = vmatpush1.bf16.xpose.msra.mxu0 %v417
        %421 = vmatprep.subr.bf16.mxu0 0
        %422 = vmatpush1.bf16.xpose.msra.mxu0 0
        %423 = vmatprep.subr.bf16.mxu0 0
        %424 = vmatpush1.bf16.xpose.msra.mxu0 0
        %425 = vmatprep.subr.bf16.mxu0 0
        %426 = vmatpush1.bf16.xpose.msra.mxu0 0
        %427 = vmatprep.subr.bf16.mxu0 0
        %428 = vmatpush1.bf16.xpose.msra.mxu0 0
        %429 = vmatprep.subr.bf16.mxu0 0
        %430 = vmatpush1.bf16.xpose.msra.mxu0 0
        %431 = vmatprep.subr.bf16.mxu0 0
        %432 = vmatpush1.bf16.xpose.msra.mxu0 0
        %433 = vmatprep.subr.bf16.mxu0 0
        %434 = vmatpush1.bf16.xpose.msra.mxu0 0
        %435 = vmatprep.subr.bf16.mxu0 0
        %436 = vmatpush1.bf16.xpose.msra.mxu0 0
        %437 = vmatprep.subr.bf16.mxu0 0
        %438 = vmatpush1.bf16.xpose.msra.mxu0 0
        %439 = vmatprep.subr.bf16.mxu0 0
        %440 = vmatpush1.bf16.xpose.msra.mxu0 0
        %441 = vmatprep.subr.bf16.mxu0 0
        %442 = vmatpush1.bf16.xpose.msra.mxu0 0
        %443 = vmatprep.subr.bf16.mxu0 0
        %444 = vmatpush1.bf16.xpose.msra.mxu0 0
        %445 = vmatprep.subr.bf16.mxu0 0
        %446 = vmatpush1.bf16.xpose.msra.mxu0 0
        %447 = vmatprep.subr.bf16.mxu0 0
        %448 = vmatpush1.bf16.xpose.msra.mxu0 0
        %449 = vmatprep.subr.bf16.mxu0 0
        %450 = vmatpush1.bf16.xpose.msra.mxu0 0
        %451 = vmatprep.mubr.bf16.mxu0 0
        %452 = vmatmul.mubr.bf16.gmra.mrb[0].mxu0 %v414
        %v453 = vpop.f32.mrb[0].mxu0
        %v454 = vadd.f32 0.0, %v453
        %v455 = vpop.f32.mrb[0].mxu0
        %v456 = vpop.f32.mrb[0].mxu0
        %v457 = vpop.f32.mrb[0].mxu0
        %458 = vdwg.mxu0
        %v459 = vmul.f32 %v454, 0.35355338
        %v460 = vadd.f32 %v459, %v330
        %v461 = vsel %vm278, %v460, -inf
        %462 = vmax.xlane.f32.xlu0 %v461
        %v463 = vpop.xlane.xlu0 %462
        %v464 = vsub.f32 %v460, %v463
        %v465 = vmul.f32 %v464, 1.442695
        %v466 = vpow.pop %v465
        %v467 = vsel %vm278, %v466, 0.0
        %468 = vadd.xlane.f32.xlu0 %v467
        %v469 = vpop.xlane.xlu0 %468
        %v470 = vrcp.pop %v469
        %v471 = vmul.f32 %v466, %v470
        %v472 = vpack.c.bf16 %v471, %v471
        %473 = vrot.lane.b32.xlu0 %v347, 88
        %v474 = vpop.permute.xlu0 %473
        %v476 = vsel %vm278, %v472, 0
        %v479 = vsel %vm353, %v474, 0
        %481 = vmatprep.subr.bf16.mxu0 0
        %482 = vmatpush1.bf16.msra.mxu0 %v479
        %483 = vmatprep.subr.bf16.mxu0 0
        %484 = vmatpush1.bf16.msra.mxu0 0
        %485 = vmatprep.subr.bf16.mxu0 0
        %486 = vmatpush1.bf16.msra.mxu0 0
        %487 = vmatprep.subr.bf16.mxu0 0
        %488 = vmatpush1.bf16.msra.mxu0 0
        %489 = vmatprep.subr.bf16.mxu0 0
        %490 = vmatpush1.bf16.msra.mxu0 0
        %491 = vmatprep.subr.bf16.mxu0 0
        %492 = vmatpush1.bf16.msra.mxu0 0
        %493 = vmatprep.subr.bf16.mxu0 0
        %494 = vmatpush1.bf16.msra.mxu0 0
        %495 = vmatprep.subr.bf16.mxu0 0
        %496 = vmatpush1.bf16.msra.mxu0 0
        %497 = vmatprep.subr.bf16.mxu0 0
        %498 = vmatpush1.bf16.msra.mxu0 0
        %499 = vmatprep.subr.bf16.mxu0 0
        %500 = vmatpush1.bf16.msra.mxu0 0
        %501 = vmatprep.subr.bf16.mxu0 0
        %502 = vmatpush1.bf16.msra.mxu0 0
        %503 = vmatprep.subr.bf16.mxu0 0
        %504 = vmatpush1.bf16.msra.mxu0 0
        %505 = vmatprep.subr.bf16.mxu0 0
        %506 = vmatpush1.bf16.msra.mxu0 0
        %507 = vmatprep.subr.bf16.mxu0 0
        %508 = vmatpush1.bf16.msra.mxu0 0
        %509 = vmatprep.subr.bf16.mxu0 0
        %510 = vmatpush1.bf16.msra.mxu0 0
        %511 = vmatprep.subr.bf16.mxu0 0
        %512 = vmatpush1.bf16.msra.mxu0 0
        %513 = vmatprep.mubr.bf16.mxu0 0
        %514 = vmatmul.mubr.bf16.gmra.mrb[0].mxu0 %v476
        %v515 = vpop.f32.mrb[0].mxu0
        %v516 = vadd.f32 0.0, %v515
        %v517 = vpop.f32.mrb[0].mxu0
        %v518 = vpop.f32.mrb[0].mxu0
        %v519 = vpop.f32.mrb[0].mxu0
        %520 = vdwg.mxu0
        %vm521 = vcmp.gt.f32.partialorder %v471, 0.0
        %v522 = vsub.f32 0.0, %v471
        %v523 = vlog2.pop %v471
        %v524 = vmul.f32 %v523, 0.6931472
        %v525 = vmul.f32 %v522, %v524
        %v526 = vsel %vm521, %v525, 0.0
        %v527 = vsel %vm278, %v526, 0.0
        %528 = vadd.xlane.f32.xlu0 %v527
        %v529 = vpop.xlane.xlu0 %528
        %530 = vrot.lane.b32.xlu0 %v408, 112
        %v531 = vpop.permute.xlu0 %530
        %532 = vrot.lane.b32.xlu0 %v347, 112
        %v533 = vpop.permute.xlu0 %532
        %v535 = vsel %vm278, %v531, 0
        %v538 = vsel %vm278, %v533, 0
        %540 = vmatprep.subr.bf16.mxu0 0
        %541 = vmatpush1.bf16.xpose.msra.mxu0 %v538
        %542 = vmatprep.subr.bf16.mxu0 0
        %543 = vmatpush1.bf16.xpose.msra.mxu0 0
        %544 = vmatprep.subr.bf16.mxu0 0
        %545 = vmatpush1.bf16.xpose.msra.mxu0 0
        %546 = vmatprep.subr.bf16.mxu0 0
        %547 = vmatpush1.bf16.xpose.msra.mxu0 0
        %548 = vmatprep.subr.bf16.mxu0 0
        %549 = vmatpush1.bf16.xpose.msra.mxu0 0
        %550 = vmatprep.subr.bf16.mxu0 0
        %551 = vmatpush1.bf16.xpose.msra.mxu0 0
        %552 = vmatprep.subr.bf16.mxu0 0
        %553 = vmatpush1.bf16.xpose.msra.mxu0 0
        %554 = vmatprep.subr.bf16.mxu0 0
        %555 = vmatpush1.bf16.xpose.msra.mxu0 0
        %556 = vmatprep.subr.bf16.mxu0 0
        %557 = vmatpush1.bf16.xpose.msra.mxu0 0
        %558 = vmatprep.subr.bf16.mxu0 0
        %559 = vmatpush1.bf16.xpose.msra.mxu0 0
        %560 = vmatprep.subr.bf16.mxu0 0
        %561 = vmatpush1.bf16.xpose.msra.mxu0 0
        %562 = vmatprep.subr.bf16.mxu0 0
        %563 = vmatpush1.bf16.xpose.msra.mxu0 0
        %564 = vmatprep.subr.bf16.mxu0 0
        %565 = vmatpush1.bf16.xpose.msra.mxu0 0
        %566 = vmatprep.subr.bf16.mxu0 0
        %567 = vmatpush1.bf16.xpose.msra.mxu0 0
        %568 = vmatprep.subr.bf16.mxu0 0
        %569 = vmatpush1.bf16.xpose.msra.mxu0 0
        %570 = vmatprep.subr.bf16.mxu0 0
        %571 = vmatpush1.bf16.xpose.msra.mxu0 0
        %572 = vmatprep.mubr.bf16.mxu0 0
        %573 = vmatmul.mubr.bf16.gmra.mrb[0].mxu0 %v535
        %v574 = vpop.f32.mrb[0].mxu0
        %v575 = vadd.f32 0.0, %v574
        %v576 = vpop.f32.mrb[0].mxu0
        %v577 = vpop.f32.mrb[0].mxu0
        %v578 = vpop.f32.mrb[0].mxu0
        %579 = vdwg.mxu0
        %v580 = vmul.f32 %v575, 0.35355338
        %v581 = vadd.f32 %v580, %v330
        %v582 = vsel %vm278, %v581, -inf
        %583 = vmax.xlane.f32.xlu0 %v582
        %v584 = vpop.xlane.xlu0 %583
        %v585 = vsub.f32 %v581, %v584
        %v586 = vmul.f32 %v585, 1.442695
        %v587 = vpow.pop %v586
        %v588 = vsel %vm278, %v587, 0.0
        %589 = vadd.xlane.f32.xlu0 %v588
        %v590 = vpop.xlane.xlu0 %589
        %v591 = vrcp.pop %v590
        %v592 = vmul.f32 %v587, %v591
        %v593 = vpack.c.bf16 %v592, %v592
        %594 = vrot.lane.b32.xlu0 %v347, 80
        %v595 = vpop.permute.xlu0 %594
        %v597 = vsel %vm278, %v593, 0
        %v600 = vsel %vm353, %v595, 0
        %602 = vmatprep.subr.bf16.mxu0 0
        %603 = vmatpush1.bf16.msra.mxu0 %v600
        %604 = vmatprep.subr.bf16.mxu0 0
        %605 = vmatpush1.bf16.msra.mxu0 0
        %606 = vmatprep.subr.bf16.mxu0 0
        %607 = vmatpush1.bf16.msra.mxu0 0
        %608 = vmatprep.subr.bf16.mxu0 0
        %609 = vmatpush1.bf16.msra.mxu0 0
        %610 = vmatprep.subr.bf16.mxu0 0
        %611 = vmatpush1.bf16.msra.mxu0 0
        %612 = vmatprep.subr.bf16.mxu0 0
        %613 = vmatpush1.bf16.msra.mxu0 0
        %614 = vmatprep.subr.bf16.mxu0 0
        %615 = vmatpush1.bf16.msra.mxu0 0
        %616 = vmatprep.subr.bf16.mxu0 0
        %617 = vmatpush1.bf16.msra.mxu0 0
        %618 = vmatprep.subr.bf16.mxu0 0
        %619 = vmatpush1.bf16.msra.mxu0 0
        %620 = vmatprep.subr.bf16.mxu0 0
        %621 = vmatpush1.bf16.msra.mxu0 0
        %622 = vmatprep.subr.bf16.mxu0 0
        %623 = vmatpush1.bf16.msra.mxu0 0
        %624 = vmatprep.subr.bf16.mxu0 0
        %625 = vmatpush1.bf16.msra.mxu0 0
        %626 = vmatprep.subr.bf16.mxu0 0
        %627 = vmatpush1.bf16.msra.mxu0 0
        %628 = vmatprep.subr.bf16.mxu0 0
        %629 = vmatpush1.bf16.msra.mxu0 0
        %630 = vmatprep.subr.bf16.mxu0 0
        %631 = vmatpush1.bf16.msra.mxu0 0
        %632 = vmatprep.subr.bf16.mxu0 0
        %633 = vmatpush1.bf16.msra.mxu0 0
        %634 = vmatprep.mubr.bf16.mxu0 0
        %635 = vmatmul.mubr.bf16.gmra.mrb[0].mxu0 %v597
        %v636 = vpop.f32.mrb[0].mxu0
        %v637 = vadd.f32 0.0, %v636
        %v638 = vpop.f32.mrb[0].mxu0
        %v639 = vpop.f32.mrb[0].mxu0
        %v640 = vpop.f32.mrb[0].mxu0
        %641 = vdwg.mxu0
        %vm642 = vcmp.gt.f32.partialorder %v592, 0.0
        %v643 = vsub.f32 0.0, %v592
        %v644 = vlog2.pop %v592
        %v645 = vmul.f32 %v644, 0.6931472
        %v646 = vmul.f32 %v643, %v645
        %v647 = vsel %vm642, %v646, 0.0
        %v648 = vsel %vm278, %v647, 0.0
        %649 = vadd.xlane.f32.xlu0 %v648
        %v650 = vpop.xlane.xlu0 %649
        %651 = vrot.lane.b32.xlu0 %v408, 104
        %v652 = vpop.permute.xlu0 %651
        %653 = vrot.lane.b32.xlu0 %v347, 104
        %v654 = vpop.permute.xlu0 %653
        %v656 = vsel %vm278, %v652, 0
        %v659 = vsel %vm278, %v654, 0
        %661 = vmatprep.subr.bf16.mxu0 0
        %662 = vmatpush1.bf16.xpose.msra.mxu0 %v659
        %663 = vmatprep.subr.bf16.mxu0 0
        %664 = vmatpush1.bf16.xpose.msra.mxu0 0
        %665 = vmatprep.subr.bf16.mxu0 0
        %666 = vmatpush1.bf16.xpose.msra.mxu0 0
        %667 = vmatprep.subr.bf16.mxu0 0
        %668 = vmatpush1.bf16.xpose.msra.mxu0 0
        %669 = vmatprep.subr.bf16.mxu0 0
        %670 = vmatpush1.bf16.xpose.msra.mxu0 0
        %671 = vmatprep.subr.bf16.mxu0 0
        %672 = vmatpush1.bf16.xpose.msra.mxu0 0
        %673 = vmatprep.subr.bf16.mxu0 0
        %674 = vmatpush1.bf16.xpose.msra.mxu0 0
        %675 = vmatprep.subr.bf16.mxu0 0
        %676 = vmatpush1.bf16.xpose.msra.mxu0 0
        %677 = vmatprep.subr.bf16.mxu0 0
        %678 = vmatpush1.bf16.xpose.msra.mxu0 0
        %679 = vmatprep.subr.bf16.mxu0 0
        %680 = vmatpush1.bf16.xpose.msra.mxu0 0
        %681 = vmatprep.subr.bf16.mxu0 0
        %682 = vmatpush1.bf16.xpose.msra.mxu0 0
        %683 = vmatprep.subr.bf16.mxu0 0
        %684 = vmatpush1.bf16.xpose.msra.mxu0 0
        %685 = vmatprep.subr.bf16.mxu0 0
        %686 = vmatpush1.bf16.xpose.msra.mxu0 0
        %687 = vmatprep.subr.bf16.mxu0 0
        %688 = vmatpush1.bf16.xpose.msra.mxu0 0
        %689 = vmatprep.subr.bf16.mxu0 0
        %690 = vmatpush1.bf16.xpose.msra.mxu0 0
        %691 = vmatprep.subr.bf16.mxu0 0
        %692 = vmatpush1.bf16.xpose.msra.mxu0 0
        %693 = vmatprep.mubr.bf16.mxu0 0
        %694 = vmatmul.mubr.bf16.gmra.mrb[0].mxu0 %v656
        %v695 = vpop.f32.mrb[0].mxu0
        %v696 = vadd.f32 0.0, %v695
        %v697 = vpop.f32.mrb[0].mxu0
        %v698 = vpop.f32.mrb[0].mxu0
        %v699 = vpop.f32.mrb[0].mxu0
        %700 = vdwg.mxu0
        %v701 = vmul.f32 %v696, 0.35355338
        %v702 = vadd.f32 %v701, %v330
        %v703 = vsel %vm278, %v702, -inf
        %704 = vmax.xlane.f32.xlu0 %v703
        %v705 = vpop.xlane.xlu0 %704
        %v706 = vsub.f32 %v702, %v705
        %v707 = vmul.f32 %v706, 1.442695
        %v708 = vpow.pop %v707
        %v709 = vsel %vm278, %v708, 0.0
        %710 = vadd.xlane.f32.xlu0 %v709
        %v711 = vpop.xlane.xlu0 %710
        %v712 = vrcp.pop %v711
        %v713 = vmul.f32 %v708, %v712
        %v714 = vpack.c.bf16 %v713, %v713
        %715 = vrot.lane.b32.xlu0 %v347, 72
        %v716 = vpop.permute.xlu0 %715
        %v718 = vsel %vm278, %v714, 0
        %v721 = vsel %vm353, %v716, 0
        %723 = vmatprep.subr.bf16.mxu0 0
        %724 = vmatpush1.bf16.msra.mxu0 %v721
        %725 = vmatprep.subr.bf16.mxu0 0
        %726 = vmatpush1.bf16.msra.mxu0 0
        %727 = vmatprep.subr.bf16.mxu0 0
        %728 = vmatpush1.bf16.msra.mxu0 0
        %729 = vmatprep.subr.bf16.mxu0 0
        %730 = vmatpush1.bf16.msra.mxu0 0
        %731 = vmatprep.subr.bf16.mxu0 0
        %732 = vmatpush1.bf16.msra.mxu0 0
        %733 = vmatprep.subr.bf16.mxu0 0
        %734 = vmatpush1.bf16.msra.mxu0 0
        %735 = vmatprep.subr.bf16.mxu0 0
        %736 = vmatpush1.bf16.msra.mxu0 0
        %737 = vmatprep.subr.bf16.mxu0 0
        %738 = vmatpush1.bf16.msra.mxu0 0
        %739 = vmatprep.subr.bf16.mxu0 0
        %740 = vmatpush1.bf16.msra.mxu0 0
        %741 = vmatprep.subr.bf16.mxu0 0
        %742 = vmatpush1.bf16.msra.mxu0 0
        %743 = vmatprep.subr.bf16.mxu0 0
        %744 = vmatpush1.bf16.msra.mxu0 0
        %745 = vmatprep.subr.bf16.mxu0 0
        %746 = vmatpush1.bf16.msra.mxu0 0
        %747 = vmatprep.subr.bf16.mxu0 0
        %748 = vmatpush1.bf16.msra.mxu0 0
        %749 = vmatprep.subr.bf16.mxu0 0
        %750 = vmatpush1.bf16.msra.mxu0 0
        %751 = vmatprep.subr.bf16.mxu0 0
        %752 = vmatpush1.bf16.msra.mxu0 0
        %753 = vmatprep.subr.bf16.mxu0 0
        %754 = vmatpush1.bf16.msra.mxu0 0
        %755 = vmatprep.mubr.bf16.mxu0 0
        %756 = vmatmul.mubr.bf16.gmra.mrb[0].mxu0 %v718
        %v757 = vpop.f32.mrb[0].mxu0
        %v758 = vadd.f32 0.0, %v757
        %v759 = vpop.f32.mrb[0].mxu0
        %v760 = vpop.f32.mrb[0].mxu0
        %v761 = vpop.f32.mrb[0].mxu0
        %762 = vdwg.mxu0
        %vm763 = vcmp.gt.f32.partialorder %v713, 0.0
        %v764 = vsub.f32 0.0, %v713
        %v765 = vlog2.pop %v713
        %v766 = vmul.f32 %v765, 0.6931472
        %v767 = vmul.f32 %v764, %v766
        %v768 = vsel %vm763, %v767, 0.0
        %v769 = vsel %vm278, %v768, 0.0
        %770 = vadd.xlane.f32.xlu0 %v769
        %v771 = vpop.xlane.xlu0 %770
        %773 = vrot.lane.b32.xlu0 %v516, 8
        %v774 = vpop.permute.xlu0 %773
        %777 = vrot.lane.b32.xlu0 %v637, 16
        %v778 = vpop.permute.xlu0 %777
        %781 = vrot.lane.b32.xlu0 %v758, 24
        %v782 = vpop.permute.xlu0 %781
        %v784 = vsel %vm278, %v392, %v774
        %vm785 = vcmask 130048
        %v786 = vsel %vm785, %v784, %v778
        %vm787 = vcmask 195584
        %v788 = vsel %vm787, %v786, %v782
        %v789 = vpack.c.bf16 %v788, %v788
        %vm790 = vcmask 257024
        %791 = vst.msk [vmem:[%s271] sm:$0xf] %vm790, %v789
        %vm792 = vcmask 60416
        %793 = vst.msk [vmem:[%s249] sm:$0xf] %vm792, %v344
        %794 = vst.msk [vmem:[%s249 + $0x4] sm:$0xf] %vm792, %v472
        %795 = vst.msk [vmem:[%s249 + $0x8] sm:$0xf] %vm792, %v593
        %796 = vst.msk [vmem:[%s249 + $0xc] sm:$0xf] %vm792, %v714
        %vm797 = vcmask 7168
        %798 = vst.msk [vmem:[%s256] sm:$0xff] %vm797, %v405
        %799 = vst.msk [vmem:[%s256 + $0x8] sm:$0xff] %vm797, %v529
        %800 = vst.msk [vmem:[%s256 + $0x10] sm:$0xff] %vm797, %v650
        %801 = vst.msk [vmem:[%s256 + $0x18] sm:$0xff] %vm797, %v771
        %p802 = scmp.lt.s32.totalorder %s23, 1
        %s803 = scalar_select %p802, %s23, 1
        %s804 = smul.addr %s803, 4
        %s805 = scalar_lea.vmem %s3, %s804
        %s806 = sand.u32 %s135, 1
        %s807 = scalar_lea.sflag [#allocation3], %s806
        %s808 = sand.u32 %s135, 1
        %s809 = smul.addr %s808, 16
        %s810 = scalar_lea.vmem [#allocation2], %s809
        %s811 = sand.u32 %s161, 1
        %s812 = scalar_lea.sflag [#allocation5], %s811
        %s813 = sand.u32 %s161, 1
        %s814 = smul.addr %s813, 32
        %s815 = scalar_lea.vmem [#allocation4], %s814
        // Predicated region
        $region33: #{run.39} parent=31 // pred_check
          %p816 = pneg %p119
        $region34: #{run.39} parent=31 // pred_check_branch
          %818 = sbr.rel (%p816) target = $region36
        $region35: #{run.39} parent=31 // pred_region
          _
        $region36: #{run.39} parent=31 // pred_fallthru
          _
        // Predicated region
        $region37: #{run.39} parent=31 // pred_check
          %p819 = pneg %p145
        $region38: #{run.39} parent=31 // pred_check_branch
          %821 = sbr.rel (%p819) target = $region40
        $region39: #{run.39} parent=31 // pred_region
          %s823 = ssub.s32 256, 256
          %824 = vsyncadd %s807, %s823
          %s825 = smul.addr %s23, 4
          %s826 = smul.addr %s825, 64
          %s827 = scalar_lea.hbm %s4, %s826
          %s828 = sshll.u32 %s810, 4
          %s829 = int_to_ptr.vmem [resolvable:$true] %s828
          %834 = dma.vmem_to_hbm [thread:$0]  %s829, 256, %s827, %s807, 64, 64, 4
        $region40: #{run.39} parent=31 // pred_fallthru
          _
        // Predicated region
        $region41: #{run.39} parent=31 // pred_check
          %p835 = pneg %p171
        $region42: #{run.39} parent=31 // pred_check_branch
          %837 = sbr.rel (%p835) target = $region44
        $region43: #{run.39} parent=31 // pred_region
          %s839 = ssub.s32 512, 512
          %840 = vsyncadd %s812, %s839
          %s841 = smul.addr %s23, 4
          %s842 = smul.addr %s841, 128
          %s843 = scalar_lea.hbm %s5, %s842
          %s844 = sshll.u32 %s815, 4
          %s845 = int_to_ptr.vmem [resolvable:$true] %s844
          %850 = dma.vmem_to_hbm [thread:$0]  %s845, 512, %s843, %s812, 128, 128, 8
        $region44: #{run.39} parent=31 // pred_fallthru
          _
      $region32: #{run.39} parent=5 // pred_fallthru
        _
      %p851 = scmp.le.s32.totalorder 2, %s18
      // Predicated region
      $region45: #{run.39} parent=5 // pred_check
        %p852 = pneg %p851
      $region46: #{run.39} parent=5 // pred_check_branch
        %854 = sbr.rel (%p852) target = $region48
      $region47: #{run.39} parent=5 // pred_region
        %s855 = ssub.s32 %s18, 2
        // Predicated region
        $region49: #{run.39} parent=47 // pred_check
          %p856 = pneg %p125
        $region50: #{run.39} parent=47 // pred_check_branch
          %858 = sbr.rel (%p856) target = $region52
        $region51: #{run.39} parent=47 // pred_region
          %p859 = scmp.lt.s32.totalorder %s24, 1
          %s860 = scalar_select %p859, %s24, 1
          %s861 = smul.addr %s860, 4
          %s862 = scalar_lea.vmem %s3, %s861
        $region52: #{run.39} parent=47 // pred_fallthru
          _
        // Predicated region
        $region53: #{run.39} parent=47 // pred_check
          %p863 = pneg %p151
        $region54: #{run.39} parent=47 // pred_check_branch
          %865 = sbr.rel (%p863) target = $region56
        $region55: #{run.39} parent=47 // pred_region
          %s866 = sand.u32 %s136, 1
          %s867 = scalar_lea.sflag [#allocation3], %s866
          %s868 = sand.u32 %s136, 1
          %s869 = smul.addr %s868, 16
          %s870 = scalar_lea.vmem [#allocation2], %s869
          %871 = dma.done %s867, 256
        $region56: #{run.39} parent=47 // pred_fallthru
          _
        // Predicated region
        $region57: #{run.39} parent=47 // pred_check
          %p872 = pneg %p177
        $region58: #{run.39} parent=47 // pred_check_branch
          %874 = sbr.rel (%p872) target = $region60
        $region59: #{run.39} parent=47 // pred_region
          %s875 = sand.u32 %s162, 1
          %s876 = scalar_lea.sflag [#allocation5], %s875
          %s877 = sand.u32 %s162, 1
          %s878 = smul.addr %s877, 32
          %s879 = scalar_lea.vmem [#allocation4], %s878
          %880 = dma.done %s876, 512
        $region60: #{run.39} parent=47 // pred_fallthru
          _
      $region48: #{run.39} parent=5 // pred_fallthru
        _
    $region6: #{run.39} parent=1 // loop_footer
      %s22 = sadd.s32 1, %s18
    $region7: #{run.39} parent=1 // loop_footer_branch
      %17 = sbr.rel target = $region3
    $region8: #{run.39} parent=1 // loop_exit
      _
    %881 = vsyncpa [#allocation3], 1
    %s882 = scalar_lea.sflag [#allocation3], 1
    %883 = vsyncpa %s882, 1
    %884 = vsyncpa [#allocation5], 1
    %s885 = scalar_lea.sflag [#allocation5], 1
    %886 = vsyncpa %s885, 1

// kernel: run.51
$region0: #{run.51}
  #allocation0 [shape = 'u32[]', space=smem, size = 0x4, offset = 0x4, fixed_abs, tag = 'smem constant byte address 0x4 - core index']
  #allocation1 [shape = 'u32[144,128]{1,0:T(1,128)}', space=vmem, size = 0x12000, scoped, tag = 'internal scratch']
  #allocation2 [shape = 'f32[16,1]{1,0:T(8,128)}', space=vmem, size = 0x2000, scoped, tag = 'scratch operand']
  #allocation3 [shape = 'f32[16,1]{1,0:T(8,128)}', space=vmem, size = 0x2000, scoped, tag = 'scratch operand']
  #allocation4 [shape = 'f32[16,1]{1,0:T(8,128)}', space=vmem, size = 0x2000, scoped, tag = 'scratch operand']
  %s0 = inlined_call_operand.vmem [shape: f32[16,32], index: 0, kind: input, shape index: {}]
  %s1 = inlined_call_operand.vmem [shape: s32[16,1], index: 1, kind: input, shape index: {}]
  %s2 = inlined_call_operand.vmem [shape: f32[16,1], index: 2, kind: input, shape index: {}]
  %s3 = inlined_call_operand.vmem [shape: f32[16,1], index: 3, kind: output, shape index: {}]
  %s4 = sld [smem:[#allocation0]]
  $region30: #{run.51} parent=0
    _
  %s6 = ssub.s32 1, %s4
  %s7 = scalar_select 0, %s6, %s4
  // Predicated region
  $region2: #{run.51} parent=0 // pred_check
    _
  $region3: #{run.51} parent=0 // pred_check_branch
    %9 = sbr.rel (0) target = $region5
  $region4: #{run.51} parent=0 // pred_region
    _
  $region5: #{run.51} parent=0 // pred_fallthru
    _
  // Predicated region
  $region6: #{run.51} parent=0 // pred_check
    _
  $region7: #{run.51} parent=0 // pred_check_branch
    %11 = sbr.rel (0) target = $region9
  $region8: #{run.51} parent=0 // pred_region
    _
  $region9: #{run.51} parent=0 // pred_fallthru
    _
  // Predicated region
  $region10: #{run.51} parent=0 // pred_check
    _
  $region11: #{run.51} parent=0 // pred_check_branch
    %13 = sbr.rel (0) target = $region13
  $region12: #{run.51} parent=0 // pred_region
    _
  $region13: #{run.51} parent=0 // pred_fallthru
    _
  %p14 = scmp.eq.s32.totalorder 0, 0
  // Predicated region
  $region14: #{run.51} parent=0 // pred_check
    %p15 = pneg %p14
  $region15: #{run.51} parent=0 // pred_check_branch
    %17 = sbr.rel (%p15) target = $region17
  $region16: #{run.51} parent=0 // pred_region
    %vm18 = vcmask 7168
    %19 = vst.msk [vmem:[#allocation2] sm:$0xff] %vm18, -inf
    %20 = vst.msk [vmem:[#allocation2 + $0x8] sm:$0xff] %vm18, -inf
    %21 = vst.msk [vmem:[#allocation3] sm:$0xff] %vm18, 0.0
    %22 = vst.msk [vmem:[#allocation3 + $0x8] sm:$0xff] %vm18, 0.0
    %23 = vst.msk [vmem:[#allocation4] sm:$0xff] %vm18, 0.0
    %24 = vst.msk [vmem:[#allocation4 + $0x8] sm:$0xff] %vm18, 0.0
  $region17: #{run.51} parent=0 // pred_fallthru
    _
  %v25 = vld [vmem:[%s0] sm:$0xff]
  %v26 = vld [vmem:[%s0 + $0x8] sm:$0xff]
  %vm27 = vcmask 261120
  %v28 = vsel %vm27, %v25, -inf
  %29 = vmax.xlane.f32.xlu0 %v28
  %v30 = vpop.xlane.xlu0 %29
  %v31 = vsel %vm27, %v26, -inf
  %32 = vmax.xlane.f32.xlu0 %v31
  %v33 = vpop.xlane.xlu0 %32
  %v34 = vld [vmem:[#allocation2] sm:$0xff]
  %v35 = vld [vmem:[#allocation2 + $0x8] sm:$0xff]
  %v36 = vmax.f32 %v34, %v30
  %v37 = vmax.f32 %v35, %v33
  %v38 = vld [vmem:[#allocation3] sm:$0xff]
  %v39 = vld [vmem:[#allocation3 + $0x8] sm:$0xff]
  %v40 = vsub.f32 %v34, %v36
  %v41 = vsub.f32 %v35, %v37
  %v42 = vmul.f32 %v40, 1.442695
  %v43 = vpow.pop %v42
  %v44 = vmul.f32 %v41, 1.442695
  %v45 = vpow.pop %v44
  %v46 = vmul.f32 %v38, %v43
  %v47 = vmul.f32 %v39, %v45
  %49 = vset.pattern.permute.xlu0 0
  %50 = vperm.xlu0 %49, %v36
  %v51 = vpop.permute.xlu0 %50
  %54 = vset.pattern.permute.xlu0 0
  %55 = vperm.xlu0 %54, %v37
  %v56 = vpop.permute.xlu0 %55
  %v58 = vsub.f32 %v25, %v51
  %v59 = vsub.f32 %v26, %v56
  %v60 = vmul.f32 %v58, 1.442695
  %v61 = vpow.pop %v60
  %v62 = vmul.f32 %v59, 1.442695
  %v63 = vpow.pop %v62
  %v64 = vsel %vm27, %v61, 0.0
  %65 = vadd.xlane.f32.xlu0 %v64
  %v66 = vpop.xlane.xlu0 %65
  %v67 = vsel %vm27, %v63, 0.0
  %68 = vadd.xlane.f32.xlu0 %v67
  %v69 = vpop.xlane.xlu0 %68
  %v70 = vadd.f32 %v46, %v66
  %v71 = vadd.f32 %v47, %v69
  %vm72 = vcmask 7168
  %73 = vst.msk [vmem:[#allocation3] sm:$0xff] %vm72, %v70
  %74 = vst.msk [vmem:[#allocation3 + $0x8] sm:$0xff] %vm72, %v71
  %75 = vst.msk [vmem:[#allocation2] sm:$0xff] %vm72, %v36
  %76 = vst.msk [vmem:[#allocation2 + $0x8] sm:$0xff] %vm72, %v37
  %v77 = vld [vmem:[%s1] sm:$0xff]
  %v78 = vld [vmem:[%s1 + $0x8] sm:$0xff]
  %v79 = vlaneseq
  %v80 = vand.u32 %v79, 127
  %s81 = smul.u32 0, 32
  %v82 = vstv %s81
  %v83 = vadd.s32 %v80, %v82
  %v84 = vld [vmem:[#allocation4] sm:$0xff]
  %v85 = vld [vmem:[#allocation4 + $0x8] sm:$0xff]
  %86 = vset.pattern.permute.xlu0 0
  %87 = vperm.xlu0 %86, %v77
  %v88 = vpop.permute.xlu0 %87
  %89 = vset.pattern.permute.xlu0 0
  %90 = vperm.xlu0 %89, %v78
  %v91 = vpop.permute.xlu0 %90
  %vm92 = vcmp.eq.s32.totalorder %v83, %v88
  %vm93 = vcmp.eq.s32.totalorder %v83, %v91
  %v94 = vsel %vm92, %v25, 0.0
  %v95 = vsel %vm93, %v26, 0.0
  %v96 = vsel %vm27, %v94, 0.0
  %97 = vadd.xlane.f32.xlu0 %v96
  %v98 = vpop.xlane.xlu0 %97
  %v99 = vsel %vm27, %v95, 0.0
  %100 = vadd.xlane.f32.xlu0 %v99
  %v101 = vpop.xlane.xlu0 %100
  %v102 = vadd.f32 %v84, %v98
  %v103 = vadd.f32 %v85, %v101
  %104 = vst.msk [vmem:[#allocation4] sm:$0xff] %vm72, %v102
  %105 = vst.msk [vmem:[#allocation4 + $0x8] sm:$0xff] %vm72, %v103
  // Predicated region
  $region18: #{run.51} parent=0 // pred_check
    %p106 = pneg %p14
  $region19: #{run.51} parent=0 // pred_check_branch
    %108 = sbr.rel (%p106) target = $region21
  $region20: #{run.51} parent=0 // pred_region
    %v109 = vld [vmem:[#allocation3] sm:$0xff]
    %v110 = vld [vmem:[#allocation3 + $0x8] sm:$0xff]
    %v111 = vlog2.pop %v109
    %v112 = vmul.f32 %v111, 0.6931472
    %v113 = vlog2.pop %v110
    %v114 = vmul.f32 %v113, 0.6931472
    %v115 = vld [vmem:[#allocation2] sm:$0xff]
    %v116 = vld [vmem:[#allocation2 + $0x8] sm:$0xff]
    %v117 = vadd.f32 %v112, %v115
    %v118 = vadd.f32 %v114, %v116
    %v119 = vld [vmem:[#allocation4] sm:$0xff]
    %v120 = vld [vmem:[#allocation4 + $0x8] sm:$0xff]
    %v121 = vsub.f32 %v117, %v119
    %v122 = vsub.f32 %v118, %v120
    %v123 = vld [vmem:[%s2] sm:$0xff]
    %v124 = vld [vmem:[%s2 + $0x8] sm:$0xff]
    %v125 = vmul.f32 %v121, %v123
    %v126 = vmul.f32 %v122, %v124
    %127 = vst.msk [vmem:[%s3] sm:$0xff] %vm72, %v125
    %128 = vst.msk [vmem:[%s3 + $0x8] sm:$0xff] %vm72, %v126
  $region21: #{run.51} parent=0 // pred_fallthru
    _
  // Predicated region
  $region22: #{run.51} parent=0 // pred_check
    _
  $region23: #{run.51} parent=0 // pred_check_branch
    %130 = sbr.rel (0) target = $region25
  $region24: #{run.51} parent=0 // pred_region
    _
  $region25: #{run.51} parent=0 // pred_fallthru
    _
  // Predicated region
  $region26: #{run.51} parent=0 // pred_check
    _
  $region27: #{run.51} parent=0 // pred_check_branch
    %132 = sbr.rel (0) target = $region29
  $region28: #{run.51} parent=0 // pred_region
    _
  $region29: #{run.51} parent=0 // pred_fallthru
    _

</llo_original>
